<compile_context>
chip_gen: v7x
topology: tpu7x:2x2x1
jax: 0.10.0
libtpu: 0.0.40
codegen_flags: <defaults>
</compile_context>

<pallas_src>
import jax
import jax.numpy as jnp
import numpy as np
from jax import lax
from jax.experimental import pallas as pl
from jax.experimental.pallas import tpu as pltpu

S = 8          # sequence length
D = 32         # embeds_dim
H = 32         # hidden_size
NUM_LAYER = 2  # module arg (LSTM itself is hard-coded num_layers=2, bidirectional)
EPS = 1e-5

VMEM = pl.BlockSpec(memory_space=pltpu.MemorySpace.VMEM)


# --------------------------- fused forward kernel ---------------------------
def siagru_kernel(x_ref, g_ref, beta_ref,
                  w0f_ref, u0f_ref, b0f_ref,
                  w0b_ref, u0b_ref, b0b_ref,
                  w1f_ref, u1f_ref, b1f_ref,
                  w1b_ref, u1b_ref, b1b_ref,
                  fcw_ref, fcb_ref,
                  o_ref):
    two_s = x_ref.shape[0]          # 2 * S  (time-major, row = 2*t + sentence)
    seq = two_s // 2
    h = u0f_ref.shape[0]            # H (U matrices are pre-transposed to (H, 4H))

    # ---- LayerNorm over embed dim, both sentences / all timesteps at once ----
    x = x_ref[...]                                              # (2S, D)
    mean = jnp.mean(x, axis=-1, keepdims=True)
    var = jnp.mean((x - mean) ** 2, axis=-1, keepdims=True)
    xn = (x - mean) * lax.rsqrt(var + EPS) * g_ref[...] + beta_ref[...]

    # ---- layer-0 input projections, batched (off the serial recurrence) ----
    pre0f = jnp.dot(xn, w0f_ref[...], preferred_element_type=jnp.float32) + b0f_ref[...]
    pre0b = jnp.dot(xn, w0b_ref[...], preferred_element_type=jnp.float32) + b0b_ref[...]

    u0f = u0f_ref[...]
    u0b = u0b_ref[...]
    u1f = u1f_ref[...]
    u1b = u1b_ref[...]

    def sigm(v):
        # sigmoid via tanh: transcendental on the EUP, no VALU divide in the loop
        return 0.5 * jnp.tanh(0.5 * v) + 0.5

    def cell(gates, c_prev):
        i = sigm(gates[:, 0 * h:1 * h])
        f = sigm(gates[:, 1 * h:2 * h])
        g = jnp.tanh(gates[:, 2 * h:3 * h])
        o = sigm(gates[:, 3 * h:4 * h])
        c_new = f * c_prev + i * g
        h_new = o * jnp.tanh(c_new)
        return h_new, c_new

    zero2 = jnp.zeros((2, h), jnp.float32)

    # ---- layer 0: fwd + bwd directions, both sentences, one unrolled loop ----
    hf, cf = zero2, zero2           # rows: [sentence 1, sentence 2]
    hb, cb = zero2, zero2
    outs_f = [None] * seq
    outs_b = [None] * seq
    for t in range(seq):            # static unroll: S is small & fixed
        tb = seq - 1 - t
        gf = (pre0f[2 * t:2 * t + 2, :]
              + jnp.dot(hf, u0f, preferred_element_type=jnp.float32))
        gb = (pre0b[2 * tb:2 * tb + 2, :]
              + jnp.dot(hb, u0b, preferred_element_type=jnp.float32))
        gates = jnp.concatenate([gf, gb], axis=0)               # (4, 4H) full-lane slab
        c_prev = jnp.concatenate([cf, cb], axis=0)
        h_new, c_new = cell(gates, c_prev)
        hf, hb = h_new[0:2], h_new[2:4]
        cf, cb = c_new[0:2], c_new[2:4]
        outs_f[t] = hf
        outs_b[tb] = hb
    h0f, h0b = hf, hb               # final hidden states of layer 0 (per direction)

    # ---- layer-1 input projections, batched over all timesteps & sentences ----
    in1 = jnp.concatenate([jnp.concatenate(outs_f, axis=0),     # (2S, H)
                           jnp.concatenate(outs_b, axis=0)],    # (2S, H)
                          axis=-1)                              # (2S, 2H) = [fwd | bwd]
    pre1f = jnp.dot(in1, w1f_ref[...], preferred_element_type=jnp.float32) + b1f_ref[...]
    pre1b = jnp.dot(in1, w1b_ref[...], preferred_element_type=jnp.float32) + b1b_ref[...]

    # ---- layer 1 ----
    hf, cf = zero2, zero2
    hb, cb = zero2, zero2
    for t in range(seq):
        tb = seq - 1 - t
        gf = (pre1f[2 * t:2 * t + 2, :]
              + jnp.dot(hf, u1f, preferred_element_type=jnp.float32))
        gb = (pre1b[2 * tb:2 * tb + 2, :]
              + jnp.dot(hb, u1b, preferred_element_type=jnp.float32))
        gates = jnp.concatenate([gf, gb], axis=0)
        c_prev = jnp.concatenate([cf, cb], axis=0)
        h_new, c_new = cell(gates, c_prev)
        hf, hb = h_new[0:2], h_new[2:4]
        cf, cb = c_new[0:2], c_new[2:4]
    h1f, h1b = hf, hb

    # ---- similarity + Linear(4, 1) head ----
    # encoding rows follow the PyTorch h_n order: [l0_fwd, l0_bwd, l1_fwd, l1_bwd]
    diff = jnp.concatenate([h0f[0:1] - h0f[1:2],
                            h0b[0:1] - h0b[1:2],
                            h1f[0:1] - h1f[1:2],
                            h1b[0:1] - h1b[1:2]], axis=0)       # (4, H)
    nrm = jnp.sqrt(jnp.sum(diff * diff, axis=-1, keepdims=True))  # (4, 1)
    sim = jnp.exp(-nrm)                                           # (4, 1)
    # Linear(4,1) applied to sim.permute(1,0): sum_k sim[k] * W[0,k] + b
    o_ref[...] = jnp.sum(sim * fcw_ref[...], axis=0, keepdims=True) + fcb_ref[...]
    # TODO(synk): the PyTorch forward also calls print(sim_value); we just return it.


# ------------------ one-time weight prep (transposes / bias folds) ------------------
def prepare_params(p):
    def f32(a):
        return jnp.asarray(a, jnp.float32)
    return {
        'ln_g': f32(p['ln_g']).reshape(1, D),
        'ln_b': f32(p['ln_b']).reshape(1, D),
        'w0f': f32(p['w_ih_l0']).T,                               # (D, 4H)
        'u0f': f32(p['w_hh_l0']).T,                               # (H, 4H)
        'b0f': f32(p['b_ih_l0'] + p['b_hh_l0']).reshape(1, 4 * H),
        'w0b': f32(p['w_ih_l0_rev']).T,
        'u0b': f32(p['w_hh_l0_rev']).T,
        'b0b': f32(p['b_ih_l0_rev'] + p['b_hh_l0_rev']).reshape(1, 4 * H),
        'w1f': f32(p['w_ih_l1']).T,                               # (2H, 4H)
        'u1f': f32(p['w_hh_l1']).T,
        'b1f': f32(p['b_ih_l1'] + p['b_hh_l1']).reshape(1, 4 * H),
        'w1b': f32(p['w_ih_l1_rev']).T,
        'u1b': f32(p['w_hh_l1_rev']).T,
        'b1b': f32(p['b_ih_l1_rev'] + p['b_hh_l1_rev']).reshape(1, 4 * H),
        'fc_w': f32(p['fc_w']).T,                                 # (4, 1)
        'fc_b': f32(p['fc_b']).reshape(1, 1),
    }


# --------------------------- full forward (single launch) ---------------------------
@jax.jit
def siagru_forward(inp, pp):
    # inp: (pair=2, batch=1, S, D); batch must be 1 (module's sim.permute(1,0))
    # Re-stack time-major so both sentences at time t are adjacent rows (2t, 2t+1).
    x_tm = jnp.transpose(inp[:, 0], (1, 0, 2)).reshape(2 * S, D)
    return pl.pallas_call(
        siagru_kernel,
        out_shape=jax.ShapeDtypeStruct((1, 1), jnp.float32),
        in_specs=[VMEM] * 17,
        out_specs=VMEM,
    )(x_tm, pp['ln_g'], pp['ln_b'],
      pp['w0f'], pp['u0f'], pp['b0f'],
      pp['w0b'], pp['u0b'], pp['b0b'],
      pp['w1f'], pp['u1f'], pp['b1f'],
      pp['w1b'], pp['u1b'], pp['b1b'],
      pp['fc_w'], pp['fc_b'])


# --------------------------- params (deterministic, synthetic) ---------------------------
def init_params(key):
    shapes = {
        'w_ih_l0': (4 * H, D), 'w_hh_l0': (4 * H, H),
        'b_ih_l0': (4 * H,), 'b_hh_l0': (4 * H,),
        'w_ih_l0_rev': (4 * H, D), 'w_hh_l0_rev': (4 * H, H),
        'b_ih_l0_rev': (4 * H,), 'b_hh_l0_rev': (4 * H,),
        'w_ih_l1': (4 * H, 2 * H), 'w_hh_l1': (4 * H, H),
        'b_ih_l1': (4 * H,), 'b_hh_l1': (4 * H,),
        'w_ih_l1_rev': (4 * H, 2 * H), 'w_hh_l1_rev': (4 * H, H),
        'b_ih_l1_rev': (4 * H,), 'b_hh_l1_rev': (4 * H,),
        'fc_w': (1, 4), 'fc_b': (1,),
        'h0': (2 * NUM_LAYER, 1, H),   # created in __init__ but unused in forward
    }
    keys = jax.random.split(key, 2 + len(shapes))
    p = {
        'ln_g': 1.0 + 0.05 * jax.random.normal(keys[0], (D,), jnp.float32),
        'ln_b': 0.05 * jax.random.normal(keys[1], (D,), jnp.float32),
    }
    for i, (name, shp) in enumerate(shapes.items()):
        p[name] = 0.1 * jax.random.normal(keys[2 + i], shp, jnp.float32)
    return p


# --------------------------- pure-JAX reference ---------------------------
def siagru_reference(inp, p):
    def ln(x):
        mean = jnp.mean(x, axis=-1, keepdims=True)
        var = jnp.mean((x - mean) ** 2, axis=-1, keepdims=True)
        return (x - mean) / jnp.sqrt(var + EPS) * p['ln_g'] + p['ln_b']

    def run_dir(xs, w_ih, w_hh, b_ih, b_hh, reverse):
        seq, hh = xs.shape[0], w_hh.shape[1]
        hcur = jnp.zeros((hh,), jnp.float32)
        ccur = jnp.zeros((hh,), jnp.float32)
        order = range(seq - 1, -1, -1) if reverse else range(seq)
        outs = [None] * seq
        for t in order:
            gates = xs[t] @ w_ih.T + hcur @ w_hh.T + b_ih + b_hh
            i = jax.nn.sigmoid(gates[0:hh])
            f = jax.nn.sigmoid(gates[hh:2 * hh])
            g = jnp.tanh(gates[2 * hh:3 * hh])
            o = jax.nn.sigmoid(gates[3 * hh:4 * hh])
            ccur = f * ccur + i * g
            hcur = o * jnp.tanh(ccur)
            outs[t] = hcur
        return jnp.stack(outs), hcur

    def hn(x):
        of, hf = run_dir(x, p['w_ih_l0'], p['w_hh_l0'], p['b_ih_l0'], p['b_hh_l0'], False)
        ob, hb = run_dir(x, p['w_ih_l0_rev'], p['w_hh_l0_rev'], p['b_ih_l0_rev'], p['b_hh_l0_rev'], True)
        x1 = jnp.concatenate([of, ob], axis=-1)
        _, h1f = run_dir(x1, p['w_ih_l1'], p['w_hh_l1'], p['b_ih_l1'], p['b_hh_l1'], False)
        _, h1b = run_dir(x1, p['w_ih_l1_rev'], p['w_hh_l1_rev'], p['b_ih_l1_rev'], p['b_hh_l1_rev'], True)
        return jnp.stack([hf, hb, h1f, h1b])

    e1 = hn(ln(inp[0, 0]))
    e2 = hn(ln(inp[1, 0]))
    sim = jnp.exp(-jnp.linalg.norm(e1 - e2, axis=-1, keepdims=True))  # (4, 1)
    return sim.T @ p['fc_w'].T + p['fc_b']                            # (1, 1)


if __name__ == "__main__":
    key = jax.random.PRNGKey(0)
    kp, kx = jax.random.split(key)
    params = init_params(kp)
    prepped = prepare_params(params)            # one-time weight prep (not per-forward)
    inp = jax.random.normal(kx, (2, 1, S, D), dtype=jnp.float32)

    out = siagru_forward(inp, prepped)
    out = jax.block_until_ready(out)

    ref = siagru_reference(inp, params)
    np.testing.assert_allclose(np.asarray(out), np.asarray(ref), rtol=1e-3, atol=1e-4)
    print("KERNEL_OK")
</pallas_src>

<mosaic_0001>
module attributes {stable_mosaic.version = 11 : i64} {
  func.func @siagru_kernel(%arg0: memref<16x32xf32, #tpu.memory_space<vmem>>, %arg1: memref<1x32xf32, #tpu.memory_space<vmem>>, %arg2: memref<1x32xf32, #tpu.memory_space<vmem>>, %arg3: memref<32x128xf32, #tpu.memory_space<vmem>>, %arg4: memref<32x128xf32, #tpu.memory_space<vmem>>, %arg5: memref<1x128xf32, #tpu.memory_space<vmem>>, %arg6: memref<32x128xf32, #tpu.memory_space<vmem>>, %arg7: memref<32x128xf32, #tpu.memory_space<vmem>>, %arg8: memref<1x128xf32, #tpu.memory_space<vmem>>, %arg9: memref<64x128xf32, #tpu.memory_space<vmem>>, %arg10: memref<32x128xf32, #tpu.memory_space<vmem>>, %arg11: memref<1x128xf32, #tpu.memory_space<vmem>>, %arg12: memref<64x128xf32, #tpu.memory_space<vmem>>, %arg13: memref<32x128xf32, #tpu.memory_space<vmem>>, %arg14: memref<1x128xf32, #tpu.memory_space<vmem>>, %arg15: memref<4x1xf32, #tpu.memory_space<vmem>>, %arg16: memref<1x1xf32, #tpu.memory_space<vmem>>, %arg17: memref<1x1xf32, #tpu.memory_space<vmem>>) attributes {dimension_semantics = [], scalar_prefetch = 0 : i64, scratch_operands = 0 : i64, tpu.core_type = #tpu.core_type<tc>} {
    %c0 = arith.constant 0 : index
    %c0_0 = arith.constant 0 : index
    %0 = vector.load %arg0[%c0, %c0_0] : memref<16x32xf32, #tpu.memory_space<vmem>>, vector<16x32xf32>
    %cst = arith.constant dense<0.000000e+00> : vector<16xf32>
    %1 = vector.multi_reduction <add>, %0, %cst [1] : vector<16x32xf32> to vector<16xf32>
    %2 = vector.shape_cast %1 : vector<16xf32> to vector<16x1xf32>
    %cst_1 = arith.constant 3.200000e+01 : f32
    %3 = vector.broadcast %cst_1 : f32 to vector<16x1xf32>
    %4 = arith.divf %2, %3 : vector<16x1xf32>
    %5 = vector.broadcast %4 : vector<16x1xf32> to vector<16x32xf32>
    %6 = arith.subf %0, %5 : vector<16x32xf32>
    %7 = arith.mulf %6, %6 : vector<16x32xf32>
    %cst_2 = arith.constant dense<0.000000e+00> : vector<16xf32>
    %8 = vector.multi_reduction <add>, %7, %cst_2 [1] : vector<16x32xf32> to vector<16xf32>
    %9 = vector.shape_cast %8 : vector<16xf32> to vector<16x1xf32>
    %cst_3 = arith.constant 3.200000e+01 : f32
    %10 = vector.broadcast %cst_3 : f32 to vector<16x1xf32>
    %11 = arith.divf %9, %10 : vector<16x1xf32>
    %12 = vector.broadcast %4 : vector<16x1xf32> to vector<16x32xf32>
    %13 = arith.subf %0, %12 : vector<16x32xf32>
    %cst_4 = arith.constant 9.99999974E-6 : f32
    %14 = vector.broadcast %cst_4 : f32 to vector<16x1xf32>
    %15 = arith.addf %11, %14 : vector<16x1xf32>
    %16 = math.rsqrt %15 : vector<16x1xf32>
    %17 = vector.broadcast %16 : vector<16x1xf32> to vector<16x32xf32>
    %18 = arith.mulf %13, %17 : vector<16x32xf32>
    %c0_5 = arith.constant 0 : index
    %c0_6 = arith.constant 0 : index
    %19 = vector.load %arg1[%c0_5, %c0_6] : memref<1x32xf32, #tpu.memory_space<vmem>>, vector<1x32xf32>
    %20 = vector.broadcast %19 : vector<1x32xf32> to vector<16x32xf32>
    %21 = arith.mulf %18, %20 : vector<16x32xf32>
    %c0_7 = arith.constant 0 : index
    %c0_8 = arith.constant 0 : index
    %22 = vector.load %arg2[%c0_7, %c0_8] : memref<1x32xf32, #tpu.memory_space<vmem>>, vector<1x32xf32>
    %23 = vector.broadcast %22 : vector<1x32xf32> to vector<16x32xf32>
    %24 = arith.addf %21, %23 : vector<16x32xf32>
    %c0_9 = arith.constant 0 : index
    %c0_10 = arith.constant 0 : index
    %25 = vector.load %arg3[%c0_9, %c0_10] : memref<32x128xf32, #tpu.memory_space<vmem>>, vector<32x128xf32>
    %cst_11 = arith.constant dense<0.000000e+00> : vector<16x128xf32>
    %26 = tpu.matmul %24, %25, %cst_11 {dimension_numbers = #tpu.dot_dimension_numbers<[1], [0], [0], [1], [0, 0, 1, 1], [], []>} : vector<16x32xf32>, vector<32x128xf32>, vector<16x128xf32> -> vector<16x128xf32>
    %c0_12 = arith.constant 0 : index
    %c0_13 = arith.constant 0 : index
    %27 = vector.load %arg5[%c0_12, %c0_13] : memref<1x128xf32, #tpu.memory_space<vmem>>, vector<1x128xf32>
    %28 = vector.broadcast %27 : vector<1x128xf32> to vector<16x128xf32>
    %29 = arith.addf %26, %28 : vector<16x128xf32>
    %c0_14 = arith.constant 0 : index
    %c0_15 = arith.constant 0 : index
    %30 = vector.load %arg6[%c0_14, %c0_15] : memref<32x128xf32, #tpu.memory_space<vmem>>, vector<32x128xf32>
    %cst_16 = arith.constant dense<0.000000e+00> : vector<16x128xf32>
    %31 = tpu.matmul %24, %30, %cst_16 {dimension_numbers = #tpu.dot_dimension_numbers<[1], [0], [0], [1], [0, 0, 1, 1], [], []>} : vector<16x32xf32>, vector<32x128xf32>, vector<16x128xf32> -> vector<16x128xf32>
    %c0_17 = arith.constant 0 : index
    %c0_18 = arith.constant 0 : index
    %32 = vector.load %arg8[%c0_17, %c0_18] : memref<1x128xf32, #tpu.memory_space<vmem>>, vector<1x128xf32>
    %33 = vector.broadcast %32 : vector<1x128xf32> to vector<16x128xf32>
    %34 = arith.addf %31, %33 : vector<16x128xf32>
    %c0_19 = arith.constant 0 : index
    %c0_20 = arith.constant 0 : index
    %35 = vector.load %arg4[%c0_19, %c0_20] : memref<32x128xf32, #tpu.memory_space<vmem>>, vector<32x128xf32>
    %c0_21 = arith.constant 0 : index
    %c0_22 = arith.constant 0 : index
    %36 = vector.load %arg7[%c0_21, %c0_22] : memref<32x128xf32, #tpu.memory_space<vmem>>, vector<32x128xf32>
    %c0_23 = arith.constant 0 : index
    %c0_24 = arith.constant 0 : index
    %37 = vector.load %arg10[%c0_23, %c0_24] : memref<32x128xf32, #tpu.memory_space<vmem>>, vector<32x128xf32>
    %c0_25 = arith.constant 0 : index
    %c0_26 = arith.constant 0 : index
    %38 = vector.load %arg13[%c0_25, %c0_26] : memref<32x128xf32, #tpu.memory_space<vmem>>, vector<32x128xf32>
    %cst_27 = arith.constant 0.000000e+00 : f32
    %39 = vector.broadcast %cst_27 : f32 to vector<2x32xf32>
    %40 = vector.extract_strided_slice %29 {offsets = [0, 0], sizes = [2, 128], strides = [1, 1]} : vector<16x128xf32> to vector<2x128xf32>
    %cst_28 = arith.constant dense<0.000000e+00> : vector<2x128xf32>
    %41 = tpu.matmul %39, %35, %cst_28 {dimension_numbers = #tpu.dot_dimension_numbers<[1], [0], [0], [1], [0, 0, 1, 1], [], []>} : vector<2x32xf32>, vector<32x128xf32>, vector<2x128xf32> -> vector<2x128xf32>
    %42 = arith.addf %40, %41 : vector<2x128xf32>
    %43 = vector.extract_strided_slice %34 {offsets = [14, 0], sizes = [2, 128], strides = [1, 1]} : vector<16x128xf32> to vector<2x128xf32>
    %cst_29 = arith.constant dense<0.000000e+00> : vector<2x128xf32>
    %44 = tpu.matmul %39, %36, %cst_29 {dimension_numbers = #tpu.dot_dimension_numbers<[1], [0], [0], [1], [0, 0, 1, 1], [], []>} : vector<2x32xf32>, vector<32x128xf32>, vector<2x128xf32> -> vector<2x128xf32>
    %45 = arith.addf %43, %44 : vector<2x128xf32>
    %46 = tpu.concatenate %42, %45 in 0 : vector<2x128xf32>, vector<2x128xf32> -> vector<4x128xf32>
    %47 = tpu.concatenate %39, %39 in 0 : vector<2x32xf32>, vector<2x32xf32> -> vector<4x32xf32>
    %48 = vector.extract_strided_slice %46 {offsets = [0, 0], sizes = [4, 32], strides = [1, 1]} : vector<4x128xf32> to vector<4x32xf32>
    %cst_30 = arith.constant 5.000000e-01 : f32
    %49 = vector.broadcast %cst_30 : f32 to vector<4x32xf32>
    %50 = arith.mulf %49, %48 : vector<4x32xf32>
    %51 = math.tanh %50 : vector<4x32xf32>
    %cst_31 = arith.constant 5.000000e-01 : f32
    %52 = vector.broadcast %cst_31 : f32 to vector<4x32xf32>
    %53 = arith.mulf %52, %51 : vector<4x32xf32>
    %cst_32 = arith.constant 5.000000e-01 : f32
    %54 = vector.broadcast %cst_32 : f32 to vector<4x32xf32>
    %55 = arith.addf %53, %54 : vector<4x32xf32>
    %56 = vector.extract_strided_slice %46 {offsets = [0, 32], sizes = [4, 32], strides = [1, 1]} : vector<4x128xf32> to vector<4x32xf32>
    %cst_33 = arith.constant 5.000000e-01 : f32
    %57 = vector.broadcast %cst_33 : f32 to vector<4x32xf32>
    %58 = arith.mulf %57, %56 : vector<4x32xf32>
    %59 = math.tanh %58 : vector<4x32xf32>
    %cst_34 = arith.constant 5.000000e-01 : f32
    %60 = vector.broadcast %cst_34 : f32 to vector<4x32xf32>
    %61 = arith.mulf %60, %59 : vector<4x32xf32>
    %cst_35 = arith.constant 5.000000e-01 : f32
    %62 = vector.broadcast %cst_35 : f32 to vector<4x32xf32>
    %63 = arith.addf %61, %62 : vector<4x32xf32>
    %64 = vector.extract_strided_slice %46 {offsets = [0, 64], sizes = [4, 32], strides = [1, 1]} : vector<4x128xf32> to vector<4x32xf32>
    %65 = math.tanh %64 : vector<4x32xf32>
    %66 = vector.extract_strided_slice %46 {offsets = [0, 96], sizes = [4, 32], strides = [1, 1]} : vector<4x128xf32> to vector<4x32xf32>
    %cst_36 = arith.constant 5.000000e-01 : f32
    %67 = vector.broadcast %cst_36 : f32 to vector<4x32xf32>
    %68 = arith.mulf %67, %66 : vector<4x32xf32>
    %69 = math.tanh %68 : vector<4x32xf32>
    %cst_37 = arith.constant 5.000000e-01 : f32
    %70 = vector.broadcast %cst_37 : f32 to vector<4x32xf32>
    %71 = arith.mulf %70, %69 : vector<4x32xf32>
    %cst_38 = arith.constant 5.000000e-01 : f32
    %72 = vector.broadcast %cst_38 : f32 to vector<4x32xf32>
    %73 = arith.addf %71, %72 : vector<4x32xf32>
    %74 = arith.mulf %63, %47 : vector<4x32xf32>
    %75 = arith.mulf %55, %65 : vector<4x32xf32>
    %76 = arith.addf %74, %75 : vector<4x32xf32>
    %77 = math.tanh %76 : vector<4x32xf32>
    %78 = arith.mulf %73, %77 : vector<4x32xf32>
    %79 = vector.extract_strided_slice %78 {offsets = [0, 0], sizes = [2, 32], strides = [1, 1]} : vector<4x32xf32> to vector<2x32xf32>
    %80 = vector.extract_strided_slice %78 {offsets = [2, 0], sizes = [2, 32], strides = [1, 1]} : vector<4x32xf32> to vector<2x32xf32>
    %81 = vector.extract_strided_slice %76 {offsets = [0, 0], sizes = [2, 32], strides = [1, 1]} : vector<4x32xf32> to vector<2x32xf32>
    %82 = vector.extract_strided_slice %76 {offsets = [2, 0], sizes = [2, 32], strides = [1, 1]} : vector<4x32xf32> to vector<2x32xf32>
    %83 = vector.extract_strided_slice %29 {offsets = [2, 0], sizes = [2, 128], strides = [1, 1]} : vector<16x128xf32> to vector<2x128xf32>
    %cst_39 = arith.constant dense<0.000000e+00> : vector<2x128xf32>
    %84 = tpu.matmul %79, %35, %cst_39 {dimension_numbers = #tpu.dot_dimension_numbers<[1], [0], [0], [1], [0, 0, 1, 1], [], []>} : vector<2x32xf32>, vector<32x128xf32>, vector<2x128xf32> -> vector<2x128xf32>
    %85 = arith.addf %83, %84 : vector<2x128xf32>
    %86 = vector.extract_strided_slice %34 {offsets = [12, 0], sizes = [2, 128], strides = [1, 1]} : vector<16x128xf32> to vector<2x128xf32>
    %cst_40 = arith.constant dense<0.000000e+00> : vector<2x128xf32>
    %87 = tpu.matmul %80, %36, %cst_40 {dimension_numbers = #tpu.dot_dimension_numbers<[1], [0], [0], [1], [0, 0, 1, 1], [], []>} : vector<2x32xf32>, vector<32x128xf32>, vector<2x128xf32> -> vector<2x128xf32>
    %88 = arith.addf %86, %87 : vector<2x128xf32>
    %89 = tpu.concatenate %85, %88 in 0 : vector<2x128xf32>, vector<2x128xf32> -> vector<4x128xf32>
    %90 = tpu.concatenate %81, %82 in 0 : vector<2x32xf32>, vector<2x32xf32> -> vector<4x32xf32>
    %91 = vector.extract_strided_slice %89 {offsets = [0, 0], sizes = [4, 32], strides = [1, 1]} : vector<4x128xf32> to vector<4x32xf32>
    %cst_41 = arith.constant 5.000000e-01 : f32
    %92 = vector.broadcast %cst_41 : f32 to vector<4x32xf32>
    %93 = arith.mulf %92, %91 : vector<4x32xf32>
    %94 = math.tanh %93 : vector<4x32xf32>
    %cst_42 = arith.constant 5.000000e-01 : f32
    %95 = vector.broadcast %cst_42 : f32 to vector<4x32xf32>
    %96 = arith.mulf %95, %94 : vector<4x32xf32>
    %cst_43 = arith.constant 5.000000e-01 : f32
    %97 = vector.broadcast %cst_43 : f32 to vector<4x32xf32>
    %98 = arith.addf %96, %97 : vector<4x32xf32>
    %99 = vector.extract_strided_slice %89 {offsets = [0, 32], sizes = [4, 32], strides = [1, 1]} : vector<4x128xf32> to vector<4x32xf32>
    %cst_44 = arith.constant 5.000000e-01 : f32
    %100 = vector.broadcast %cst_44 : f32 to vector<4x32xf32>
    %101 = arith.mulf %100, %99 : vector<4x32xf32>
    %102 = math.tanh %101 : vector<4x32xf32>
    %cst_45 = arith.constant 5.000000e-01 : f32
    %103 = vector.broadcast %cst_45 : f32 to vector<4x32xf32>
    %104 = arith.mulf %103, %102 : vector<4x32xf32>
    %cst_46 = arith.constant 5.000000e-01 : f32
    %105 = vector.broadcast %cst_46 : f32 to vector<4x32xf32>
    %106 = arith.addf %104, %105 : vector<4x32xf32>
    %107 = vector.extract_strided_slice %89 {offsets = [0, 64], sizes = [4, 32], strides = [1, 1]} : vector<4x128xf32> to vector<4x32xf32>
    %108 = math.tanh %107 : vector<4x32xf32>
    %109 = vector.extract_strided_slice %89 {offsets = [0, 96], sizes = [4, 32], strides = [1, 1]} : vector<4x128xf32> to vector<4x32xf32>
    %cst_47 = arith.constant 5.000000e-01 : f32
    %110 = vector.broadcast %cst_47 : f32 to vector<4x32xf32>
    %111 = arith.mulf %110, %109 : vector<4x32xf32>
    %112 = math.tanh %111 : vector<4x32xf32>
    %cst_48 = arith.constant 5.000000e-01 : f32
    %113 = vector.broadcast %cst_48 : f32 to vector<4x32xf32>
    %114 = arith.mulf %113, %112 : vector<4x32xf32>
    %cst_49 = arith.constant 5.000000e-01 : f32
    %115 = vector.broadcast %cst_49 : f32 to vector<4x32xf32>
    %116 = arith.addf %114, %115 : vector<4x32xf32>
    %117 = arith.mulf %106, %90 : vector<4x32xf32>
    %118 = arith.mulf %98, %108 : vector<4x32xf32>
    %119 = arith.addf %117, %118 : vector<4x32xf32>
    %120 = math.tanh %119 : vector<4x32xf32>
    %121 = arith.mulf %116, %120 : vector<4x32xf32>
    %122 = vector.extract_strided_slice %121 {offsets = [0, 0], sizes = [2, 32], strides = [1, 1]} : vector<4x32xf32> to vector<2x32xf32>
    %123 = vector.extract_strided_slice %121 {offsets = [2, 0], sizes = [2, 32], strides = [1, 1]} : vector<4x32xf32> to vector<2x32xf32>
    %124 = vector.extract_strided_slice %119 {offsets = [0, 0], sizes = [2, 32], strides = [1, 1]} : vector<4x32xf32> to vector<2x32xf32>
    %125 = vector.extract_strided_slice %119 {offsets = [2, 0], sizes = [2, 32], strides = [1, 1]} : vector<4x32xf32> to vector<2x32xf32>
    %126 = vector.extract_strided_slice %29 {offsets = [4, 0], sizes = [2, 128], strides = [1, 1]} : vector<16x128xf32> to vector<2x128xf32>
    %cst_50 = arith.constant dense<0.000000e+00> : vector<2x128xf32>
    %127 = tpu.matmul %122, %35, %cst_50 {dimension_numbers = #tpu.dot_dimension_numbers<[1], [0], [0], [1], [0, 0, 1, 1], [], []>} : vector<2x32xf32>, vector<32x128xf32>, vector<2x128xf32> -> vector<2x128xf32>
    %128 = arith.addf %126, %127 : vector<2x128xf32>
    %129 = vector.extract_strided_slice %34 {offsets = [10, 0], sizes = [2, 128], strides = [1, 1]} : vector<16x128xf32> to vector<2x128xf32>
    %cst_51 = arith.constant dense<0.000000e+00> : vector<2x128xf32>
    %130 = tpu.matmul %123, %36, %cst_51 {dimension_numbers = #tpu.dot_dimension_numbers<[1], [0], [0], [1], [0, 0, 1, 1], [], []>} : vector<2x32xf32>, vector<32x128xf32>, vector<2x128xf32> -> vector<2x128xf32>
    %131 = arith.addf %129, %130 : vector<2x128xf32>
    %132 = tpu.concatenate %128, %131 in 0 : vector<2x128xf32>, vector<2x128xf32> -> vector<4x128xf32>
    %133 = tpu.concatenate %124, %125 in 0 : vector<2x32xf32>, vector<2x32xf32> -> vector<4x32xf32>
    %134 = vector.extract_strided_slice %132 {offsets = [0, 0], sizes = [4, 32], strides = [1, 1]} : vector<4x128xf32> to vector<4x32xf32>
    %cst_52 = arith.constant 5.000000e-01 : f32
    %135 = vector.broadcast %cst_52 : f32 to vector<4x32xf32>
    %136 = arith.mulf %135, %134 : vector<4x32xf32>
    %137 = math.tanh %136 : vector<4x32xf32>
    %cst_53 = arith.constant 5.000000e-01 : f32
    %138 = vector.broadcast %cst_53 : f32 to vector<4x32xf32>
    %139 = arith.mulf %138, %137 : vector<4x32xf32>
    %cst_54 = arith.constant 5.000000e-01 : f32
    %140 = vector.broadcast %cst_54 : f32 to vector<4x32xf32>
    %141 = arith.addf %139, %140 : vector<4x32xf32>
    %142 = vector.extract_strided_slice %132 {offsets = [0, 32], sizes = [4, 32], strides = [1, 1]} : vector<4x128xf32> to vector<4x32xf32>
    %cst_55 = arith.constant 5.000000e-01 : f32
    %143 = vector.broadcast %cst_55 : f32 to vector<4x32xf32>
    %144 = arith.mulf %143, %142 : vector<4x32xf32>
    %145 = math.tanh %144 : vector<4x32xf32>
    %cst_56 = arith.constant 5.000000e-01 : f32
    %146 = vector.broadcast %cst_56 : f32 to vector<4x32xf32>
    %147 = arith.mulf %146, %145 : vector<4x32xf32>
    %cst_57 = arith.constant 5.000000e-01 : f32
    %148 = vector.broadcast %cst_57 : f32 to vector<4x32xf32>
    %149 = arith.addf %147, %148 : vector<4x32xf32>
    %150 = vector.extract_strided_slice %132 {offsets = [0, 64], sizes = [4, 32], strides = [1, 1]} : vector<4x128xf32> to vector<4x32xf32>
    %151 = math.tanh %150 : vector<4x32xf32>
    %152 = vector.extract_strided_slice %132 {offsets = [0, 96], sizes = [4, 32], strides = [1, 1]} : vector<4x128xf32> to vector<4x32xf32>
    %cst_58 = arith.constant 5.000000e-01 : f32
    %153 = vector.broadcast %cst_58 : f32 to vector<4x32xf32>
    %154 = arith.mulf %153, %152 : vector<4x32xf32>
    %155 = math.tanh %154 : vector<4x32xf32>
    %cst_59 = arith.constant 5.000000e-01 : f32
    %156 = vector.broadcast %cst_59 : f32 to vector<4x32xf32>
    %157 = arith.mulf %156, %155 : vector<4x32xf32>
    %cst_60 = arith.constant 5.000000e-01 : f32
    %158 = vector.broadcast %cst_60 : f32 to vector<4x32xf32>
    %159 = arith.addf %157, %158 : vector<4x32xf32>
    %160 = arith.mulf %149, %133 : vector<4x32xf32>
    %161 = arith.mulf %141, %151 : vector<4x32xf32>
    %162 = arith.addf %160, %161 : vector<4x32xf32>
    %163 = math.tanh %162 : vector<4x32xf32>
    %164 = arith.mulf %159, %163 : vector<4x32xf32>
    %165 = vector.extract_strided_slice %164 {offsets = [0, 0], sizes = [2, 32], strides = [1, 1]} : vector<4x32xf32> to vector<2x32xf32>
    %166 = vector.extract_strided_slice %164 {offsets = [2, 0], sizes = [2, 32], strides = [1, 1]} : vector<4x32xf32> to vector<2x32xf32>
    %167 = vector.extract_strided_slice %162 {offsets = [0, 0], sizes = [2, 32], strides = [1, 1]} : vector<4x32xf32> to vector<2x32xf32>
    %168 = vector.extract_strided_slice %162 {offsets = [2, 0], sizes = [2, 32], strides = [1, 1]} : vector<4x32xf32> to vector<2x32xf32>
    %169 = vector.extract_strided_slice %29 {offsets = [6, 0], sizes = [2, 128], strides = [1, 1]} : vector<16x128xf32> to vector<2x128xf32>
    %cst_61 = arith.constant dense<0.000000e+00> : vector<2x128xf32>
    %170 = tpu.matmul %165, %35, %cst_61 {dimension_numbers = #tpu.dot_dimension_numbers<[1], [0], [0], [1], [0, 0, 1, 1], [], []>} : vector<2x32xf32>, vector<32x128xf32>, vector<2x128xf32> -> vector<2x128xf32>
    %171 = arith.addf %169, %170 : vector<2x128xf32>
    %172 = vector.extract_strided_slice %34 {offsets = [8, 0], sizes = [2, 128], strides = [1, 1]} : vector<16x128xf32> to vector<2x128xf32>
    %cst_62 = arith.constant dense<0.000000e+00> : vector<2x128xf32>
    %173 = tpu.matmul %166, %36, %cst_62 {dimension_numbers = #tpu.dot_dimension_numbers<[1], [0], [0], [1], [0, 0, 1, 1], [], []>} : vector<2x32xf32>, vector<32x128xf32>, vector<2x128xf32> -> vector<2x128xf32>
    %174 = arith.addf %172, %173 : vector<2x128xf32>
    %175 = tpu.concatenate %171, %174 in 0 : vector<2x128xf32>, vector<2x128xf32> -> vector<4x128xf32>
    %176 = tpu.concatenate %167, %168 in 0 : vector<2x32xf32>, vector<2x32xf32> -> vector<4x32xf32>
    %177 = vector.extract_strided_slice %175 {offsets = [0, 0], sizes = [4, 32], strides = [1, 1]} : vector<4x128xf32> to vector<4x32xf32>
    %cst_63 = arith.constant 5.000000e-01 : f32
    %178 = vector.broadcast %cst_63 : f32 to vector<4x32xf32>
    %179 = arith.mulf %178, %177 : vector<4x32xf32>
    %180 = math.tanh %179 : vector<4x32xf32>
    %cst_64 = arith.constant 5.000000e-01 : f32
    %181 = vector.broadcast %cst_64 : f32 to vector<4x32xf32>
    %182 = arith.mulf %181, %180 : vector<4x32xf32>
    %cst_65 = arith.constant 5.000000e-01 : f32
    %183 = vector.broadcast %cst_65 : f32 to vector<4x32xf32>
    %184 = arith.addf %182, %183 : vector<4x32xf32>
    %185 = vector.extract_strided_slice %175 {offsets = [0, 32], sizes = [4, 32], strides = [1, 1]} : vector<4x128xf32> to vector<4x32xf32>
    %cst_66 = arith.constant 5.000000e-01 : f32
    %186 = vector.broadcast %cst_66 : f32 to vector<4x32xf32>
    %187 = arith.mulf %186, %185 : vector<4x32xf32>
    %188 = math.tanh %187 : vector<4x32xf32>
    %cst_67 = arith.constant 5.000000e-01 : f32
    %189 = vector.broadcast %cst_67 : f32 to vector<4x32xf32>
    %190 = arith.mulf %189, %188 : vector<4x32xf32>
    %cst_68 = arith.constant 5.000000e-01 : f32
    %191 = vector.broadcast %cst_68 : f32 to vector<4x32xf32>
    %192 = arith.addf %190, %191 : vector<4x32xf32>
    %193 = vector.extract_strided_slice %175 {offsets = [0, 64], sizes = [4, 32], strides = [1, 1]} : vector<4x128xf32> to vector<4x32xf32>
    %194 = math.tanh %193 : vector<4x32xf32>
    %195 = vector.extract_strided_slice %175 {offsets = [0, 96], sizes = [4, 32], strides = [1, 1]} : vector<4x128xf32> to vector<4x32xf32>
    %cst_69 = arith.constant 5.000000e-01 : f32
    %196 = vector.broadcast %cst_69 : f32 to vector<4x32xf32>
    %197 = arith.mulf %196, %195 : vector<4x32xf32>
    %198 = math.tanh %197 : vector<4x32xf32>
    %cst_70 = arith.constant 5.000000e-01 : f32
    %199 = vector.broadcast %cst_70 : f32 to vector<4x32xf32>
    %200 = arith.mulf %199, %198 : vector<4x32xf32>
    %cst_71 = arith.constant 5.000000e-01 : f32
    %201 = vector.broadcast %cst_71 : f32 to vector<4x32xf32>
    %202 = arith.addf %200, %201 : vector<4x32xf32>
    %203 = arith.mulf %192, %176 : vector<4x32xf32>
    %204 = arith.mulf %184, %194 : vector<4x32xf32>
    %205 = arith.addf %203, %204 : vector<4x32xf32>
    %206 = math.tanh %205 : vector<4x32xf32>
    %207 = arith.mulf %202, %206 : vector<4x32xf32>
    %208 = vector.extract_strided_slice %207 {offsets = [0, 0], sizes = [2, 32], strides = [1, 1]} : vector<4x32xf32> to vector<2x32xf32>
    %209 = vector.extract_strided_slice %207 {offsets = [2, 0], sizes = [2, 32], strides = [1, 1]} : vector<4x32xf32> to vector<2x32xf32>
    %210 = vector.extract_strided_slice %205 {offsets = [0, 0], sizes = [2, 32], strides = [1, 1]} : vector<4x32xf32> to vector<2x32xf32>
    %211 = vector.extract_strided_slice %205 {offsets = [2, 0], sizes = [2, 32], strides = [1, 1]} : vector<4x32xf32> to vector<2x32xf32>
    %212 = vector.extract_strided_slice %29 {offsets = [8, 0], sizes = [2, 128], strides = [1, 1]} : vector<16x128xf32> to vector<2x128xf32>
    %cst_72 = arith.constant dense<0.000000e+00> : vector<2x128xf32>
    %213 = tpu.matmul %208, %35, %cst_72 {dimension_numbers = #tpu.dot_dimension_numbers<[1], [0], [0], [1], [0, 0, 1, 1], [], []>} : vector<2x32xf32>, vector<32x128xf32>, vector<2x128xf32> -> vector<2x128xf32>
    %214 = arith.addf %212, %213 : vector<2x128xf32>
    %215 = vector.extract_strided_slice %34 {offsets = [6, 0], sizes = [2, 128], strides = [1, 1]} : vector<16x128xf32> to vector<2x128xf32>
    %cst_73 = arith.constant dense<0.000000e+00> : vector<2x128xf32>
    %216 = tpu.matmul %209, %36, %cst_73 {dimension_numbers = #tpu.dot_dimension_numbers<[1], [0], [0], [1], [0, 0, 1, 1], [], []>} : vector<2x32xf32>, vector<32x128xf32>, vector<2x128xf32> -> vector<2x128xf32>
    %217 = arith.addf %215, %216 : vector<2x128xf32>
    %218 = tpu.concatenate %214, %217 in 0 : vector<2x128xf32>, vector<2x128xf32> -> vector<4x128xf32>
    %219 = tpu.concatenate %210, %211 in 0 : vector<2x32xf32>, vector<2x32xf32> -> vector<4x32xf32>
    %220 = vector.extract_strided_slice %218 {offsets = [0, 0], sizes = [4, 32], strides = [1, 1]} : vector<4x128xf32> to vector<4x32xf32>
    %cst_74 = arith.constant 5.000000e-01 : f32
    %221 = vector.broadcast %cst_74 : f32 to vector<4x32xf32>
    %222 = arith.mulf %221, %220 : vector<4x32xf32>
    %223 = math.tanh %222 : vector<4x32xf32>
    %cst_75 = arith.constant 5.000000e-01 : f32
    %224 = vector.broadcast %cst_75 : f32 to vector<4x32xf32>
    %225 = arith.mulf %224, %223 : vector<4x32xf32>
    %cst_76 = arith.constant 5.000000e-01 : f32
    %226 = vector.broadcast %cst_76 : f32 to vector<4x32xf32>
    %227 = arith.addf %225, %226 : vector<4x32xf32>
    %228 = vector.extract_strided_slice %218 {offsets = [0, 32], sizes = [4, 32], strides = [1, 1]} : vector<4x128xf32> to vector<4x32xf32>
    %cst_77 = arith.constant 5.000000e-01 : f32
    %229 = vector.broadcast %cst_77 : f32 to vector<4x32xf32>
    %230 = arith.mulf %229, %228 : vector<4x32xf32>
    %231 = math.tanh %230 : vector<4x32xf32>
    %cst_78 = arith.constant 5.000000e-01 : f32
    %232 = vector.broadcast %cst_78 : f32 to vector<4x32xf32>
    %233 = arith.mulf %232, %231 : vector<4x32xf32>
    %cst_79 = arith.constant 5.000000e-01 : f32
    %234 = vector.broadcast %cst_79 : f32 to vector<4x32xf32>
    %235 = arith.addf %233, %234 : vector<4x32xf32>
    %236 = vector.extract_strided_slice %218 {offsets = [0, 64], sizes = [4, 32], strides = [1, 1]} : vector<4x128xf32> to vector<4x32xf32>
    %237 = math.tanh %236 : vector<4x32xf32>
    %238 = vector.extract_strided_slice %218 {offsets = [0, 96], sizes = [4, 32], strides = [1, 1]} : vector<4x128xf32> to vector<4x32xf32>
    %cst_80 = arith.constant 5.000000e-01 : f32
    %239 = vector.broadcast %cst_80 : f32 to vector<4x32xf32>
    %240 = arith.mulf %239, %238 : vector<4x32xf32>
    %241 = math.tanh %240 : vector<4x32xf32>
    %cst_81 = arith.constant 5.000000e-01 : f32
    %242 = vector.broadcast %cst_81 : f32 to vector<4x32xf32>
    %243 = arith.mulf %242, %241 : vector<4x32xf32>
    %cst_82 = arith.constant 5.000000e-01 : f32
    %244 = vector.broadcast %cst_82 : f32 to vector<4x32xf32>
    %245 = arith.addf %243, %244 : vector<4x32xf32>
    %246 = arith.mulf %235, %219 : vector<4x32xf32>
    %247 = arith.mulf %227, %237 : vector<4x32xf32>
    %248 = arith.addf %246, %247 : vector<4x32xf32>
    %249 = math.tanh %248 : vector<4x32xf32>
    %250 = arith.mulf %245, %249 : vector<4x32xf32>
    %251 = vector.extract_strided_slice %250 {offsets = [0, 0], sizes = [2, 32], strides = [1, 1]} : vector<4x32xf32> to vector<2x32xf32>
    %252 = vector.extract_strided_slice %250 {offsets = [2, 0], sizes = [2, 32], strides = [1, 1]} : vector<4x32xf32> to vector<2x32xf32>
    %253 = vector.extract_strided_slice %248 {offsets = [0, 0], sizes = [2, 32], strides = [1, 1]} : vector<4x32xf32> to vector<2x32xf32>
    %254 = vector.extract_strided_slice %248 {offsets = [2, 0], sizes = [2, 32], strides = [1, 1]} : vector<4x32xf32> to vector<2x32xf32>
    %255 = vector.extract_strided_slice %29 {offsets = [10, 0], sizes = [2, 128], strides = [1, 1]} : vector<16x128xf32> to vector<2x128xf32>
    %cst_83 = arith.constant dense<0.000000e+00> : vector<2x128xf32>
    %256 = tpu.matmul %251, %35, %cst_83 {dimension_numbers = #tpu.dot_dimension_numbers<[1], [0], [0], [1], [0, 0, 1, 1], [], []>} : vector<2x32xf32>, vector<32x128xf32>, vector<2x128xf32> -> vector<2x128xf32>
    %257 = arith.addf %255, %256 : vector<2x128xf32>
    %258 = vector.extract_strided_slice %34 {offsets = [4, 0], sizes = [2, 128], strides = [1, 1]} : vector<16x128xf32> to vector<2x128xf32>
    %cst_84 = arith.constant dense<0.000000e+00> : vector<2x128xf32>
    %259 = tpu.matmul %252, %36, %cst_84 {dimension_numbers = #tpu.dot_dimension_numbers<[1], [0], [0], [1], [0, 0, 1, 1], [], []>} : vector<2x32xf32>, vector<32x128xf32>, vector<2x128xf32> -> vector<2x128xf32>
    %260 = arith.addf %258, %259 : vector<2x128xf32>
    %261 = tpu.concatenate %257, %260 in 0 : vector<2x128xf32>, vector<2x128xf32> -> vector<4x128xf32>
    %262 = tpu.concatenate %253, %254 in 0 : vector<2x32xf32>, vector<2x32xf32> -> vector<4x32xf32>
    %263 = vector.extract_strided_slice %261 {offsets = [0, 0], sizes = [4, 32], strides = [1, 1]} : vector<4x128xf32> to vector<4x32xf32>
    %cst_85 = arith.constant 5.000000e-01 : f32
    %264 = vector.broadcast %cst_85 : f32 to vector<4x32xf32>
    %265 = arith.mulf %264, %263 : vector<4x32xf32>
    %266 = math.tanh %265 : vector<4x32xf32>
    %cst_86 = arith.constant 5.000000e-01 : f32
    %267 = vector.broadcast %cst_86 : f32 to vector<4x32xf32>
    %268 = arith.mulf %267, %266 : vector<4x32xf32>
    %cst_87 = arith.constant 5.000000e-01 : f32
    %269 = vector.broadcast %cst_87 : f32 to vector<4x32xf32>
    %270 = arith.addf %268, %269 : vector<4x32xf32>
    %271 = vector.extract_strided_slice %261 {offsets = [0, 32], sizes = [4, 32], strides = [1, 1]} : vector<4x128xf32> to vector<4x32xf32>
    %cst_88 = arith.constant 5.000000e-01 : f32
    %272 = vector.broadcast %cst_88 : f32 to vector<4x32xf32>
    %273 = arith.mulf %272, %271 : vector<4x32xf32>
    %274 = math.tanh %273 : vector<4x32xf32>
    %cst_89 = arith.constant 5.000000e-01 : f32
    %275 = vector.broadcast %cst_89 : f32 to vector<4x32xf32>
    %276 = arith.mulf %275, %274 : vector<4x32xf32>
    %cst_90 = arith.constant 5.000000e-01 : f32
    %277 = vector.broadcast %cst_90 : f32 to vector<4x32xf32>
    %278 = arith.addf %276, %277 : vector<4x32xf32>
    %279 = vector.extract_strided_slice %261 {offsets = [0, 64], sizes = [4, 32], strides = [1, 1]} : vector<4x128xf32> to vector<4x32xf32>
    %280 = math.tanh %279 : vector<4x32xf32>
    %281 = vector.extract_strided_slice %261 {offsets = [0, 96], sizes = [4, 32], strides = [1, 1]} : vector<4x128xf32> to vector<4x32xf32>
    %cst_91 = arith.constant 5.000000e-01 : f32
    %282 = vector.broadcast %cst_91 : f32 to vector<4x32xf32>
    %283 = arith.mulf %282, %281 : vector<4x32xf32>
    %284 = math.tanh %283 : vector<4x32xf32>
    %cst_92 = arith.constant 5.000000e-01 : f32
    %285 = vector.broadcast %cst_92 : f32 to vector<4x32xf32>
    %286 = arith.mulf %285, %284 : vector<4x32xf32>
    %cst_93 = arith.constant 5.000000e-01 : f32
    %287 = vector.broadcast %cst_93 : f32 to vector<4x32xf32>
    %288 = arith.addf %286, %287 : vector<4x32xf32>
    %289 = arith.mulf %278, %262 : vector<4x32xf32>
    %290 = arith.mulf %270, %280 : vector<4x32xf32>
    %291 = arith.addf %289, %290 : vector<4x32xf32>
    %292 = math.tanh %291 : vector<4x32xf32>
    %293 = arith.mulf %288, %292 : vector<4x32xf32>
    %294 = vector.extract_strided_slice %293 {offsets = [0, 0], sizes = [2, 32], strides = [1, 1]} : vector<4x32xf32> to vector<2x32xf32>
    %295 = vector.extract_strided_slice %293 {offsets = [2, 0], sizes = [2, 32], strides = [1, 1]} : vector<4x32xf32> to vector<2x32xf32>
    %296 = vector.extract_strided_slice %291 {offsets = [0, 0], sizes = [2, 32], strides = [1, 1]} : vector<4x32xf32> to vector<2x32xf32>
    %297 = vector.extract_strided_slice %291 {offsets = [2, 0], sizes = [2, 32], strides = [1, 1]} : vector<4x32xf32> to vector<2x32xf32>
    %298 = vector.extract_strided_slice %29 {offsets = [12, 0], sizes = [2, 128], strides = [1, 1]} : vector<16x128xf32> to vector<2x128xf32>
    %cst_94 = arith.constant dense<0.000000e+00> : vector<2x128xf32>
    %299 = tpu.matmul %294, %35, %cst_94 {dimension_numbers = #tpu.dot_dimension_numbers<[1], [0], [0], [1], [0, 0, 1, 1], [], []>} : vector<2x32xf32>, vector<32x128xf32>, vector<2x128xf32> -> vector<2x128xf32>
    %300 = arith.addf %298, %299 : vector<2x128xf32>
    %301 = vector.extract_strided_slice %34 {offsets = [2, 0], sizes = [2, 128], strides = [1, 1]} : vector<16x128xf32> to vector<2x128xf32>
    %cst_95 = arith.constant dense<0.000000e+00> : vector<2x128xf32>
    %302 = tpu.matmul %295, %36, %cst_95 {dimension_numbers = #tpu.dot_dimension_numbers<[1], [0], [0], [1], [0, 0, 1, 1], [], []>} : vector<2x32xf32>, vector<32x128xf32>, vector<2x128xf32> -> vector<2x128xf32>
    %303 = arith.addf %301, %302 : vector<2x128xf32>
    %304 = tpu.concatenate %300, %303 in 0 : vector<2x128xf32>, vector<2x128xf32> -> vector<4x128xf32>
    %305 = tpu.concatenate %296, %297 in 0 : vector<2x32xf32>, vector<2x32xf32> -> vector<4x32xf32>
    %306 = vector.extract_strided_slice %304 {offsets = [0, 0], sizes = [4, 32], strides = [1, 1]} : vector<4x128xf32> to vector<4x32xf32>
    %cst_96 = arith.constant 5.000000e-01 : f32
    %307 = vector.broadcast %cst_96 : f32 to vector<4x32xf32>
    %308 = arith.mulf %307, %306 : vector<4x32xf32>
    %309 = math.tanh %308 : vector<4x32xf32>
    %cst_97 = arith.constant 5.000000e-01 : f32
    %310 = vector.broadcast %cst_97 : f32 to vector<4x32xf32>
    %311 = arith.mulf %310, %309 : vector<4x32xf32>
    %cst_98 = arith.constant 5.000000e-01 : f32
    %312 = vector.broadcast %cst_98 : f32 to vector<4x32xf32>
    %313 = arith.addf %311, %312 : vector<4x32xf32>
    %314 = vector.extract_strided_slice %304 {offsets = [0, 32], sizes = [4, 32], strides = [1, 1]} : vector<4x128xf32> to vector<4x32xf32>
    %cst_99 = arith.constant 5.000000e-01 : f32
    %315 = vector.broadcast %cst_99 : f32 to vector<4x32xf32>
    %316 = arith.mulf %315, %314 : vector<4x32xf32>
    %317 = math.tanh %316 : vector<4x32xf32>
    %cst_100 = arith.constant 5.000000e-01 : f32
    %318 = vector.broadcast %cst_100 : f32 to vector<4x32xf32>
    %319 = arith.mulf %318, %317 : vector<4x32xf32>
    %cst_101 = arith.constant 5.000000e-01 : f32
    %320 = vector.broadcast %cst_101 : f32 to vector<4x32xf32>
    %321 = arith.addf %319, %320 : vector<4x32xf32>
    %322 = vector.extract_strided_slice %304 {offsets = [0, 64], sizes = [4, 32], strides = [1, 1]} : vector<4x128xf32> to vector<4x32xf32>
    %323 = math.tanh %322 : vector<4x32xf32>
    %324 = vector.extract_strided_slice %304 {offsets = [0, 96], sizes = [4, 32], strides = [1, 1]} : vector<4x128xf32> to vector<4x32xf32>
    %cst_102 = arith.constant 5.000000e-01 : f32
    %325 = vector.broadcast %cst_102 : f32 to vector<4x32xf32>
    %326 = arith.mulf %325, %324 : vector<4x32xf32>
    %327 = math.tanh %326 : vector<4x32xf32>
    %cst_103 = arith.constant 5.000000e-01 : f32
    %328 = vector.broadcast %cst_103 : f32 to vector<4x32xf32>
    %329 = arith.mulf %328, %327 : vector<4x32xf32>
    %cst_104 = arith.constant 5.000000e-01 : f32
    %330 = vector.broadcast %cst_104 : f32 to vector<4x32xf32>
    %331 = arith.addf %329, %330 : vector<4x32xf32>
    %332 = arith.mulf %321, %305 : vector<4x32xf32>
    %333 = arith.mulf %313, %323 : vector<4x32xf32>
    %334 = arith.addf %332, %333 : vector<4x32xf32>
    %335 = math.tanh %334 : vector<4x32xf32>
    %336 = arith.mulf %331, %335 : vector<4x32xf32>
    %337 = vector.extract_strided_slice %336 {offsets = [0, 0], sizes = [2, 32], strides = [1, 1]} : vector<4x32xf32> to vector<2x32xf32>
    %338 = vector.extract_strided_slice %336 {offsets = [2, 0], sizes = [2, 32], strides = [1, 1]} : vector<4x32xf32> to vector<2x32xf32>
    %339 = vector.extract_strided_slice %334 {offsets = [0, 0], sizes = [2, 32], strides = [1, 1]} : vector<4x32xf32> to vector<2x32xf32>
    %340 = vector.extract_strided_slice %334 {offsets = [2, 0], sizes = [2, 32], strides = [1, 1]} : vector<4x32xf32> to vector<2x32xf32>
    %341 = vector.extract_strided_slice %29 {offsets = [14, 0], sizes = [2, 128], strides = [1, 1]} : vector<16x128xf32> to vector<2x128xf32>
    %cst_105 = arith.constant dense<0.000000e+00> : vector<2x128xf32>
    %342 = tpu.matmul %337, %35, %cst_105 {dimension_numbers = #tpu.dot_dimension_numbers<[1], [0], [0], [1], [0, 0, 1, 1], [], []>} : vector<2x32xf32>, vector<32x128xf32>, vector<2x128xf32> -> vector<2x128xf32>
    %343 = arith.addf %341, %342 : vector<2x128xf32>
    %344 = vector.extract_strided_slice %34 {offsets = [0, 0], sizes = [2, 128], strides = [1, 1]} : vector<16x128xf32> to vector<2x128xf32>
    %cst_106 = arith.constant dense<0.000000e+00> : vector<2x128xf32>
    %345 = tpu.matmul %338, %36, %cst_106 {dimension_numbers = #tpu.dot_dimension_numbers<[1], [0], [0], [1], [0, 0, 1, 1], [], []>} : vector<2x32xf32>, vector<32x128xf32>, vector<2x128xf32> -> vector<2x128xf32>
    %346 = arith.addf %344, %345 : vector<2x128xf32>
    %347 = tpu.concatenate %343, %346 in 0 : vector<2x128xf32>, vector<2x128xf32> -> vector<4x128xf32>
    %348 = tpu.concatenate %339, %340 in 0 : vector<2x32xf32>, vector<2x32xf32> -> vector<4x32xf32>
    %349 = vector.extract_strided_slice %347 {offsets = [0, 0], sizes = [4, 32], strides = [1, 1]} : vector<4x128xf32> to vector<4x32xf32>
    %cst_107 = arith.constant 5.000000e-01 : f32
    %350 = vector.broadcast %cst_107 : f32 to vector<4x32xf32>
    %351 = arith.mulf %350, %349 : vector<4x32xf32>
    %352 = math.tanh %351 : vector<4x32xf32>
    %cst_108 = arith.constant 5.000000e-01 : f32
    %353 = vector.broadcast %cst_108 : f32 to vector<4x32xf32>
    %354 = arith.mulf %353, %352 : vector<4x32xf32>
    %cst_109 = arith.constant 5.000000e-01 : f32
    %355 = vector.broadcast %cst_109 : f32 to vector<4x32xf32>
    %356 = arith.addf %354, %355 : vector<4x32xf32>
    %357 = vector.extract_strided_slice %347 {offsets = [0, 32], sizes = [4, 32], strides = [1, 1]} : vector<4x128xf32> to vector<4x32xf32>
    %cst_110 = arith.constant 5.000000e-01 : f32
    %358 = vector.broadcast %cst_110 : f32 to vector<4x32xf32>
    %359 = arith.mulf %358, %357 : vector<4x32xf32>
    %360 = math.tanh %359 : vector<4x32xf32>
    %cst_111 = arith.constant 5.000000e-01 : f32
    %361 = vector.broadcast %cst_111 : f32 to vector<4x32xf32>
    %362 = arith.mulf %361, %360 : vector<4x32xf32>
    %cst_112 = arith.constant 5.000000e-01 : f32
    %363 = vector.broadcast %cst_112 : f32 to vector<4x32xf32>
    %364 = arith.addf %362, %363 : vector<4x32xf32>
    %365 = vector.extract_strided_slice %347 {offsets = [0, 64], sizes = [4, 32], strides = [1, 1]} : vector<4x128xf32> to vector<4x32xf32>
    %366 = math.tanh %365 : vector<4x32xf32>
    %367 = vector.extract_strided_slice %347 {offsets = [0, 96], sizes = [4, 32], strides = [1, 1]} : vector<4x128xf32> to vector<4x32xf32>
    %cst_113 = arith.constant 5.000000e-01 : f32
    %368 = vector.broadcast %cst_113 : f32 to vector<4x32xf32>
    %369 = arith.mulf %368, %367 : vector<4x32xf32>
    %370 = math.tanh %369 : vector<4x32xf32>
    %cst_114 = arith.constant 5.000000e-01 : f32
    %371 = vector.broadcast %cst_114 : f32 to vector<4x32xf32>
    %372 = arith.mulf %371, %370 : vector<4x32xf32>
    %cst_115 = arith.constant 5.000000e-01 : f32
    %373 = vector.broadcast %cst_115 : f32 to vector<4x32xf32>
    %374 = arith.addf %372, %373 : vector<4x32xf32>
    %375 = arith.mulf %364, %348 : vector<4x32xf32>
    %376 = arith.mulf %356, %366 : vector<4x32xf32>
    %377 = arith.addf %375, %376 : vector<4x32xf32>
    %378 = math.tanh %377 : vector<4x32xf32>
    %379 = arith.mulf %374, %378 : vector<4x32xf32>
    %380 = vector.extract_strided_slice %379 {offsets = [0, 0], sizes = [2, 32], strides = [1, 1]} : vector<4x32xf32> to vector<2x32xf32>
    %381 = vector.extract_strided_slice %379 {offsets = [2, 0], sizes = [2, 32], strides = [1, 1]} : vector<4x32xf32> to vector<2x32xf32>
    %382 = tpu.concatenate %79, %122, %165, %208, %251, %294, %337, %380 in 0 : vector<2x32xf32>, vector<2x32xf32>, vector<2x32xf32>, vector<2x32xf32>, vector<2x32xf32>, vector<2x32xf32>, vector<2x32xf32>, vector<2x32xf32> -> vector<16x32xf32>
    %383 = tpu.concatenate %381, %338, %295, %252, %209, %166, %123, %80 in 0 : vector<2x32xf32>, vector<2x32xf32>, vector<2x32xf32>, vector<2x32xf32>, vector<2x32xf32>, vector<2x32xf32>, vector<2x32xf32>, vector<2x32xf32> -> vector<16x32xf32>
    %384 = tpu.concatenate %382, %383 in 1 : vector<16x32xf32>, vector<16x32xf32> -> vector<16x64xf32>
    %c0_116 = arith.constant 0 : index
    %c0_117 = arith.constant 0 : index
    %385 = vector.load %arg9[%c0_116, %c0_117] : memref<64x128xf32, #tpu.memory_space<vmem>>, vector<64x128xf32>
    %cst_118 = arith.constant dense<0.000000e+00> : vector<16x128xf32>
    %386 = tpu.matmul %384, %385, %cst_118 {dimension_numbers = #tpu.dot_dimension_numbers<[1], [0], [0], [1], [0, 0, 1, 1], [], []>} : vector<16x64xf32>, vector<64x128xf32>, vector<16x128xf32> -> vector<16x128xf32>
    %c0_119 = arith.constant 0 : index
    %c0_120 = arith.constant 0 : index
    %387 = vector.load %arg11[%c0_119, %c0_120] : memref<1x128xf32, #tpu.memory_space<vmem>>, vector<1x128xf32>
    %388 = vector.broadcast %387 : vector<1x128xf32> to vector<16x128xf32>
    %389 = arith.addf %386, %388 : vector<16x128xf32>
    %c0_121 = arith.constant 0 : index
    %c0_122 = arith.constant 0 : index
    %390 = vector.load %arg12[%c0_121, %c0_122] : memref<64x128xf32, #tpu.memory_space<vmem>>, vector<64x128xf32>
    %cst_123 = arith.constant dense<0.000000e+00> : vector<16x128xf32>
    %391 = tpu.matmul %384, %390, %cst_123 {dimension_numbers = #tpu.dot_dimension_numbers<[1], [0], [0], [1], [0, 0, 1, 1], [], []>} : vector<16x64xf32>, vector<64x128xf32>, vector<16x128xf32> -> vector<16x128xf32>
    %c0_124 = arith.constant 0 : index
    %c0_125 = arith.constant 0 : index
    %392 = vector.load %arg14[%c0_124, %c0_125] : memref<1x128xf32, #tpu.memory_space<vmem>>, vector<1x128xf32>
    %393 = vector.broadcast %392 : vector<1x128xf32> to vector<16x128xf32>
    %394 = arith.addf %391, %393 : vector<16x128xf32>
    %395 = vector.extract_strided_slice %389 {offsets = [0, 0], sizes = [2, 128], strides = [1, 1]} : vector<16x128xf32> to vector<2x128xf32>
    %cst_126 = arith.constant dense<0.000000e+00> : vector<2x128xf32>
    %396 = tpu.matmul %39, %37, %cst_126 {dimension_numbers = #tpu.dot_dimension_numbers<[1], [0], [0], [1], [0, 0, 1, 1], [], []>} : vector<2x32xf32>, vector<32x128xf32>, vector<2x128xf32> -> vector<2x128xf32>
    %397 = arith.addf %395, %396 : vector<2x128xf32>
    %398 = vector.extract_strided_slice %394 {offsets = [14, 0], sizes = [2, 128], strides = [1, 1]} : vector<16x128xf32> to vector<2x128xf32>
    %cst_127 = arith.constant dense<0.000000e+00> : vector<2x128xf32>
    %399 = tpu.matmul %39, %38, %cst_127 {dimension_numbers = #tpu.dot_dimension_numbers<[1], [0], [0], [1], [0, 0, 1, 1], [], []>} : vector<2x32xf32>, vector<32x128xf32>, vector<2x128xf32> -> vector<2x128xf32>
    %400 = arith.addf %398, %399 : vector<2x128xf32>
    %401 = tpu.concatenate %397, %400 in 0 : vector<2x128xf32>, vector<2x128xf32> -> vector<4x128xf32>
    %402 = tpu.concatenate %39, %39 in 0 : vector<2x32xf32>, vector<2x32xf32> -> vector<4x32xf32>
    %403 = vector.extract_strided_slice %401 {offsets = [0, 0], sizes = [4, 32], strides = [1, 1]} : vector<4x128xf32> to vector<4x32xf32>
    %cst_128 = arith.constant 5.000000e-01 : f32
    %404 = vector.broadcast %cst_128 : f32 to vector<4x32xf32>
    %405 = arith.mulf %404, %403 : vector<4x32xf32>
    %406 = math.tanh %405 : vector<4x32xf32>
    %cst_129 = arith.constant 5.000000e-01 : f32
    %407 = vector.broadcast %cst_129 : f32 to vector<4x32xf32>
    %408 = arith.mulf %407, %406 : vector<4x32xf32>
    %cst_130 = arith.constant 5.000000e-01 : f32
    %409 = vector.broadcast %cst_130 : f32 to vector<4x32xf32>
    %410 = arith.addf %408, %409 : vector<4x32xf32>
    %411 = vector.extract_strided_slice %401 {offsets = [0, 32], sizes = [4, 32], strides = [1, 1]} : vector<4x128xf32> to vector<4x32xf32>
    %cst_131 = arith.constant 5.000000e-01 : f32
    %412 = vector.broadcast %cst_131 : f32 to vector<4x32xf32>
    %413 = arith.mulf %412, %411 : vector<4x32xf32>
    %414 = math.tanh %413 : vector<4x32xf32>
    %cst_132 = arith.constant 5.000000e-01 : f32
    %415 = vector.broadcast %cst_132 : f32 to vector<4x32xf32>
    %416 = arith.mulf %415, %414 : vector<4x32xf32>
    %cst_133 = arith.constant 5.000000e-01 : f32
    %417 = vector.broadcast %cst_133 : f32 to vector<4x32xf32>
    %418 = arith.addf %416, %417 : vector<4x32xf32>
    %419 = vector.extract_strided_slice %401 {offsets = [0, 64], sizes = [4, 32], strides = [1, 1]} : vector<4x128xf32> to vector<4x32xf32>
    %420 = math.tanh %419 : vector<4x32xf32>
    %421 = vector.extract_strided_slice %401 {offsets = [0, 96], sizes = [4, 32], strides = [1, 1]} : vector<4x128xf32> to vector<4x32xf32>
    %cst_134 = arith.constant 5.000000e-01 : f32
    %422 = vector.broadcast %cst_134 : f32 to vector<4x32xf32>
    %423 = arith.mulf %422, %421 : vector<4x32xf32>
    %424 = math.tanh %423 : vector<4x32xf32>
    %cst_135 = arith.constant 5.000000e-01 : f32
    %425 = vector.broadcast %cst_135 : f32 to vector<4x32xf32>
    %426 = arith.mulf %425, %424 : vector<4x32xf32>
    %cst_136 = arith.constant 5.000000e-01 : f32
    %427 = vector.broadcast %cst_136 : f32 to vector<4x32xf32>
    %428 = arith.addf %426, %427 : vector<4x32xf32>
    %429 = arith.mulf %418, %402 : vector<4x32xf32>
    %430 = arith.mulf %410, %420 : vector<4x32xf32>
    %431 = arith.addf %429, %430 : vector<4x32xf32>
    %432 = math.tanh %431 : vector<4x32xf32>
    %433 = arith.mulf %428, %432 : vector<4x32xf32>
    %434 = vector.extract_strided_slice %433 {offsets = [0, 0], sizes = [2, 32], strides = [1, 1]} : vector<4x32xf32> to vector<2x32xf32>
    %435 = vector.extract_strided_slice %433 {offsets = [2, 0], sizes = [2, 32], strides = [1, 1]} : vector<4x32xf32> to vector<2x32xf32>
    %436 = vector.extract_strided_slice %431 {offsets = [0, 0], sizes = [2, 32], strides = [1, 1]} : vector<4x32xf32> to vector<2x32xf32>
    %437 = vector.extract_strided_slice %431 {offsets = [2, 0], sizes = [2, 32], strides = [1, 1]} : vector<4x32xf32> to vector<2x32xf32>
    %438 = vector.extract_strided_slice %389 {offsets = [2, 0], sizes = [2, 128], strides = [1, 1]} : vector<16x128xf32> to vector<2x128xf32>
    %cst_137 = arith.constant dense<0.000000e+00> : vector<2x128xf32>
    %439 = tpu.matmul %434, %37, %cst_137 {dimension_numbers = #tpu.dot_dimension_numbers<[1], [0], [0], [1], [0, 0, 1, 1], [], []>} : vector<2x32xf32>, vector<32x128xf32>, vector<2x128xf32> -> vector<2x128xf32>
    %440 = arith.addf %438, %439 : vector<2x128xf32>
    %441 = vector.extract_strided_slice %394 {offsets = [12, 0], sizes = [2, 128], strides = [1, 1]} : vector<16x128xf32> to vector<2x128xf32>
    %cst_138 = arith.constant dense<0.000000e+00> : vector<2x128xf32>
    %442 = tpu.matmul %435, %38, %cst_138 {dimension_numbers = #tpu.dot_dimension_numbers<[1], [0], [0], [1], [0, 0, 1, 1], [], []>} : vector<2x32xf32>, vector<32x128xf32>, vector<2x128xf32> -> vector<2x128xf32>
    %443 = arith.addf %441, %442 : vector<2x128xf32>
    %444 = tpu.concatenate %440, %443 in 0 : vector<2x128xf32>, vector<2x128xf32> -> vector<4x128xf32>
    %445 = tpu.concatenate %436, %437 in 0 : vector<2x32xf32>, vector<2x32xf32> -> vector<4x32xf32>
    %446 = vector.extract_strided_slice %444 {offsets = [0, 0], sizes = [4, 32], strides = [1, 1]} : vector<4x128xf32> to vector<4x32xf32>
    %cst_139 = arith.constant 5.000000e-01 : f32
    %447 = vector.broadcast %cst_139 : f32 to vector<4x32xf32>
    %448 = arith.mulf %447, %446 : vector<4x32xf32>
    %449 = math.tanh %448 : vector<4x32xf32>
    %cst_140 = arith.constant 5.000000e-01 : f32
    %450 = vector.broadcast %cst_140 : f32 to vector<4x32xf32>
    %451 = arith.mulf %450, %449 : vector<4x32xf32>
    %cst_141 = arith.constant 5.000000e-01 : f32
    %452 = vector.broadcast %cst_141 : f32 to vector<4x32xf32>
    %453 = arith.addf %451, %452 : vector<4x32xf32>
    %454 = vector.extract_strided_slice %444 {offsets = [0, 32], sizes = [4, 32], strides = [1, 1]} : vector<4x128xf32> to vector<4x32xf32>
    %cst_142 = arith.constant 5.000000e-01 : f32
    %455 = vector.broadcast %cst_142 : f32 to vector<4x32xf32>
    %456 = arith.mulf %455, %454 : vector<4x32xf32>
    %457 = math.tanh %456 : vector<4x32xf32>
    %cst_143 = arith.constant 5.000000e-01 : f32
    %458 = vector.broadcast %cst_143 : f32 to vector<4x32xf32>
    %459 = arith.mulf %458, %457 : vector<4x32xf32>
    %cst_144 = arith.constant 5.000000e-01 : f32
    %460 = vector.broadcast %cst_144 : f32 to vector<4x32xf32>
    %461 = arith.addf %459, %460 : vector<4x32xf32>
    %462 = vector.extract_strided_slice %444 {offsets = [0, 64], sizes = [4, 32], strides = [1, 1]} : vector<4x128xf32> to vector<4x32xf32>
    %463 = math.tanh %462 : vector<4x32xf32>
    %464 = vector.extract_strided_slice %444 {offsets = [0, 96], sizes = [4, 32], strides = [1, 1]} : vector<4x128xf32> to vector<4x32xf32>
    %cst_145 = arith.constant 5.000000e-01 : f32
    %465 = vector.broadcast %cst_145 : f32 to vector<4x32xf32>
    %466 = arith.mulf %465, %464 : vector<4x32xf32>
    %467 = math.tanh %466 : vector<4x32xf32>
    %cst_146 = arith.constant 5.000000e-01 : f32
    %468 = vector.broadcast %cst_146 : f32 to vector<4x32xf32>
    %469 = arith.mulf %468, %467 : vector<4x32xf32>
    %cst_147 = arith.constant 5.000000e-01 : f32
    %470 = vector.broadcast %cst_147 : f32 to vector<4x32xf32>
    %471 = arith.addf %469, %470 : vector<4x32xf32>
    %472 = arith.mulf %461, %445 : vector<4x32xf32>
    %473 = arith.mulf %453, %463 : vector<4x32xf32>
    %474 = arith.addf %472, %473 : vector<4x32xf32>
    %475 = math.tanh %474 : vector<4x32xf32>
    %476 = arith.mulf %471, %475 : vector<4x32xf32>
    %477 = vector.extract_strided_slice %476 {offsets = [0, 0], sizes = [2, 32], strides = [1, 1]} : vector<4x32xf32> to vector<2x32xf32>
    %478 = vector.extract_strided_slice %476 {offsets = [2, 0], sizes = [2, 32], strides = [1, 1]} : vector<4x32xf32> to vector<2x32xf32>
    %479 = vector.extract_strided_slice %474 {offsets = [0, 0], sizes = [2, 32], strides = [1, 1]} : vector<4x32xf32> to vector<2x32xf32>
    %480 = vector.extract_strided_slice %474 {offsets = [2, 0], sizes = [2, 32], strides = [1, 1]} : vector<4x32xf32> to vector<2x32xf32>
    %481 = vector.extract_strided_slice %389 {offsets = [4, 0], sizes = [2, 128], strides = [1, 1]} : vector<16x128xf32> to vector<2x128xf32>
    %cst_148 = arith.constant dense<0.000000e+00> : vector<2x128xf32>
    %482 = tpu.matmul %477, %37, %cst_148 {dimension_numbers = #tpu.dot_dimension_numbers<[1], [0], [0], [1], [0, 0, 1, 1], [], []>} : vector<2x32xf32>, vector<32x128xf32>, vector<2x128xf32> -> vector<2x128xf32>
    %483 = arith.addf %481, %482 : vector<2x128xf32>
    %484 = vector.extract_strided_slice %394 {offsets = [10, 0], sizes = [2, 128], strides = [1, 1]} : vector<16x128xf32> to vector<2x128xf32>
    %cst_149 = arith.constant dense<0.000000e+00> : vector<2x128xf32>
    %485 = tpu.matmul %478, %38, %cst_149 {dimension_numbers = #tpu.dot_dimension_numbers<[1], [0], [0], [1], [0, 0, 1, 1], [], []>} : vector<2x32xf32>, vector<32x128xf32>, vector<2x128xf32> -> vector<2x128xf32>
    %486 = arith.addf %484, %485 : vector<2x128xf32>
    %487 = tpu.concatenate %483, %486 in 0 : vector<2x128xf32>, vector<2x128xf32> -> vector<4x128xf32>
    %488 = tpu.concatenate %479, %480 in 0 : vector<2x32xf32>, vector<2x32xf32> -> vector<4x32xf32>
    %489 = vector.extract_strided_slice %487 {offsets = [0, 0], sizes = [4, 32], strides = [1, 1]} : vector<4x128xf32> to vector<4x32xf32>
    %cst_150 = arith.constant 5.000000e-01 : f32
    %490 = vector.broadcast %cst_150 : f32 to vector<4x32xf32>
    %491 = arith.mulf %490, %489 : vector<4x32xf32>
    %492 = math.tanh %491 : vector<4x32xf32>
    %cst_151 = arith.constant 5.000000e-01 : f32
    %493 = vector.broadcast %cst_151 : f32 to vector<4x32xf32>
    %494 = arith.mulf %493, %492 : vector<4x32xf32>
    %cst_152 = arith.constant 5.000000e-01 : f32
    %495 = vector.broadcast %cst_152 : f32 to vector<4x32xf32>
    %496 = arith.addf %494, %495 : vector<4x32xf32>
    %497 = vector.extract_strided_slice %487 {offsets = [0, 32], sizes = [4, 32], strides = [1, 1]} : vector<4x128xf32> to vector<4x32xf32>
    %cst_153 = arith.constant 5.000000e-01 : f32
    %498 = vector.broadcast %cst_153 : f32 to vector<4x32xf32>
    %499 = arith.mulf %498, %497 : vector<4x32xf32>
    %500 = math.tanh %499 : vector<4x32xf32>
    %cst_154 = arith.constant 5.000000e-01 : f32
    %501 = vector.broadcast %cst_154 : f32 to vector<4x32xf32>
    %502 = arith.mulf %501, %500 : vector<4x32xf32>
    %cst_155 = arith.constant 5.000000e-01 : f32
    %503 = vector.broadcast %cst_155 : f32 to vector<4x32xf32>
    %504 = arith.addf %502, %503 : vector<4x32xf32>
    %505 = vector.extract_strided_slice %487 {offsets = [0, 64], sizes = [4, 32], strides = [1, 1]} : vector<4x128xf32> to vector<4x32xf32>
    %506 = math.tanh %505 : vector<4x32xf32>
    %507 = vector.extract_strided_slice %487 {offsets = [0, 96], sizes = [4, 32], strides = [1, 1]} : vector<4x128xf32> to vector<4x32xf32>
    %cst_156 = arith.constant 5.000000e-01 : f32
    %508 = vector.broadcast %cst_156 : f32 to vector<4x32xf32>
    %509 = arith.mulf %508, %507 : vector<4x32xf32>
    %510 = math.tanh %509 : vector<4x32xf32>
    %cst_157 = arith.constant 5.000000e-01 : f32
    %511 = vector.broadcast %cst_157 : f32 to vector<4x32xf32>
    %512 = arith.mulf %511, %510 : vector<4x32xf32>
    %cst_158 = arith.constant 5.000000e-01 : f32
    %513 = vector.broadcast %cst_158 : f32 to vector<4x32xf32>
    %514 = arith.addf %512, %513 : vector<4x32xf32>
    %515 = arith.mulf %504, %488 : vector<4x32xf32>
    %516 = arith.mulf %496, %506 : vector<4x32xf32>
    %517 = arith.addf %515, %516 : vector<4x32xf32>
    %518 = math.tanh %517 : vector<4x32xf32>
    %519 = arith.mulf %514, %518 : vector<4x32xf32>
    %520 = vector.extract_strided_slice %519 {offsets = [0, 0], sizes = [2, 32], strides = [1, 1]} : vector<4x32xf32> to vector<2x32xf32>
    %521 = vector.extract_strided_slice %519 {offsets = [2, 0], sizes = [2, 32], strides = [1, 1]} : vector<4x32xf32> to vector<2x32xf32>
    %522 = vector.extract_strided_slice %517 {offsets = [0, 0], sizes = [2, 32], strides = [1, 1]} : vector<4x32xf32> to vector<2x32xf32>
    %523 = vector.extract_strided_slice %517 {offsets = [2, 0], sizes = [2, 32], strides = [1, 1]} : vector<4x32xf32> to vector<2x32xf32>
    %524 = vector.extract_strided_slice %389 {offsets = [6, 0], sizes = [2, 128], strides = [1, 1]} : vector<16x128xf32> to vector<2x128xf32>
    %cst_159 = arith.constant dense<0.000000e+00> : vector<2x128xf32>
    %525 = tpu.matmul %520, %37, %cst_159 {dimension_numbers = #tpu.dot_dimension_numbers<[1], [0], [0], [1], [0, 0, 1, 1], [], []>} : vector<2x32xf32>, vector<32x128xf32>, vector<2x128xf32> -> vector<2x128xf32>
    %526 = arith.addf %524, %525 : vector<2x128xf32>
    %527 = vector.extract_strided_slice %394 {offsets = [8, 0], sizes = [2, 128], strides = [1, 1]} : vector<16x128xf32> to vector<2x128xf32>
    %cst_160 = arith.constant dense<0.000000e+00> : vector<2x128xf32>
    %528 = tpu.matmul %521, %38, %cst_160 {dimension_numbers = #tpu.dot_dimension_numbers<[1], [0], [0], [1], [0, 0, 1, 1], [], []>} : vector<2x32xf32>, vector<32x128xf32>, vector<2x128xf32> -> vector<2x128xf32>
    %529 = arith.addf %527, %528 : vector<2x128xf32>
    %530 = tpu.concatenate %526, %529 in 0 : vector<2x128xf32>, vector<2x128xf32> -> vector<4x128xf32>
    %531 = tpu.concatenate %522, %523 in 0 : vector<2x32xf32>, vector<2x32xf32> -> vector<4x32xf32>
    %532 = vector.extract_strided_slice %530 {offsets = [0, 0], sizes = [4, 32], strides = [1, 1]} : vector<4x128xf32> to vector<4x32xf32>
    %cst_161 = arith.constant 5.000000e-01 : f32
    %533 = vector.broadcast %cst_161 : f32 to vector<4x32xf32>
    %534 = arith.mulf %533, %532 : vector<4x32xf32>
    %535 = math.tanh %534 : vector<4x32xf32>
    %cst_162 = arith.constant 5.000000e-01 : f32
    %536 = vector.broadcast %cst_162 : f32 to vector<4x32xf32>
    %537 = arith.mulf %536, %535 : vector<4x32xf32>
    %cst_163 = arith.constant 5.000000e-01 : f32
    %538 = vector.broadcast %cst_163 : f32 to vector<4x32xf32>
    %539 = arith.addf %537, %538 : vector<4x32xf32>
    %540 = vector.extract_strided_slice %530 {offsets = [0, 32], sizes = [4, 32], strides = [1, 1]} : vector<4x128xf32> to vector<4x32xf32>
    %cst_164 = arith.constant 5.000000e-01 : f32
    %541 = vector.broadcast %cst_164 : f32 to vector<4x32xf32>
    %542 = arith.mulf %541, %540 : vector<4x32xf32>
    %543 = math.tanh %542 : vector<4x32xf32>
    %cst_165 = arith.constant 5.000000e-01 : f32
    %544 = vector.broadcast %cst_165 : f32 to vector<4x32xf32>
    %545 = arith.mulf %544, %543 : vector<4x32xf32>
    %cst_166 = arith.constant 5.000000e-01 : f32
    %546 = vector.broadcast %cst_166 : f32 to vector<4x32xf32>
    %547 = arith.addf %545, %546 : vector<4x32xf32>
    %548 = vector.extract_strided_slice %530 {offsets = [0, 64], sizes = [4, 32], strides = [1, 1]} : vector<4x128xf32> to vector<4x32xf32>
    %549 = math.tanh %548 : vector<4x32xf32>
    %550 = vector.extract_strided_slice %530 {offsets = [0, 96], sizes = [4, 32], strides = [1, 1]} : vector<4x128xf32> to vector<4x32xf32>
    %cst_167 = arith.constant 5.000000e-01 : f32
    %551 = vector.broadcast %cst_167 : f32 to vector<4x32xf32>
    %552 = arith.mulf %551, %550 : vector<4x32xf32>
    %553 = math.tanh %552 : vector<4x32xf32>
    %cst_168 = arith.constant 5.000000e-01 : f32
    %554 = vector.broadcast %cst_168 : f32 to vector<4x32xf32>
    %555 = arith.mulf %554, %553 : vector<4x32xf32>
    %cst_169 = arith.constant 5.000000e-01 : f32
    %556 = vector.broadcast %cst_169 : f32 to vector<4x32xf32>
    %557 = arith.addf %555, %556 : vector<4x32xf32>
    %558 = arith.mulf %547, %531 : vector<4x32xf32>
    %559 = arith.mulf %539, %549 : vector<4x32xf32>
    %560 = arith.addf %558, %559 : vector<4x32xf32>
    %561 = math.tanh %560 : vector<4x32xf32>
    %562 = arith.mulf %557, %561 : vector<4x32xf32>
    %563 = vector.extract_strided_slice %562 {offsets = [0, 0], sizes = [2, 32], strides = [1, 1]} : vector<4x32xf32> to vector<2x32xf32>
    %564 = vector.extract_strided_slice %562 {offsets = [2, 0], sizes = [2, 32], strides = [1, 1]} : vector<4x32xf32> to vector<2x32xf32>
    %565 = vector.extract_strided_slice %560 {offsets = [0, 0], sizes = [2, 32], strides = [1, 1]} : vector<4x32xf32> to vector<2x32xf32>
    %566 = vector.extract_strided_slice %560 {offsets = [2, 0], sizes = [2, 32], strides = [1, 1]} : vector<4x32xf32> to vector<2x32xf32>
    %567 = vector.extract_strided_slice %389 {offsets = [8, 0], sizes = [2, 128], strides = [1, 1]} : vector<16x128xf32> to vector<2x128xf32>
    %cst_170 = arith.constant dense<0.000000e+00> : vector<2x128xf32>
    %568 = tpu.matmul %563, %37, %cst_170 {dimension_numbers = #tpu.dot_dimension_numbers<[1], [0], [0], [1], [0, 0, 1, 1], [], []>} : vector<2x32xf32>, vector<32x128xf32>, vector<2x128xf32> -> vector<2x128xf32>
    %569 = arith.addf %567, %568 : vector<2x128xf32>
    %570 = vector.extract_strided_slice %394 {offsets = [6, 0], sizes = [2, 128], strides = [1, 1]} : vector<16x128xf32> to vector<2x128xf32>
    %cst_171 = arith.constant dense<0.000000e+00> : vector<2x128xf32>
    %571 = tpu.matmul %564, %38, %cst_171 {dimension_numbers = #tpu.dot_dimension_numbers<[1], [0], [0], [1], [0, 0, 1, 1], [], []>} : vector<2x32xf32>, vector<32x128xf32>, vector<2x128xf32> -> vector<2x128xf32>
    %572 = arith.addf %570, %571 : vector<2x128xf32>
    %573 = tpu.concatenate %569, %572 in 0 : vector<2x128xf32>, vector<2x128xf32> -> vector<4x128xf32>
    %574 = tpu.concatenate %565, %566 in 0 : vector<2x32xf32>, vector<2x32xf32> -> vector<4x32xf32>
    %575 = vector.extract_strided_slice %573 {offsets = [0, 0], sizes = [4, 32], strides = [1, 1]} : vector<4x128xf32> to vector<4x32xf32>
    %cst_172 = arith.constant 5.000000e-01 : f32
    %576 = vector.broadcast %cst_172 : f32 to vector<4x32xf32>
    %577 = arith.mulf %576, %575 : vector<4x32xf32>
    %578 = math.tanh %577 : vector<4x32xf32>
    %cst_173 = arith.constant 5.000000e-01 : f32
    %579 = vector.broadcast %cst_173 : f32 to vector<4x32xf32>
    %580 = arith.mulf %579, %578 : vector<4x32xf32>
    %cst_174 = arith.constant 5.000000e-01 : f32
    %581 = vector.broadcast %cst_174 : f32 to vector<4x32xf32>
    %582 = arith.addf %580, %581 : vector<4x32xf32>
    %583 = vector.extract_strided_slice %573 {offsets = [0, 32], sizes = [4, 32], strides = [1, 1]} : vector<4x128xf32> to vector<4x32xf32>
    %cst_175 = arith.constant 5.000000e-01 : f32
    %584 = vector.broadcast %cst_175 : f32 to vector<4x32xf32>
    %585 = arith.mulf %584, %583 : vector<4x32xf32>
    %586 = math.tanh %585 : vector<4x32xf32>
    %cst_176 = arith.constant 5.000000e-01 : f32
    %587 = vector.broadcast %cst_176 : f32 to vector<4x32xf32>
    %588 = arith.mulf %587, %586 : vector<4x32xf32>
    %cst_177 = arith.constant 5.000000e-01 : f32
    %589 = vector.broadcast %cst_177 : f32 to vector<4x32xf32>
    %590 = arith.addf %588, %589 : vector<4x32xf32>
    %591 = vector.extract_strided_slice %573 {offsets = [0, 64], sizes = [4, 32], strides = [1, 1]} : vector<4x128xf32> to vector<4x32xf32>
    %592 = math.tanh %591 : vector<4x32xf32>
    %593 = vector.extract_strided_slice %573 {offsets = [0, 96], sizes = [4, 32], strides = [1, 1]} : vector<4x128xf32> to vector<4x32xf32>
    %cst_178 = arith.constant 5.000000e-01 : f32
    %594 = vector.broadcast %cst_178 : f32 to vector<4x32xf32>
    %595 = arith.mulf %594, %593 : vector<4x32xf32>
    %596 = math.tanh %595 : vector<4x32xf32>
    %cst_179 = arith.constant 5.000000e-01 : f32
    %597 = vector.broadcast %cst_179 : f32 to vector<4x32xf32>
    %598 = arith.mulf %597, %596 : vector<4x32xf32>
    %cst_180 = arith.constant 5.000000e-01 : f32
    %599 = vector.broadcast %cst_180 : f32 to vector<4x32xf32>
    %600 = arith.addf %598, %599 : vector<4x32xf32>
    %601 = arith.mulf %590, %574 : vector<4x32xf32>
    %602 = arith.mulf %582, %592 : vector<4x32xf32>
    %603 = arith.addf %601, %602 : vector<4x32xf32>
    %604 = math.tanh %603 : vector<4x32xf32>
    %605 = arith.mulf %600, %604 : vector<4x32xf32>
    %606 = vector.extract_strided_slice %605 {offsets = [0, 0], sizes = [2, 32], strides = [1, 1]} : vector<4x32xf32> to vector<2x32xf32>
    %607 = vector.extract_strided_slice %605 {offsets = [2, 0], sizes = [2, 32], strides = [1, 1]} : vector<4x32xf32> to vector<2x32xf32>
    %608 = vector.extract_strided_slice %603 {offsets = [0, 0], sizes = [2, 32], strides = [1, 1]} : vector<4x32xf32> to vector<2x32xf32>
    %609 = vector.extract_strided_slice %603 {offsets = [2, 0], sizes = [2, 32], strides = [1, 1]} : vector<4x32xf32> to vector<2x32xf32>
    %610 = vector.extract_strided_slice %389 {offsets = [10, 0], sizes = [2, 128], strides = [1, 1]} : vector<16x128xf32> to vector<2x128xf32>
    %cst_181 = arith.constant dense<0.000000e+00> : vector<2x128xf32>
    %611 = tpu.matmul %606, %37, %cst_181 {dimension_numbers = #tpu.dot_dimension_numbers<[1], [0], [0], [1], [0, 0, 1, 1], [], []>} : vector<2x32xf32>, vector<32x128xf32>, vector<2x128xf32> -> vector<2x128xf32>
    %612 = arith.addf %610, %611 : vector<2x128xf32>
    %613 = vector.extract_strided_slice %394 {offsets = [4, 0], sizes = [2, 128], strides = [1, 1]} : vector<16x128xf32> to vector<2x128xf32>
    %cst_182 = arith.constant dense<0.000000e+00> : vector<2x128xf32>
    %614 = tpu.matmul %607, %38, %cst_182 {dimension_numbers = #tpu.dot_dimension_numbers<[1], [0], [0], [1], [0, 0, 1, 1], [], []>} : vector<2x32xf32>, vector<32x128xf32>, vector<2x128xf32> -> vector<2x128xf32>
    %615 = arith.addf %613, %614 : vector<2x128xf32>
    %616 = tpu.concatenate %612, %615 in 0 : vector<2x128xf32>, vector<2x128xf32> -> vector<4x128xf32>
    %617 = tpu.concatenate %608, %609 in 0 : vector<2x32xf32>, vector<2x32xf32> -> vector<4x32xf32>
    %618 = vector.extract_strided_slice %616 {offsets = [0, 0], sizes = [4, 32], strides = [1, 1]} : vector<4x128xf32> to vector<4x32xf32>
    %cst_183 = arith.constant 5.000000e-01 : f32
    %619 = vector.broadcast %cst_183 : f32 to vector<4x32xf32>
    %620 = arith.mulf %619, %618 : vector<4x32xf32>
    %621 = math.tanh %620 : vector<4x32xf32>
    %cst_184 = arith.constant 5.000000e-01 : f32
    %622 = vector.broadcast %cst_184 : f32 to vector<4x32xf32>
    %623 = arith.mulf %622, %621 : vector<4x32xf32>
    %cst_185 = arith.constant 5.000000e-01 : f32
    %624 = vector.broadcast %cst_185 : f32 to vector<4x32xf32>
    %625 = arith.addf %623, %624 : vector<4x32xf32>
    %626 = vector.extract_strided_slice %616 {offsets = [0, 32], sizes = [4, 32], strides = [1, 1]} : vector<4x128xf32> to vector<4x32xf32>
    %cst_186 = arith.constant 5.000000e-01 : f32
    %627 = vector.broadcast %cst_186 : f32 to vector<4x32xf32>
    %628 = arith.mulf %627, %626 : vector<4x32xf32>
    %629 = math.tanh %628 : vector<4x32xf32>
    %cst_187 = arith.constant 5.000000e-01 : f32
    %630 = vector.broadcast %cst_187 : f32 to vector<4x32xf32>
    %631 = arith.mulf %630, %629 : vector<4x32xf32>
    %cst_188 = arith.constant 5.000000e-01 : f32
    %632 = vector.broadcast %cst_188 : f32 to vector<4x32xf32>
    %633 = arith.addf %631, %632 : vector<4x32xf32>
    %634 = vector.extract_strided_slice %616 {offsets = [0, 64], sizes = [4, 32], strides = [1, 1]} : vector<4x128xf32> to vector<4x32xf32>
    %635 = math.tanh %634 : vector<4x32xf32>
    %636 = vector.extract_strided_slice %616 {offsets = [0, 96], sizes = [4, 32], strides = [1, 1]} : vector<4x128xf32> to vector<4x32xf32>
    %cst_189 = arith.constant 5.000000e-01 : f32
    %637 = vector.broadcast %cst_189 : f32 to vector<4x32xf32>
    %638 = arith.mulf %637, %636 : vector<4x32xf32>
    %639 = math.tanh %638 : vector<4x32xf32>
    %cst_190 = arith.constant 5.000000e-01 : f32
    %640 = vector.broadcast %cst_190 : f32 to vector<4x32xf32>
    %641 = arith.mulf %640, %639 : vector<4x32xf32>
    %cst_191 = arith.constant 5.000000e-01 : f32
    %642 = vector.broadcast %cst_191 : f32 to vector<4x32xf32>
    %643 = arith.addf %641, %642 : vector<4x32xf32>
    %644 = arith.mulf %633, %617 : vector<4x32xf32>
    %645 = arith.mulf %625, %635 : vector<4x32xf32>
    %646 = arith.addf %644, %645 : vector<4x32xf32>
    %647 = math.tanh %646 : vector<4x32xf32>
    %648 = arith.mulf %643, %647 : vector<4x32xf32>
    %649 = vector.extract_strided_slice %648 {offsets = [0, 0], sizes = [2, 32], strides = [1, 1]} : vector<4x32xf32> to vector<2x32xf32>
    %650 = vector.extract_strided_slice %648 {offsets = [2, 0], sizes = [2, 32], strides = [1, 1]} : vector<4x32xf32> to vector<2x32xf32>
    %651 = vector.extract_strided_slice %646 {offsets = [0, 0], sizes = [2, 32], strides = [1, 1]} : vector<4x32xf32> to vector<2x32xf32>
    %652 = vector.extract_strided_slice %646 {offsets = [2, 0], sizes = [2, 32], strides = [1, 1]} : vector<4x32xf32> to vector<2x32xf32>
    %653 = vector.extract_strided_slice %389 {offsets = [12, 0], sizes = [2, 128], strides = [1, 1]} : vector<16x128xf32> to vector<2x128xf32>
    %cst_192 = arith.constant dense<0.000000e+00> : vector<2x128xf32>
    %654 = tpu.matmul %649, %37, %cst_192 {dimension_numbers = #tpu.dot_dimension_numbers<[1], [0], [0], [1], [0, 0, 1, 1], [], []>} : vector<2x32xf32>, vector<32x128xf32>, vector<2x128xf32> -> vector<2x128xf32>
    %655 = arith.addf %653, %654 : vector<2x128xf32>
    %656 = vector.extract_strided_slice %394 {offsets = [2, 0], sizes = [2, 128], strides = [1, 1]} : vector<16x128xf32> to vector<2x128xf32>
    %cst_193 = arith.constant dense<0.000000e+00> : vector<2x128xf32>
    %657 = tpu.matmul %650, %38, %cst_193 {dimension_numbers = #tpu.dot_dimension_numbers<[1], [0], [0], [1], [0, 0, 1, 1], [], []>} : vector<2x32xf32>, vector<32x128xf32>, vector<2x128xf32> -> vector<2x128xf32>
    %658 = arith.addf %656, %657 : vector<2x128xf32>
    %659 = tpu.concatenate %655, %658 in 0 : vector<2x128xf32>, vector<2x128xf32> -> vector<4x128xf32>
    %660 = tpu.concatenate %651, %652 in 0 : vector<2x32xf32>, vector<2x32xf32> -> vector<4x32xf32>
    %661 = vector.extract_strided_slice %659 {offsets = [0, 0], sizes = [4, 32], strides = [1, 1]} : vector<4x128xf32> to vector<4x32xf32>
    %cst_194 = arith.constant 5.000000e-01 : f32
    %662 = vector.broadcast %cst_194 : f32 to vector<4x32xf32>
    %663 = arith.mulf %662, %661 : vector<4x32xf32>
    %664 = math.tanh %663 : vector<4x32xf32>
    %cst_195 = arith.constant 5.000000e-01 : f32
    %665 = vector.broadcast %cst_195 : f32 to vector<4x32xf32>
    %666 = arith.mulf %665, %664 : vector<4x32xf32>
    %cst_196 = arith.constant 5.000000e-01 : f32
    %667 = vector.broadcast %cst_196 : f32 to vector<4x32xf32>
    %668 = arith.addf %666, %667 : vector<4x32xf32>
    %669 = vector.extract_strided_slice %659 {offsets = [0, 32], sizes = [4, 32], strides = [1, 1]} : vector<4x128xf32> to vector<4x32xf32>
    %cst_197 = arith.constant 5.000000e-01 : f32
    %670 = vector.broadcast %cst_197 : f32 to vector<4x32xf32>
    %671 = arith.mulf %670, %669 : vector<4x32xf32>
    %672 = math.tanh %671 : vector<4x32xf32>
    %cst_198 = arith.constant 5.000000e-01 : f32
    %673 = vector.broadcast %cst_198 : f32 to vector<4x32xf32>
    %674 = arith.mulf %673, %672 : vector<4x32xf32>
    %cst_199 = arith.constant 5.000000e-01 : f32
    %675 = vector.broadcast %cst_199 : f32 to vector<4x32xf32>
    %676 = arith.addf %674, %675 : vector<4x32xf32>
    %677 = vector.extract_strided_slice %659 {offsets = [0, 64], sizes = [4, 32], strides = [1, 1]} : vector<4x128xf32> to vector<4x32xf32>
    %678 = math.tanh %677 : vector<4x32xf32>
    %679 = vector.extract_strided_slice %659 {offsets = [0, 96], sizes = [4, 32], strides = [1, 1]} : vector<4x128xf32> to vector<4x32xf32>
    %cst_200 = arith.constant 5.000000e-01 : f32
    %680 = vector.broadcast %cst_200 : f32 to vector<4x32xf32>
    %681 = arith.mulf %680, %679 : vector<4x32xf32>
    %682 = math.tanh %681 : vector<4x32xf32>
    %cst_201 = arith.constant 5.000000e-01 : f32
    %683 = vector.broadcast %cst_201 : f32 to vector<4x32xf32>
    %684 = arith.mulf %683, %682 : vector<4x32xf32>
    %cst_202 = arith.constant 5.000000e-01 : f32
    %685 = vector.broadcast %cst_202 : f32 to vector<4x32xf32>
    %686 = arith.addf %684, %685 : vector<4x32xf32>
    %687 = arith.mulf %676, %660 : vector<4x32xf32>
    %688 = arith.mulf %668, %678 : vector<4x32xf32>
    %689 = arith.addf %687, %688 : vector<4x32xf32>
    %690 = math.tanh %689 : vector<4x32xf32>
    %691 = arith.mulf %686, %690 : vector<4x32xf32>
    %692 = vector.extract_strided_slice %691 {offsets = [0, 0], sizes = [2, 32], strides = [1, 1]} : vector<4x32xf32> to vector<2x32xf32>
    %693 = vector.extract_strided_slice %691 {offsets = [2, 0], sizes = [2, 32], strides = [1, 1]} : vector<4x32xf32> to vector<2x32xf32>
    %694 = vector.extract_strided_slice %689 {offsets = [0, 0], sizes = [2, 32], strides = [1, 1]} : vector<4x32xf32> to vector<2x32xf32>
    %695 = vector.extract_strided_slice %689 {offsets = [2, 0], sizes = [2, 32], strides = [1, 1]} : vector<4x32xf32> to vector<2x32xf32>
    %696 = vector.extract_strided_slice %389 {offsets = [14, 0], sizes = [2, 128], strides = [1, 1]} : vector<16x128xf32> to vector<2x128xf32>
    %cst_203 = arith.constant dense<0.000000e+00> : vector<2x128xf32>
    %697 = tpu.matmul %692, %37, %cst_203 {dimension_numbers = #tpu.dot_dimension_numbers<[1], [0], [0], [1], [0, 0, 1, 1], [], []>} : vector<2x32xf32>, vector<32x128xf32>, vector<2x128xf32> -> vector<2x128xf32>
    %698 = arith.addf %696, %697 : vector<2x128xf32>
    %699 = vector.extract_strided_slice %394 {offsets = [0, 0], sizes = [2, 128], strides = [1, 1]} : vector<16x128xf32> to vector<2x128xf32>
    %cst_204 = arith.constant dense<0.000000e+00> : vector<2x128xf32>
    %700 = tpu.matmul %693, %38, %cst_204 {dimension_numbers = #tpu.dot_dimension_numbers<[1], [0], [0], [1], [0, 0, 1, 1], [], []>} : vector<2x32xf32>, vector<32x128xf32>, vector<2x128xf32> -> vector<2x128xf32>
    %701 = arith.addf %699, %700 : vector<2x128xf32>
    %702 = tpu.concatenate %698, %701 in 0 : vector<2x128xf32>, vector<2x128xf32> -> vector<4x128xf32>
    %703 = tpu.concatenate %694, %695 in 0 : vector<2x32xf32>, vector<2x32xf32> -> vector<4x32xf32>
    %704 = vector.extract_strided_slice %702 {offsets = [0, 0], sizes = [4, 32], strides = [1, 1]} : vector<4x128xf32> to vector<4x32xf32>
    %cst_205 = arith.constant 5.000000e-01 : f32
    %705 = vector.broadcast %cst_205 : f32 to vector<4x32xf32>
    %706 = arith.mulf %705, %704 : vector<4x32xf32>
    %707 = math.tanh %706 : vector<4x32xf32>
    %cst_206 = arith.constant 5.000000e-01 : f32
    %708 = vector.broadcast %cst_206 : f32 to vector<4x32xf32>
    %709 = arith.mulf %708, %707 : vector<4x32xf32>
    %cst_207 = arith.constant 5.000000e-01 : f32
    %710 = vector.broadcast %cst_207 : f32 to vector<4x32xf32>
    %711 = arith.addf %709, %710 : vector<4x32xf32>
    %712 = vector.extract_strided_slice %702 {offsets = [0, 32], sizes = [4, 32], strides = [1, 1]} : vector<4x128xf32> to vector<4x32xf32>
    %cst_208 = arith.constant 5.000000e-01 : f32
    %713 = vector.broadcast %cst_208 : f32 to vector<4x32xf32>
    %714 = arith.mulf %713, %712 : vector<4x32xf32>
    %715 = math.tanh %714 : vector<4x32xf32>
    %cst_209 = arith.constant 5.000000e-01 : f32
    %716 = vector.broadcast %cst_209 : f32 to vector<4x32xf32>
    %717 = arith.mulf %716, %715 : vector<4x32xf32>
    %cst_210 = arith.constant 5.000000e-01 : f32
    %718 = vector.broadcast %cst_210 : f32 to vector<4x32xf32>
    %719 = arith.addf %717, %718 : vector<4x32xf32>
    %720 = vector.extract_strided_slice %702 {offsets = [0, 64], sizes = [4, 32], strides = [1, 1]} : vector<4x128xf32> to vector<4x32xf32>
    %721 = math.tanh %720 : vector<4x32xf32>
    %722 = vector.extract_strided_slice %702 {offsets = [0, 96], sizes = [4, 32], strides = [1, 1]} : vector<4x128xf32> to vector<4x32xf32>
    %cst_211 = arith.constant 5.000000e-01 : f32
    %723 = vector.broadcast %cst_211 : f32 to vector<4x32xf32>
    %724 = arith.mulf %723, %722 : vector<4x32xf32>
    %725 = math.tanh %724 : vector<4x32xf32>
    %cst_212 = arith.constant 5.000000e-01 : f32
    %726 = vector.broadcast %cst_212 : f32 to vector<4x32xf32>
    %727 = arith.mulf %726, %725 : vector<4x32xf32>
    %cst_213 = arith.constant 5.000000e-01 : f32
    %728 = vector.broadcast %cst_213 : f32 to vector<4x32xf32>
    %729 = arith.addf %727, %728 : vector<4x32xf32>
    %730 = arith.mulf %719, %703 : vector<4x32xf32>
    %731 = arith.mulf %711, %721 : vector<4x32xf32>
    %732 = arith.addf %730, %731 : vector<4x32xf32>
    %733 = math.tanh %732 : vector<4x32xf32>
    %734 = arith.mulf %729, %733 : vector<4x32xf32>
    %735 = vector.extract_strided_slice %734 {offsets = [0, 0], sizes = [2, 32], strides = [1, 1]} : vector<4x32xf32> to vector<2x32xf32>
    %736 = vector.extract_strided_slice %734 {offsets = [2, 0], sizes = [2, 32], strides = [1, 1]} : vector<4x32xf32> to vector<2x32xf32>
    %737 = vector.extract_strided_slice %380 {offsets = [0, 0], sizes = [1, 32], strides = [1, 1]} : vector<2x32xf32> to vector<1x32xf32>
    %738 = vector.extract_strided_slice %380 {offsets = [1, 0], sizes = [1, 32], strides = [1, 1]} : vector<2x32xf32> to vector<1x32xf32>
    %739 = arith.subf %737, %738 : vector<1x32xf32>
    %740 = vector.extract_strided_slice %381 {offsets = [0, 0], sizes = [1, 32], strides = [1, 1]} : vector<2x32xf32> to vector<1x32xf32>
    %741 = vector.extract_strided_slice %381 {offsets = [1, 0], sizes = [1, 32], strides = [1, 1]} : vector<2x32xf32> to vector<1x32xf32>
    %742 = arith.subf %740, %741 : vector<1x32xf32>
    %743 = vector.extract_strided_slice %735 {offsets = [0, 0], sizes = [1, 32], strides = [1, 1]} : vector<2x32xf32> to vector<1x32xf32>
    %744 = vector.extract_strided_slice %735 {offsets = [1, 0], sizes = [1, 32], strides = [1, 1]} : vector<2x32xf32> to vector<1x32xf32>
    %745 = arith.subf %743, %744 : vector<1x32xf32>
    %746 = vector.extract_strided_slice %736 {offsets = [0, 0], sizes = [1, 32], strides = [1, 1]} : vector<2x32xf32> to vector<1x32xf32>
    %747 = vector.extract_strided_slice %736 {offsets = [1, 0], sizes = [1, 32], strides = [1, 1]} : vector<2x32xf32> to vector<1x32xf32>
    %748 = arith.subf %746, %747 : vector<1x32xf32>
    %749 = tpu.concatenate %739, %742, %745, %748 in 0 : vector<1x32xf32>, vector<1x32xf32>, vector<1x32xf32>, vector<1x32xf32> -> vector<4x32xf32>
    %750 = arith.mulf %749, %749 : vector<4x32xf32>
    %cst_214 = arith.constant dense<0.000000e+00> : vector<4xf32>
    %751 = vector.multi_reduction <add>, %750, %cst_214 [1] : vector<4x32xf32> to vector<4xf32>
    %752 = vector.shape_cast %751 : vector<4xf32> to vector<4x1xf32>
    %753 = math.sqrt %752 : vector<4x1xf32>
    %cst_215 = arith.constant 0.000000e+00 : f32
    %754 = vector.broadcast %cst_215 : f32 to vector<4x1xf32>
    %755 = arith.subf %754, %753 : vector<4x1xf32>
    %756 = math.exp %755 : vector<4x1xf32>
    %c0_216 = arith.constant 0 : index
    %c0_217 = arith.constant 0 : index
    %757 = vector.load %arg15[%c0_216, %c0_217] : memref<4x1xf32, #tpu.memory_space<vmem>>, vector<4x1xf32>
    %758 = arith.mulf %756, %757 : vector<4x1xf32>
    %cst_218 = arith.constant dense<0.000000e+00> : vector<1xf32>
    %759 = vector.multi_reduction <add>, %758, %cst_218 [0] : vector<4x1xf32> to vector<1xf32>
    %760 = vector.shape_cast %759 : vector<1xf32> to vector<1x1xf32>
    %c0_219 = arith.constant 0 : index
    %c0_220 = arith.constant 0 : index
    %761 = vector.load %arg16[%c0_219, %c0_220] : memref<1x1xf32, #tpu.memory_space<vmem>>, vector<1x1xf32>
    %762 = arith.addf %760, %761 : vector<1x1xf32>
    %c0_221 = arith.constant 0 : index
    %c0_222 = arith.constant 0 : index
    %763 = vector.load %arg17[%c0_221, %c0_222] : memref<1x1xf32, #tpu.memory_space<vmem>>, vector<1x1xf32>
    tpu.vector_store %arg17[%c0_221, %c0_222], %762 {strides = array<i32>} : memref<1x1xf32, #tpu.memory_space<vmem>>, vector<1x1xf32>,
    return
  }
}

</mosaic_0001>

<llo_original>
// kernel: siagru_forward.1
$region0: #{siagru_forward.1}
  #allocation0 [shape = 'u32[]', space=smem, size = 0x4, offset = 0x4, fixed_abs, tag = 'smem constant byte address 0x4 - core index']
  #allocation1 [shape = 'u32[144,128]{1,0:T(1,128)}', space=vmem, size = 0x12000, scoped, tag = 'internal scratch']
  #allocation2 [shape = 'f32[1,1]{1,0:T(1,128)S(1)}', space=vmem, size = 0x200, scoped, tag = 'scoped memory for siagru_forward.1']
  %s0 = inlined_call_operand.vmem [shape: f32[16,32], index: 0, kind: input, shape index: {}]
  %s1 = inlined_call_operand.vmem [shape: f32[1,32], index: 1, kind: input, shape index: {}]
  %s2 = inlined_call_operand.vmem [shape: f32[1,32], index: 2, kind: input, shape index: {}]
  %s3 = inlined_call_operand.vmem [shape: f32[32,128], index: 3, kind: input, shape index: {}]
  %s4 = inlined_call_operand.hbm [shape: f32[32,128], index: 4, kind: input, shape index: {}]
  %s5 = inlined_call_operand.vmem [shape: f32[1,128], index: 5, kind: input, shape index: {}]
  %s6 = inlined_call_operand.hbm [shape: f32[32,128], index: 6, kind: input, shape index: {}]
  %s7 = inlined_call_operand.hbm [shape: f32[32,128], index: 7, kind: input, shape index: {}]
  %s8 = inlined_call_operand.vmem [shape: f32[1,128], index: 8, kind: input, shape index: {}]
  %s9 = inlined_call_operand.vmem [shape: f32[64,128], index: 9, kind: input, shape index: {}]
  %s10 = inlined_call_operand.hbm [shape: f32[32,128], index: 10, kind: input, shape index: {}]
  %s11 = inlined_call_operand.vmem [shape: f32[1,128], index: 11, kind: input, shape index: {}]
  %s12 = inlined_call_operand.hbm [shape: f32[64,128], index: 12, kind: input, shape index: {}]
  %s13 = inlined_call_operand.hbm [shape: f32[32,128], index: 13, kind: input, shape index: {}]
  %s14 = inlined_call_operand.vmem [shape: f32[1,128], index: 14, kind: input, shape index: {}]
  %s15 = inlined_call_operand.vmem [shape: f32[4,1], index: 15, kind: input, shape index: {}]
  %s16 = inlined_call_operand.<no memory space> [shape: f32[1,1], index: 16, kind: input, shape index: {}]
  %s17 = inlined_call_operand.hbm [shape: f32[1,1], index: 17, kind: output, shape index: {}]
  %s18 = sld [smem:[#allocation0]]
  $region102: #{siagru_forward.1} parent=0
    _
  %s20 = ssub.s32 1, %s18
  %s21 = scalar_select 0, %s20, %s18
  %v22 = vstv %s16
  %23 = vst [vmem:[#allocation2] sm:$0x1] %v22
  $region1: #{siagru_forward.1} parent=0
    #allocation3 [shape = 'u8[16384]{0}', space=vmem, size = 0x4000, scoped, tag = 'input window, operand 4, single buffered']
    #allocation4 [shape = 's32[1]{0}', space=sflag, size = 0x4, scoped, tag = 'scoped memory for siagru_forward.1']
    #allocation5 [shape = 's32[1]{0}', space=sflag, size = 0x4, scoped, tag = 'scoped memory for siagru_forward.1']
    #allocation6 [shape = 'u8[16384]{0}', space=vmem, size = 0x4000, scoped, tag = 'input window, operand 6, single buffered']
    #allocation7 [shape = 's32[1]{0}', space=sflag, size = 0x4, scoped, tag = 'scoped memory for siagru_forward.1']
    #allocation8 [shape = 'u8[16384]{0}', space=vmem, size = 0x4000, scoped, tag = 'input window, operand 7, single buffered']
    #allocation9 [shape = 'u8[16384]{0}', space=vmem, size = 0x4000, scoped, tag = 'input window, operand 10, single buffered']
    #allocation10 [shape = 's32[1]{0}', space=sflag, size = 0x4, scoped, tag = 'scoped memory for siagru_forward.1']
    #allocation11 [shape = 'u8[32768]{0}', space=vmem, size = 0x8000, scoped, tag = 'input window, operand 12, single buffered']
    #allocation12 [shape = 'u8[16384]{0}', space=vmem, size = 0x4000, scoped, tag = 'input window, operand 13, single buffered']
    #allocation13 [shape = 's32[1]{0}', space=sflag, size = 0x4, scoped, tag = 'scoped memory for siagru_forward.1']
    #allocation14 [shape = 'u8[512]{0}', space=vmem, size = 0x400, scoped, tag = 'output window, operand 0, single buffered']
    %24 = vsyncpa [#allocation4], 0
    %25 = vsyncpa [#allocation7], 0
    %26 = vsyncpa [#allocation10], 0
    %27 = vsyncpa [#allocation13], 0
    %28 = vsyncpa [#allocation5], 0
    // Predicated region
    $region2: #{siagru_forward.1} parent=1 // pred_check
      _
    $region3: #{siagru_forward.1} parent=1 // pred_check_branch
      %30 = sbr.rel (0) target = $region5
    $region4: #{siagru_forward.1} parent=1 // pred_region
      _
    $region5: #{siagru_forward.1} parent=1 // pred_fallthru
      _
    // Predicated region
    $region6: #{siagru_forward.1} parent=1 // pred_check
      _
    $region7: #{siagru_forward.1} parent=1 // pred_check_branch
      %32 = sbr.rel (0) target = $region9
    $region8: #{siagru_forward.1} parent=1 // pred_region
      _
    $region9: #{siagru_forward.1} parent=1 // pred_fallthru
      _
    // Predicated region
    $region10: #{siagru_forward.1} parent=1 // pred_check
      _
    $region11: #{siagru_forward.1} parent=1 // pred_check_branch
      %34 = sbr.rel (0) target = $region13
    $region12: #{siagru_forward.1} parent=1 // pred_region
      _
    $region13: #{siagru_forward.1} parent=1 // pred_fallthru
      _
    // Predicated region
    $region14: #{siagru_forward.1} parent=1 // pred_check
      _
    $region15: #{siagru_forward.1} parent=1 // pred_check_branch
      %36 = sbr.rel (0) target = $region17
    $region16: #{siagru_forward.1} parent=1 // pred_region
      _
    $region17: #{siagru_forward.1} parent=1 // pred_fallthru
      _
    // Predicated region
    $region18: #{siagru_forward.1} parent=1 // pred_check
      _
    $region19: #{siagru_forward.1} parent=1 // pred_check_branch
      %38 = sbr.rel (0) target = $region21
    $region20: #{siagru_forward.1} parent=1 // pred_region
      %s40 = ssub.s32 512, 512
      %41 = vsyncadd [#allocation4], %s40
      %s42 = sshll.u32 [#allocation3], 4
      %s43 = int_to_ptr.vmem [resolvable:$true] %s42
      %48 = dma.hbm_to_vmem [thread:$0]  %s4, 512, %s43, [#allocation4], 128, 128, 8
    $region21: #{siagru_forward.1} parent=1 // pred_fallthru
      _
    // Predicated region
    $region22: #{siagru_forward.1} parent=1 // pred_check
      _
    $region23: #{siagru_forward.1} parent=1 // pred_check_branch
      %50 = sbr.rel (0) target = $region25
    $region24: #{siagru_forward.1} parent=1 // pred_region
      _
    $region25: #{siagru_forward.1} parent=1 // pred_fallthru
      _
    // Predicated region
    $region26: #{siagru_forward.1} parent=1 // pred_check
      _
    $region27: #{siagru_forward.1} parent=1 // pred_check_branch
      %52 = sbr.rel (0) target = $region29
    $region28: #{siagru_forward.1} parent=1 // pred_region
      %s54 = ssub.s32 512, 512
      %55 = vsyncadd [#allocation7], %s54
      %s56 = sshll.u32 [#allocation6], 4
      %s57 = int_to_ptr.vmem [resolvable:$true] %s56
      %62 = dma.hbm_to_vmem [thread:$0]  %s6, 512, %s57, [#allocation7], 128, 128, 8
    $region29: #{siagru_forward.1} parent=1 // pred_fallthru
      _
    // Predicated region
    $region30: #{siagru_forward.1} parent=1 // pred_check
      _
    $region31: #{siagru_forward.1} parent=1 // pred_check_branch
      %64 = sbr.rel (0) target = $region33
    $region32: #{siagru_forward.1} parent=1 // pred_region
      %s66 = ssub.s32 512, 512
      %67 = vsyncadd [#allocation7], %s66
      %s68 = sshll.u32 [#allocation8], 4
      %s69 = int_to_ptr.vmem [resolvable:$true] %s68
      %74 = dma.hbm_to_vmem [thread:$0]  %s7, 512, %s69, [#allocation7], 128, 128, 8
    $region33: #{siagru_forward.1} parent=1 // pred_fallthru
      _
    // Predicated region
    $region34: #{siagru_forward.1} parent=1 // pred_check
      _
    $region35: #{siagru_forward.1} parent=1 // pred_check_branch
      %76 = sbr.rel (0) target = $region37
    $region36: #{siagru_forward.1} parent=1 // pred_region
      _
    $region37: #{siagru_forward.1} parent=1 // pred_fallthru
      _
    // Predicated region
    $region38: #{siagru_forward.1} parent=1 // pred_check
      _
    $region39: #{siagru_forward.1} parent=1 // pred_check_branch
      %78 = sbr.rel (0) target = $region41
    $region40: #{siagru_forward.1} parent=1 // pred_region
      _
    $region41: #{siagru_forward.1} parent=1 // pred_fallthru
      _
    // Predicated region
    $region42: #{siagru_forward.1} parent=1 // pred_check
      _
    $region43: #{siagru_forward.1} parent=1 // pred_check_branch
      %80 = sbr.rel (0) target = $region45
    $region44: #{siagru_forward.1} parent=1 // pred_region
      %s82 = ssub.s32 512, 512
      %83 = vsyncadd [#allocation10], %s82
      %s84 = sshll.u32 [#allocation9], 4
      %s85 = int_to_ptr.vmem [resolvable:$true] %s84
      %90 = dma.hbm_to_vmem [thread:$0]  %s10, 512, %s85, [#allocation10], 128, 128, 8
    $region45: #{siagru_forward.1} parent=1 // pred_fallthru
      _
    // Predicated region
    $region46: #{siagru_forward.1} parent=1 // pred_check
      _
    $region47: #{siagru_forward.1} parent=1 // pred_check_branch
      %92 = sbr.rel (0) target = $region49
    $region48: #{siagru_forward.1} parent=1 // pred_region
      _
    $region49: #{siagru_forward.1} parent=1 // pred_fallthru
      _
    // Predicated region
    $region50: #{siagru_forward.1} parent=1 // pred_check
      _
    $region51: #{siagru_forward.1} parent=1 // pred_check_branch
      %94 = sbr.rel (0) target = $region53
    $region52: #{siagru_forward.1} parent=1 // pred_region
      %s96 = ssub.s32 1024, 1024
      %97 = vsyncadd [#allocation10], %s96
      %s98 = sshll.u32 [#allocation11], 4
      %s99 = int_to_ptr.vmem [resolvable:$true] %s98
      %104 = dma.hbm_to_vmem [thread:$0]  %s12, 1024, %s99, [#allocation10], 128, 128, 8
    $region53: #{siagru_forward.1} parent=1 // pred_fallthru
      _
    // Predicated region
    $region54: #{siagru_forward.1} parent=1 // pred_check
      _
    $region55: #{siagru_forward.1} parent=1 // pred_check_branch
      %106 = sbr.rel (0) target = $region57
    $region56: #{siagru_forward.1} parent=1 // pred_region
      %s108 = ssub.s32 512, 512
      %109 = vsyncadd [#allocation13], %s108
      %s110 = sshll.u32 [#allocation12], 4
      %s111 = int_to_ptr.vmem [resolvable:$true] %s110
      %116 = dma.hbm_to_vmem [thread:$0]  %s13, 512, %s111, [#allocation13], 128, 128, 8
    $region57: #{siagru_forward.1} parent=1 // pred_fallthru
      _
    // Predicated region
    $region58: #{siagru_forward.1} parent=1 // pred_check
      _
    $region59: #{siagru_forward.1} parent=1 // pred_check_branch
      %118 = sbr.rel (0) target = $region61
    $region60: #{siagru_forward.1} parent=1 // pred_region
      _
    $region61: #{siagru_forward.1} parent=1 // pred_fallthru
      _
    // Predicated region
    $region62: #{siagru_forward.1} parent=1 // pred_check
      _
    $region63: #{siagru_forward.1} parent=1 // pred_check_branch
      %120 = sbr.rel (0) target = $region65
    $region64: #{siagru_forward.1} parent=1 // pred_region
      _
    $region65: #{siagru_forward.1} parent=1 // pred_fallthru
      _
    // Predicated region
    $region66: #{siagru_forward.1} parent=1 // pred_check
      _
    $region67: #{siagru_forward.1} parent=1 // pred_check_branch
      %122 = sbr.rel (0) target = $region69
    $region68: #{siagru_forward.1} parent=1 // pred_region
      _
    $region69: #{siagru_forward.1} parent=1 // pred_fallthru
      _
    // Predicated region
    $region70: #{siagru_forward.1} parent=1 // pred_check
      _
    $region71: #{siagru_forward.1} parent=1 // pred_check_branch
      %124 = sbr.rel (0) target = $region73
    $region72: #{siagru_forward.1} parent=1 // pred_region
      %125 = dma.done [#allocation4], 512
    $region73: #{siagru_forward.1} parent=1 // pred_fallthru
      _
    // Predicated region
    $region74: #{siagru_forward.1} parent=1 // pred_check
      _
    $region75: #{siagru_forward.1} parent=1 // pred_check_branch
      %127 = sbr.rel (0) target = $region77
    $region76: #{siagru_forward.1} parent=1 // pred_region
      %128 = dma.done [#allocation7], 512
    $region77: #{siagru_forward.1} parent=1 // pred_fallthru
      _
    // Predicated region
    $region78: #{siagru_forward.1} parent=1 // pred_check
      _
    $region79: #{siagru_forward.1} parent=1 // pred_check_branch
      %130 = sbr.rel (0) target = $region81
    $region80: #{siagru_forward.1} parent=1 // pred_region
      %131 = dma.done [#allocation7], 512
    $region81: #{siagru_forward.1} parent=1 // pred_fallthru
      _
    // Predicated region
    $region82: #{siagru_forward.1} parent=1 // pred_check
      _
    $region83: #{siagru_forward.1} parent=1 // pred_check_branch
      %133 = sbr.rel (0) target = $region85
    $region84: #{siagru_forward.1} parent=1 // pred_region
      %134 = dma.done [#allocation10], 512
    $region85: #{siagru_forward.1} parent=1 // pred_fallthru
      _
    // Predicated region
    $region86: #{siagru_forward.1} parent=1 // pred_check
      _
    $region87: #{siagru_forward.1} parent=1 // pred_check_branch
      %136 = sbr.rel (0) target = $region89
    $region88: #{siagru_forward.1} parent=1 // pred_region
      %137 = dma.done [#allocation10], 1024
    $region89: #{siagru_forward.1} parent=1 // pred_fallthru
      _
    // Predicated region
    $region90: #{siagru_forward.1} parent=1 // pred_check
      _
    $region91: #{siagru_forward.1} parent=1 // pred_check_branch
      %139 = sbr.rel (0) target = $region93
    $region92: #{siagru_forward.1} parent=1 // pred_region
      %140 = dma.done [#allocation13], 512
    $region93: #{siagru_forward.1} parent=1 // pred_fallthru
      _
    %v141 = vld [vmem:[%s0] sm:$0xff]
    %v142 = vld [vmem:[%s0 + $0x8] sm:$0xff]
    %vm143 = vcmask 261120
    %v144 = vsel %vm143, %v141, 0.0
    %145 = vadd.xlane.f32.xlu0 %v144
    %v146 = vpop.xlane.xlu0 %145
    %v147 = vsel %vm143, %v142, 0.0
    %148 = vadd.xlane.f32.xlu0 %v147
    %v149 = vpop.xlane.xlu0 %148
    %v150 = vrcp.pop 32.0
    %v151 = vmul.f32 %v146, %v150
    %v152 = vmul.f32 %v149, %v150
    %v153 = vsub.f32 %v141, %v151
    %v154 = vsub.f32 %v142, %v152
    %v155 = vmul.f32 %v153, %v153
    %v156 = vmul.f32 %v154, %v154
    %v157 = vsel %vm143, %v155, 0.0
    %158 = vadd.xlane.f32.xlu0 %v157
    %v159 = vpop.xlane.xlu0 %158
    %v160 = vsel %vm143, %v156, 0.0
    %161 = vadd.xlane.f32.xlu0 %v160
    %v162 = vpop.xlane.xlu0 %161
    %v163 = vmul.f32 %v159, %v150
    %v164 = vmul.f32 %v162, %v150
    %v165 = vadd.f32 %v163, 1e-05
    %v166 = vadd.f32 %v164, 1e-05
    %v167 = vrsqrt.pop %v165
    %v168 = vrsqrt.pop %v166
    %v169 = vmul.f32 %v153, %v167
    %v170 = vmul.f32 %v154, %v168
    %v171 = vld [vmem:[%s1] sm:$0x1]
    %v173 = vlaneseq
    %v174 = vshrl.u32 %v173, 7
    %v175 = vsub.s32 0, %v174
    %v176 = vrot.slane %v171, %v175
    %v178 = vmul.f32 %v169, %v176
    %v179 = vmul.f32 %v170, %v176
    %v180 = vld [vmem:[%s2] sm:$0x1]
    %v182 = vlaneseq
    %v183 = vshrl.u32 %v182, 7
    %v184 = vsub.s32 0, %v183
    %v185 = vrot.slane %v180, %v184
    %v187 = vadd.f32 %v178, %v185
    %v188 = vadd.f32 %v179, %v185
    %v189 = vld [vmem:[%s3] sm:$0xff]
    %v190 = vld [vmem:[%s3 + $0x8] sm:$0xff]
    %v191 = vld [vmem:[%s3 + $0x10] sm:$0xff]
    %v192 = vld [vmem:[%s3 + $0x18] sm:$0xff]
    %v193 = vld [vmem:[%s5] sm:$0x1]
    %v195 = vlaneseq
    %v196 = vshrl.u32 %v195, 7
    %v197 = vsub.s32 0, %v196
    %v198 = vrot.slane %v193, %v197
    %v201 = vsel %vm143, %v187, 0
    %v204 = vsel %vm143, %v188, 0
    %206 = vmatprep.subr.mxu0 0.0
    %207 = vmatpush1.msra.mxu0 %v189
    %208 = vmatprep.subr.mxu0 0.0
    %209 = vmatpush1.msra.mxu0 %v190
    %210 = vmatprep.subr.mxu0 0.0
    %211 = vmatpush1.msra.mxu0 %v191
    %212 = vmatprep.subr.mxu0 0.0
    %213 = vmatpush1.msra.mxu0 %v192
    %214 = vmatprep.subr.mxu0 0.0
    %215 = vmatpush1.msra.mxu0 0.0
    %216 = vmatprep.subr.mxu0 0.0
    %217 = vmatpush1.msra.mxu0 0.0
    %218 = vmatprep.subr.mxu0 0.0
    %219 = vmatpush1.msra.mxu0 0.0
    %220 = vmatprep.subr.mxu0 0.0
    %221 = vmatpush1.msra.mxu0 0.0
    %222 = vmatprep.subr.mxu0 0.0
    %223 = vmatpush1.msra.mxu0 0.0
    %224 = vmatprep.subr.mxu0 0.0
    %225 = vmatpush1.msra.mxu0 0.0
    %226 = vmatprep.subr.mxu0 0.0
    %227 = vmatpush1.msra.mxu0 0.0
    %228 = vmatprep.subr.mxu0 0.0
    %229 = vmatpush1.msra.mxu0 0.0
    %230 = vmatprep.subr.mxu0 0.0
    %231 = vmatpush1.msra.mxu0 0.0
    %232 = vmatprep.subr.mxu0 0.0
    %233 = vmatpush1.msra.mxu0 0.0
    %234 = vmatprep.subr.mxu0 0.0
    %235 = vmatpush1.msra.mxu0 0.0
    %236 = vmatprep.subr.mxu0 0.0
    %237 = vmatpush1.msra.mxu0 0.0
    %238 = vmatprep.subr.mxu0 0.0
    %239 = vmatpush1.msra.mxu0 0.0
    %240 = vmatprep.subr.mxu0 0.0
    %241 = vmatpush1.msra.mxu0 0.0
    %242 = vmatprep.subr.mxu0 0.0
    %243 = vmatpush1.msra.mxu0 0.0
    %244 = vmatprep.subr.mxu0 0.0
    %245 = vmatpush1.msra.mxu0 0.0
    %246 = vmatprep.subr.mxu0 0.0
    %247 = vmatpush1.msra.mxu0 0.0
    %248 = vmatprep.subr.mxu0 0.0
    %249 = vmatpush1.msra.mxu0 0.0
    %250 = vmatprep.subr.mxu0 0.0
    %251 = vmatpush1.msra.mxu0 0.0
    %252 = vmatprep.subr.mxu0 0.0
    %253 = vmatpush1.msra.mxu0 0.0
    %254 = vmatprep.subr.mxu0 0.0
    %255 = vmatpush1.msra.mxu0 0.0
    %256 = vmatprep.subr.mxu0 0.0
    %257 = vmatpush1.msra.mxu0 0.0
    %258 = vmatprep.subr.mxu0 0.0
    %259 = vmatpush1.msra.mxu0 0.0
    %260 = vmatprep.subr.mxu0 0.0
    %261 = vmatpush1.msra.mxu0 0.0
    %262 = vmatprep.subr.mxu0 0.0
    %263 = vmatpush1.msra.mxu0 0.0
    %264 = vmatprep.subr.mxu0 0.0
    %265 = vmatpush1.msra.mxu0 0.0
    %266 = vmatprep.subr.mxu0 0.0
    %267 = vmatpush1.msra.mxu0 0.0
    %268 = vmatprep.subr.mxu0 0.0
    %269 = vmatpush1.msra.mxu0 0.0
    %270 = vmatprep.mubr.f32.mxu0 0.0
    %271 = vmatmul.mubr.f32.gmra.mrb[0].mxu0 %v201
    %v272 = vpop.f32.mrb[0].mxu0
    %v273 = vadd.f32 %v198, %v272
    %v274 = vpop.f32.mrb[0].mxu0
    %275 = vmatprep.mubr.f32.mxu0 0.0
    %276 = vmatmul.mubr.f32.gmra.mrb[0].mxu0 %v204
    %v277 = vpop.f32.mrb[0].mxu0
    %v278 = vadd.f32 %v198, %v277
    %v279 = vpop.f32.mrb[0].mxu0
    %280 = vdwg.mxu0
    %v281 = vld [vmem:[#allocation6] sm:$0xff]
    %v282 = vld [vmem:[#allocation6 + $0x8] sm:$0xff]
    %v283 = vld [vmem:[#allocation6 + $0x10] sm:$0xff]
    %v284 = vld [vmem:[#allocation6 + $0x18] sm:$0xff]
    %v285 = vld [vmem:[%s8] sm:$0x1]
    %v287 = vlaneseq
    %v288 = vshrl.u32 %v287, 7
    %v289 = vsub.s32 0, %v288
    %v290 = vrot.slane %v285, %v289
    %292 = vmatprep.subr.mxu0 0.0
    %293 = vmatpush1.msra.mxu0 %v281
    %294 = vmatprep.subr.mxu0 0.0
    %295 = vmatpush1.msra.mxu0 %v282
    %296 = vmatprep.subr.mxu0 0.0
    %297 = vmatpush1.msra.mxu0 %v283
    %298 = vmatprep.subr.mxu0 0.0
    %299 = vmatpush1.msra.mxu0 %v284
    %300 = vmatprep.subr.mxu0 0.0
    %301 = vmatpush1.msra.mxu0 0.0
    %302 = vmatprep.subr.mxu0 0.0
    %303 = vmatpush1.msra.mxu0 0.0
    %304 = vmatprep.subr.mxu0 0.0
    %305 = vmatpush1.msra.mxu0 0.0
    %306 = vmatprep.subr.mxu0 0.0
    %307 = vmatpush1.msra.mxu0 0.0
    %308 = vmatprep.subr.mxu0 0.0
    %309 = vmatpush1.msra.mxu0 0.0
    %310 = vmatprep.subr.mxu0 0.0
    %311 = vmatpush1.msra.mxu0 0.0
    %312 = vmatprep.subr.mxu0 0.0
    %313 = vmatpush1.msra.mxu0 0.0
    %314 = vmatprep.subr.mxu0 0.0
    %315 = vmatpush1.msra.mxu0 0.0
    %316 = vmatprep.subr.mxu0 0.0
    %317 = vmatpush1.msra.mxu0 0.0
    %318 = vmatprep.subr.mxu0 0.0
    %319 = vmatpush1.msra.mxu0 0.0
    %320 = vmatprep.subr.mxu0 0.0
    %321 = vmatpush1.msra.mxu0 0.0
    %322 = vmatprep.subr.mxu0 0.0
    %323 = vmatpush1.msra.mxu0 0.0
    %324 = vmatprep.subr.mxu0 0.0
    %325 = vmatpush1.msra.mxu0 0.0
    %326 = vmatprep.subr.mxu0 0.0
    %327 = vmatpush1.msra.mxu0 0.0
    %328 = vmatprep.subr.mxu0 0.0
    %329 = vmatpush1.msra.mxu0 0.0
    %330 = vmatprep.subr.mxu0 0.0
    %331 = vmatpush1.msra.mxu0 0.0
    %332 = vmatprep.subr.mxu0 0.0
    %333 = vmatpush1.msra.mxu0 0.0
    %334 = vmatprep.subr.mxu0 0.0
    %335 = vmatpush1.msra.mxu0 0.0
    %336 = vmatprep.subr.mxu0 0.0
    %337 = vmatpush1.msra.mxu0 0.0
    %338 = vmatprep.subr.mxu0 0.0
    %339 = vmatpush1.msra.mxu0 0.0
    %340 = vmatprep.subr.mxu0 0.0
    %341 = vmatpush1.msra.mxu0 0.0
    %342 = vmatprep.subr.mxu0 0.0
    %343 = vmatpush1.msra.mxu0 0.0
    %344 = vmatprep.subr.mxu0 0.0
    %345 = vmatpush1.msra.mxu0 0.0
    %346 = vmatprep.subr.mxu0 0.0
    %347 = vmatpush1.msra.mxu0 0.0
    %348 = vmatprep.subr.mxu0 0.0
    %349 = vmatpush1.msra.mxu0 0.0
    %350 = vmatprep.subr.mxu0 0.0
    %351 = vmatpush1.msra.mxu0 0.0
    %352 = vmatprep.subr.mxu0 0.0
    %353 = vmatpush1.msra.mxu0 0.0
    %354 = vmatprep.subr.mxu0 0.0
    %355 = vmatpush1.msra.mxu0 0.0
    %356 = vmatprep.mubr.f32.mxu0 0.0
    %357 = vmatmul.mubr.f32.gmra.mrb[0].mxu0 %v201
    %v358 = vpop.f32.mrb[0].mxu0
    %v359 = vadd.f32 %v290, %v358
    %v360 = vpop.f32.mrb[0].mxu0
    %361 = vmatprep.mubr.f32.mxu0 0.0
    %362 = vmatmul.mubr.f32.gmra.mrb[0].mxu0 %v204
    %v363 = vpop.f32.mrb[0].mxu0
    %v364 = vadd.f32 %v290, %v363
    %v365 = vpop.f32.mrb[0].mxu0
    %366 = vdwg.mxu0
    %v367 = vld [vmem:[#allocation3] sm:$0xff]
    %v368 = vld [vmem:[#allocation3 + $0x8] sm:$0xff]
    %v369 = vld [vmem:[#allocation3 + $0x10] sm:$0xff]
    %v370 = vld [vmem:[#allocation3 + $0x18] sm:$0xff]
    %v371 = vld [vmem:[#allocation8] sm:$0xff]
    %v372 = vld [vmem:[#allocation8 + $0x8] sm:$0xff]
    %v373 = vld [vmem:[#allocation8 + $0x10] sm:$0xff]
    %v374 = vld [vmem:[#allocation8 + $0x18] sm:$0xff]
    %v375 = vld [vmem:[#allocation9] sm:$0xff]
    %v376 = vld [vmem:[#allocation9 + $0x8] sm:$0xff]
    %v377 = vld [vmem:[#allocation9 + $0x10] sm:$0xff]
    %v378 = vld [vmem:[#allocation9 + $0x18] sm:$0xff]
    %v379 = vld [vmem:[#allocation12] sm:$0xff]
    %v380 = vld [vmem:[#allocation12 + $0x8] sm:$0xff]
    %v381 = vld [vmem:[#allocation12 + $0x10] sm:$0xff]
    %v382 = vld [vmem:[#allocation12 + $0x18] sm:$0xff]
    %v384 = vsel %vm143, 0.0, 0
    %386 = vmatprep.subr.mxu0 0.0
    %387 = vmatpush1.msra.mxu0 %v367
    %388 = vmatprep.subr.mxu0 0.0
    %389 = vmatpush1.msra.mxu0 %v368
    %390 = vmatprep.subr.mxu0 0.0
    %391 = vmatpush1.msra.mxu0 %v369
    %392 = vmatprep.subr.mxu0 0.0
    %393 = vmatpush1.msra.mxu0 %v370
    %394 = vmatprep.subr.mxu0 0.0
    %395 = vmatpush1.msra.mxu0 0.0
    %396 = vmatprep.subr.mxu0 0.0
    %397 = vmatpush1.msra.mxu0 0.0
    %398 = vmatprep.subr.mxu0 0.0
    %399 = vmatpush1.msra.mxu0 0.0
    %400 = vmatprep.subr.mxu0 0.0
    %401 = vmatpush1.msra.mxu0 0.0
    %402 = vmatprep.subr.mxu0 0.0
    %403 = vmatpush1.msra.mxu0 0.0
    %404 = vmatprep.subr.mxu0 0.0
    %405 = vmatpush1.msra.mxu0 0.0
    %406 = vmatprep.subr.mxu0 0.0
    %407 = vmatpush1.msra.mxu0 0.0
    %408 = vmatprep.subr.mxu0 0.0
    %409 = vmatpush1.msra.mxu0 0.0
    %410 = vmatprep.subr.mxu0 0.0
    %411 = vmatpush1.msra.mxu0 0.0
    %412 = vmatprep.subr.mxu0 0.0
    %413 = vmatpush1.msra.mxu0 0.0
    %414 = vmatprep.subr.mxu0 0.0
    %415 = vmatpush1.msra.mxu0 0.0
    %416 = vmatprep.subr.mxu0 0.0
    %417 = vmatpush1.msra.mxu0 0.0
    %418 = vmatprep.subr.mxu0 0.0
    %419 = vmatpush1.msra.mxu0 0.0
    %420 = vmatprep.subr.mxu0 0.0
    %421 = vmatpush1.msra.mxu0 0.0
    %422 = vmatprep.subr.mxu0 0.0
    %423 = vmatpush1.msra.mxu0 0.0
    %424 = vmatprep.subr.mxu0 0.0
    %425 = vmatpush1.msra.mxu0 0.0
    %426 = vmatprep.subr.mxu0 0.0
    %427 = vmatpush1.msra.mxu0 0.0
    %428 = vmatprep.subr.mxu0 0.0
    %429 = vmatpush1.msra.mxu0 0.0
    %430 = vmatprep.subr.mxu0 0.0
    %431 = vmatpush1.msra.mxu0 0.0
    %432 = vmatprep.subr.mxu0 0.0
    %433 = vmatpush1.msra.mxu0 0.0
    %434 = vmatprep.subr.mxu0 0.0
    %435 = vmatpush1.msra.mxu0 0.0
    %436 = vmatprep.subr.mxu0 0.0
    %437 = vmatpush1.msra.mxu0 0.0
    %438 = vmatprep.subr.mxu0 0.0
    %439 = vmatpush1.msra.mxu0 0.0
    %440 = vmatprep.subr.mxu0 0.0
    %441 = vmatpush1.msra.mxu0 0.0
    %442 = vmatprep.subr.mxu0 0.0
    %443 = vmatpush1.msra.mxu0 0.0
    %444 = vmatprep.subr.mxu0 0.0
    %445 = vmatpush1.msra.mxu0 0.0
    %446 = vmatprep.subr.mxu0 0.0
    %447 = vmatpush1.msra.mxu0 0.0
    %448 = vmatprep.subr.mxu0 0.0
    %449 = vmatpush1.msra.mxu0 0.0
    %450 = vmatprep.mubr.f32.mxu0 0.0
    %451 = vmatmul.mubr.f32.gmra.mrb[0].mxu0 %v384
    %v452 = vpop.f32.mrb[0].mxu0
    %v453 = vadd.f32 0.0, %v452
    %v454 = vpop.f32.mrb[0].mxu0
    %455 = vdwg.mxu0
    %v456 = vadd.f32 %v273, %v453
    %457 = vmatprep.subr.mxu0 0.0
    %458 = vmatpush1.msra.mxu0 %v371
    %459 = vmatprep.subr.mxu0 0.0
    %460 = vmatpush1.msra.mxu0 %v372
    %461 = vmatprep.subr.mxu0 0.0
    %462 = vmatpush1.msra.mxu0 %v373
    %463 = vmatprep.subr.mxu0 0.0
    %464 = vmatpush1.msra.mxu0 %v374
    %465 = vmatprep.subr.mxu0 0.0
    %466 = vmatpush1.msra.mxu0 0.0
    %467 = vmatprep.subr.mxu0 0.0
    %468 = vmatpush1.msra.mxu0 0.0
    %469 = vmatprep.subr.mxu0 0.0
    %470 = vmatpush1.msra.mxu0 0.0
    %471 = vmatprep.subr.mxu0 0.0
    %472 = vmatpush1.msra.mxu0 0.0
    %473 = vmatprep.subr.mxu0 0.0
    %474 = vmatpush1.msra.mxu0 0.0
    %475 = vmatprep.subr.mxu0 0.0
    %476 = vmatpush1.msra.mxu0 0.0
    %477 = vmatprep.subr.mxu0 0.0
    %478 = vmatpush1.msra.mxu0 0.0
    %479 = vmatprep.subr.mxu0 0.0
    %480 = vmatpush1.msra.mxu0 0.0
    %481 = vmatprep.subr.mxu0 0.0
    %482 = vmatpush1.msra.mxu0 0.0
    %483 = vmatprep.subr.mxu0 0.0
    %484 = vmatpush1.msra.mxu0 0.0
    %485 = vmatprep.subr.mxu0 0.0
    %486 = vmatpush1.msra.mxu0 0.0
    %487 = vmatprep.subr.mxu0 0.0
    %488 = vmatpush1.msra.mxu0 0.0
    %489 = vmatprep.subr.mxu0 0.0
    %490 = vmatpush1.msra.mxu0 0.0
    %491 = vmatprep.subr.mxu0 0.0
    %492 = vmatpush1.msra.mxu0 0.0
    %493 = vmatprep.subr.mxu0 0.0
    %494 = vmatpush1.msra.mxu0 0.0
    %495 = vmatprep.subr.mxu0 0.0
    %496 = vmatpush1.msra.mxu0 0.0
    %497 = vmatprep.subr.mxu0 0.0
    %498 = vmatpush1.msra.mxu0 0.0
    %499 = vmatprep.subr.mxu0 0.0
    %500 = vmatpush1.msra.mxu0 0.0
    %501 = vmatprep.subr.mxu0 0.0
    %502 = vmatpush1.msra.mxu0 0.0
    %503 = vmatprep.subr.mxu0 0.0
    %504 = vmatpush1.msra.mxu0 0.0
    %505 = vmatprep.subr.mxu0 0.0
    %506 = vmatpush1.msra.mxu0 0.0
    %507 = vmatprep.subr.mxu0 0.0
    %508 = vmatpush1.msra.mxu0 0.0
    %509 = vmatprep.subr.mxu0 0.0
    %510 = vmatpush1.msra.mxu0 0.0
    %511 = vmatprep.subr.mxu0 0.0
    %512 = vmatpush1.msra.mxu0 0.0
    %513 = vmatprep.subr.mxu0 0.0
    %514 = vmatpush1.msra.mxu0 0.0
    %515 = vmatprep.subr.mxu0 0.0
    %516 = vmatpush1.msra.mxu0 0.0
    %517 = vmatprep.subr.mxu0 0.0
    %518 = vmatpush1.msra.mxu0 0.0
    %519 = vmatprep.subr.mxu0 0.0
    %520 = vmatpush1.msra.mxu0 0.0
    %521 = vmatprep.mubr.f32.mxu0 0.0
    %522 = vmatmul.mubr.f32.gmra.mrb[0].mxu0 %v384
    %v523 = vpop.f32.mrb[0].mxu0
    %v524 = vadd.f32 0.0, %v523
    %v525 = vpop.f32.mrb[0].mxu0
    %526 = vdwg.mxu0
    %v528 = vrot.slane %v524, 2
    %v530 = vadd.f32 %v364, %v528
    %v532 = vrot.slane %v530, 4
    %vm534 = vcmask 1041408
    %v535 = vsel %vm534, %v456, %v532
    %v536 = vmul.f32 %v535, 0.5
    %v537 = vtanh.pop %v536
    %v538 = vmul.f32 %v537, 0.5
    %v539 = vadd.f32 %v538, 0.5
    %v540 = vtanh.pop %v535
    %541 = vrot.lane.b32.xlu0 0.0, 32
    %v542 = vpop.permute.xlu0 %541
    %v544 = vmul.f32 %v539, %v542
    %546 = vrot.lane.b32.xlu0 %v540, 64
    %v547 = vpop.permute.xlu0 %546
    %v549 = vmul.f32 %v539, %v547
    %551 = vrot.lane.b32.xlu0 %v549, 32
    %v552 = vpop.permute.xlu0 %551
    %v554 = vadd.f32 %v544, %v552
    %v555 = vtanh.pop %v554
    %557 = vrot.lane.b32.xlu0 %v555, 64
    %v558 = vpop.permute.xlu0 %557
    %v560 = vmul.f32 %v539, %v558
    %562 = vrot.lane.b32.xlu0 %v560, 32
    %v563 = vpop.permute.xlu0 %562
    %v564 = vsel %vm143, %v563, 0
    %566 = vmatprep.subr.mxu0 0.0
    %567 = vmatpush1.msra.mxu0 %v367
    %568 = vmatprep.subr.mxu0 0.0
    %569 = vmatpush1.msra.mxu0 %v368
    %570 = vmatprep.subr.mxu0 0.0
    %571 = vmatpush1.msra.mxu0 %v369
    %572 = vmatprep.subr.mxu0 0.0
    %573 = vmatpush1.msra.mxu0 %v370
    %574 = vmatprep.subr.mxu0 0.0
    %575 = vmatpush1.msra.mxu0 0.0
    %576 = vmatprep.subr.mxu0 0.0
    %577 = vmatpush1.msra.mxu0 0.0
    %578 = vmatprep.subr.mxu0 0.0
    %579 = vmatpush1.msra.mxu0 0.0
    %580 = vmatprep.subr.mxu0 0.0
    %581 = vmatpush1.msra.mxu0 0.0
    %582 = vmatprep.subr.mxu0 0.0
    %583 = vmatpush1.msra.mxu0 0.0
    %584 = vmatprep.subr.mxu0 0.0
    %585 = vmatpush1.msra.mxu0 0.0
    %586 = vmatprep.subr.mxu0 0.0
    %587 = vmatpush1.msra.mxu0 0.0
    %588 = vmatprep.subr.mxu0 0.0
    %589 = vmatpush1.msra.mxu0 0.0
    %590 = vmatprep.subr.mxu0 0.0
    %591 = vmatpush1.msra.mxu0 0.0
    %592 = vmatprep.subr.mxu0 0.0
    %593 = vmatpush1.msra.mxu0 0.0
    %594 = vmatprep.subr.mxu0 0.0
    %595 = vmatpush1.msra.mxu0 0.0
    %596 = vmatprep.subr.mxu0 0.0
    %597 = vmatpush1.msra.mxu0 0.0
    %598 = vmatprep.subr.mxu0 0.0
    %599 = vmatpush1.msra.mxu0 0.0
    %600 = vmatprep.subr.mxu0 0.0
    %601 = vmatpush1.msra.mxu0 0.0
    %602 = vmatprep.subr.mxu0 0.0
    %603 = vmatpush1.msra.mxu0 0.0
    %604 = vmatprep.subr.mxu0 0.0
    %605 = vmatpush1.msra.mxu0 0.0
    %606 = vmatprep.subr.mxu0 0.0
    %607 = vmatpush1.msra.mxu0 0.0
    %608 = vmatprep.subr.mxu0 0.0
    %609 = vmatpush1.msra.mxu0 0.0
    %610 = vmatprep.subr.mxu0 0.0
    %611 = vmatpush1.msra.mxu0 0.0
    %612 = vmatprep.subr.mxu0 0.0
    %613 = vmatpush1.msra.mxu0 0.0
    %614 = vmatprep.subr.mxu0 0.0
    %615 = vmatpush1.msra.mxu0 0.0
    %616 = vmatprep.subr.mxu0 0.0
    %617 = vmatpush1.msra.mxu0 0.0
    %618 = vmatprep.subr.mxu0 0.0
    %619 = vmatpush1.msra.mxu0 0.0
    %620 = vmatprep.subr.mxu0 0.0
    %621 = vmatpush1.msra.mxu0 0.0
    %622 = vmatprep.subr.mxu0 0.0
    %623 = vmatpush1.msra.mxu0 0.0
    %624 = vmatprep.subr.mxu0 0.0
    %625 = vmatpush1.msra.mxu0 0.0
    %626 = vmatprep.subr.mxu0 0.0
    %627 = vmatpush1.msra.mxu0 0.0
    %628 = vmatprep.subr.mxu0 0.0
    %629 = vmatpush1.msra.mxu0 0.0
    %630 = vmatprep.mubr.f32.mxu0 0.0
    %631 = vmatmul.mubr.f32.gmra.mrb[0].mxu0 %v564
    %v632 = vpop.f32.mrb[0].mxu0
    %v633 = vadd.f32 0.0, %v632
    %v634 = vpop.f32.mrb[0].mxu0
    %635 = vdwg.mxu0
    %v637 = vrot.slane %v633, 6
    %v639 = vadd.f32 %v273, %v637
    %v640 = vrot.slane %v560, 2
    %641 = vrot.lane.b32.xlu0 %v640, 32
    %v642 = vpop.permute.xlu0 %641
    %v643 = vsel %vm143, %v642, 0
    %645 = vmatprep.subr.mxu0 0.0
    %646 = vmatpush1.msra.mxu0 %v371
    %647 = vmatprep.subr.mxu0 0.0
    %648 = vmatpush1.msra.mxu0 %v372
    %649 = vmatprep.subr.mxu0 0.0
    %650 = vmatpush1.msra.mxu0 %v373
    %651 = vmatprep.subr.mxu0 0.0
    %652 = vmatpush1.msra.mxu0 %v374
    %653 = vmatprep.subr.mxu0 0.0
    %654 = vmatpush1.msra.mxu0 0.0
    %655 = vmatprep.subr.mxu0 0.0
    %656 = vmatpush1.msra.mxu0 0.0
    %657 = vmatprep.subr.mxu0 0.0
    %658 = vmatpush1.msra.mxu0 0.0
    %659 = vmatprep.subr.mxu0 0.0
    %660 = vmatpush1.msra.mxu0 0.0
    %661 = vmatprep.subr.mxu0 0.0
    %662 = vmatpush1.msra.mxu0 0.0
    %663 = vmatprep.subr.mxu0 0.0
    %664 = vmatpush1.msra.mxu0 0.0
    %665 = vmatprep.subr.mxu0 0.0
    %666 = vmatpush1.msra.mxu0 0.0
    %667 = vmatprep.subr.mxu0 0.0
    %668 = vmatpush1.msra.mxu0 0.0
    %669 = vmatprep.subr.mxu0 0.0
    %670 = vmatpush1.msra.mxu0 0.0
    %671 = vmatprep.subr.mxu0 0.0
    %672 = vmatpush1.msra.mxu0 0.0
    %673 = vmatprep.subr.mxu0 0.0
    %674 = vmatpush1.msra.mxu0 0.0
    %675 = vmatprep.subr.mxu0 0.0
    %676 = vmatpush1.msra.mxu0 0.0
    %677 = vmatprep.subr.mxu0 0.0
    %678 = vmatpush1.msra.mxu0 0.0
    %679 = vmatprep.subr.mxu0 0.0
    %680 = vmatpush1.msra.mxu0 0.0
    %681 = vmatprep.subr.mxu0 0.0
    %682 = vmatpush1.msra.mxu0 0.0
    %683 = vmatprep.subr.mxu0 0.0
    %684 = vmatpush1.msra.mxu0 0.0
    %685 = vmatprep.subr.mxu0 0.0
    %686 = vmatpush1.msra.mxu0 0.0
    %687 = vmatprep.subr.mxu0 0.0
    %688 = vmatpush1.msra.mxu0 0.0
    %689 = vmatprep.subr.mxu0 0.0
    %690 = vmatpush1.msra.mxu0 0.0
    %691 = vmatprep.subr.mxu0 0.0
    %692 = vmatpush1.msra.mxu0 0.0
    %693 = vmatprep.subr.mxu0 0.0
    %694 = vmatpush1.msra.mxu0 0.0
    %695 = vmatprep.subr.mxu0 0.0
    %696 = vmatpush1.msra.mxu0 0.0
    %697 = vmatprep.subr.mxu0 0.0
    %698 = vmatpush1.msra.mxu0 0.0
    %699 = vmatprep.subr.mxu0 0.0
    %700 = vmatpush1.msra.mxu0 0.0
    %701 = vmatprep.subr.mxu0 0.0
    %702 = vmatpush1.msra.mxu0 0.0
    %703 = vmatprep.subr.mxu0 0.0
    %704 = vmatpush1.msra.mxu0 0.0
    %705 = vmatprep.subr.mxu0 0.0
    %706 = vmatpush1.msra.mxu0 0.0
    %707 = vmatprep.subr.mxu0 0.0
    %708 = vmatpush1.msra.mxu0 0.0
    %709 = vmatprep.mubr.f32.mxu0 0.0
    %710 = vmatmul.mubr.f32.gmra.mrb[0].mxu0 %v643
    %v711 = vpop.f32.mrb[0].mxu0
    %v712 = vadd.f32 0.0, %v711
    %v713 = vpop.f32.mrb[0].mxu0
    %714 = vdwg.mxu0
    %v716 = vrot.slane %v712, 4
    %v718 = vadd.f32 %v364, %v716
    %v720 = vrot.slane %v639, 2
    %v723 = vrot.slane %v718, 2
    %v725 = vsel %vm534, %v720, %v723
    %v726 = vmul.f32 %v725, 0.5
    %v727 = vtanh.pop %v726
    %v728 = vmul.f32 %v727, 0.5
    %v729 = vadd.f32 %v728, 0.5
    %v730 = vtanh.pop %v725
    %v731 = vmul.f32 %v729, %v554
    %733 = vrot.lane.b32.xlu0 %v730, 64
    %v734 = vpop.permute.xlu0 %733
    %v736 = vmul.f32 %v729, %v734
    %738 = vrot.lane.b32.xlu0 %v736, 32
    %v739 = vpop.permute.xlu0 %738
    %v741 = vadd.f32 %v731, %v739
    %v742 = vtanh.pop %v741
    %744 = vrot.lane.b32.xlu0 %v742, 64
    %v745 = vpop.permute.xlu0 %744
    %v747 = vmul.f32 %v729, %v745
    %749 = vrot.lane.b32.xlu0 %v747, 32
    %v750 = vpop.permute.xlu0 %749
    %v751 = vsel %vm143, %v750, 0
    %753 = vmatprep.subr.mxu0 0.0
    %754 = vmatpush1.msra.mxu0 %v367
    %755 = vmatprep.subr.mxu0 0.0
    %756 = vmatpush1.msra.mxu0 %v368
    %757 = vmatprep.subr.mxu0 0.0
    %758 = vmatpush1.msra.mxu0 %v369
    %759 = vmatprep.subr.mxu0 0.0
    %760 = vmatpush1.msra.mxu0 %v370
    %761 = vmatprep.subr.mxu0 0.0
    %762 = vmatpush1.msra.mxu0 0.0
    %763 = vmatprep.subr.mxu0 0.0
    %764 = vmatpush1.msra.mxu0 0.0
    %765 = vmatprep.subr.mxu0 0.0
    %766 = vmatpush1.msra.mxu0 0.0
    %767 = vmatprep.subr.mxu0 0.0
    %768 = vmatpush1.msra.mxu0 0.0
    %769 = vmatprep.subr.mxu0 0.0
    %770 = vmatpush1.msra.mxu0 0.0
    %771 = vmatprep.subr.mxu0 0.0
    %772 = vmatpush1.msra.mxu0 0.0
    %773 = vmatprep.subr.mxu0 0.0
    %774 = vmatpush1.msra.mxu0 0.0
    %775 = vmatprep.subr.mxu0 0.0
    %776 = vmatpush1.msra.mxu0 0.0
    %777 = vmatprep.subr.mxu0 0.0
    %778 = vmatpush1.msra.mxu0 0.0
    %779 = vmatprep.subr.mxu0 0.0
    %780 = vmatpush1.msra.mxu0 0.0
    %781 = vmatprep.subr.mxu0 0.0
    %782 = vmatpush1.msra.mxu0 0.0
    %783 = vmatprep.subr.mxu0 0.0
    %784 = vmatpush1.msra.mxu0 0.0
    %785 = vmatprep.subr.mxu0 0.0
    %786 = vmatpush1.msra.mxu0 0.0
    %787 = vmatprep.subr.mxu0 0.0
    %788 = vmatpush1.msra.mxu0 0.0
    %789 = vmatprep.subr.mxu0 0.0
    %790 = vmatpush1.msra.mxu0 0.0
    %791 = vmatprep.subr.mxu0 0.0
    %792 = vmatpush1.msra.mxu0 0.0
    %793 = vmatprep.subr.mxu0 0.0
    %794 = vmatpush1.msra.mxu0 0.0
    %795 = vmatprep.subr.mxu0 0.0
    %796 = vmatpush1.msra.mxu0 0.0
    %797 = vmatprep.subr.mxu0 0.0
    %798 = vmatpush1.msra.mxu0 0.0
    %799 = vmatprep.subr.mxu0 0.0
    %800 = vmatpush1.msra.mxu0 0.0
    %801 = vmatprep.subr.mxu0 0.0
    %802 = vmatpush1.msra.mxu0 0.0
    %803 = vmatprep.subr.mxu0 0.0
    %804 = vmatpush1.msra.mxu0 0.0
    %805 = vmatprep.subr.mxu0 0.0
    %806 = vmatpush1.msra.mxu0 0.0
    %807 = vmatprep.subr.mxu0 0.0
    %808 = vmatpush1.msra.mxu0 0.0
    %809 = vmatprep.subr.mxu0 0.0
    %810 = vmatpush1.msra.mxu0 0.0
    %811 = vmatprep.subr.mxu0 0.0
    %812 = vmatpush1.msra.mxu0 0.0
    %813 = vmatprep.subr.mxu0 0.0
    %814 = vmatpush1.msra.mxu0 0.0
    %815 = vmatprep.subr.mxu0 0.0
    %816 = vmatpush1.msra.mxu0 0.0
    %817 = vmatprep.mubr.f32.mxu0 0.0
    %818 = vmatmul.mubr.f32.gmra.mrb[0].mxu0 %v751
    %v819 = vpop.f32.mrb[0].mxu0
    %v820 = vadd.f32 0.0, %v819
    %v821 = vpop.f32.mrb[0].mxu0
    %822 = vdwg.mxu0
    %v824 = vrot.slane %v820, 4
    %v826 = vadd.f32 %v273, %v824
    %v827 = vrot.slane %v747, 2
    %828 = vrot.lane.b32.xlu0 %v827, 32
    %v829 = vpop.permute.xlu0 %828
    %v830 = vsel %vm143, %v829, 0
    %832 = vmatprep.subr.mxu0 0.0
    %833 = vmatpush1.msra.mxu0 %v371
    %834 = vmatprep.subr.mxu0 0.0
    %835 = vmatpush1.msra.mxu0 %v372
    %836 = vmatprep.subr.mxu0 0.0
    %837 = vmatpush1.msra.mxu0 %v373
    %838 = vmatprep.subr.mxu0 0.0
    %839 = vmatpush1.msra.mxu0 %v374
    %840 = vmatprep.subr.mxu0 0.0
    %841 = vmatpush1.msra.mxu0 0.0
    %842 = vmatprep.subr.mxu0 0.0
    %843 = vmatpush1.msra.mxu0 0.0
    %844 = vmatprep.subr.mxu0 0.0
    %845 = vmatpush1.msra.mxu0 0.0
    %846 = vmatprep.subr.mxu0 0.0
    %847 = vmatpush1.msra.mxu0 0.0
    %848 = vmatprep.subr.mxu0 0.0
    %849 = vmatpush1.msra.mxu0 0.0
    %850 = vmatprep.subr.mxu0 0.0
    %851 = vmatpush1.msra.mxu0 0.0
    %852 = vmatprep.subr.mxu0 0.0
    %853 = vmatpush1.msra.mxu0 0.0
    %854 = vmatprep.subr.mxu0 0.0
    %855 = vmatpush1.msra.mxu0 0.0
    %856 = vmatprep.subr.mxu0 0.0
    %857 = vmatpush1.msra.mxu0 0.0
    %858 = vmatprep.subr.mxu0 0.0
    %859 = vmatpush1.msra.mxu0 0.0
    %860 = vmatprep.subr.mxu0 0.0
    %861 = vmatpush1.msra.mxu0 0.0
    %862 = vmatprep.subr.mxu0 0.0
    %863 = vmatpush1.msra.mxu0 0.0
    %864 = vmatprep.subr.mxu0 0.0
    %865 = vmatpush1.msra.mxu0 0.0
    %866 = vmatprep.subr.mxu0 0.0
    %867 = vmatpush1.msra.mxu0 0.0
    %868 = vmatprep.subr.mxu0 0.0
    %869 = vmatpush1.msra.mxu0 0.0
    %870 = vmatprep.subr.mxu0 0.0
    %871 = vmatpush1.msra.mxu0 0.0
    %872 = vmatprep.subr.mxu0 0.0
    %873 = vmatpush1.msra.mxu0 0.0
    %874 = vmatprep.subr.mxu0 0.0
    %875 = vmatpush1.msra.mxu0 0.0
    %876 = vmatprep.subr.mxu0 0.0
    %877 = vmatpush1.msra.mxu0 0.0
    %878 = vmatprep.subr.mxu0 0.0
    %879 = vmatpush1.msra.mxu0 0.0
    %880 = vmatprep.subr.mxu0 0.0
    %881 = vmatpush1.msra.mxu0 0.0
    %882 = vmatprep.subr.mxu0 0.0
    %883 = vmatpush1.msra.mxu0 0.0
    %884 = vmatprep.subr.mxu0 0.0
    %885 = vmatpush1.msra.mxu0 0.0
    %886 = vmatprep.subr.mxu0 0.0
    %887 = vmatpush1.msra.mxu0 0.0
    %888 = vmatprep.subr.mxu0 0.0
    %889 = vmatpush1.msra.mxu0 0.0
    %890 = vmatprep.subr.mxu0 0.0
    %891 = vmatpush1.msra.mxu0 0.0
    %892 = vmatprep.subr.mxu0 0.0
    %893 = vmatpush1.msra.mxu0 0.0
    %894 = vmatprep.subr.mxu0 0.0
    %895 = vmatpush1.msra.mxu0 0.0
    %896 = vmatprep.mubr.f32.mxu0 0.0
    %897 = vmatmul.mubr.f32.gmra.mrb[0].mxu0 %v830
    %v898 = vpop.f32.mrb[0].mxu0
    %v899 = vadd.f32 0.0, %v898
    %v900 = vpop.f32.mrb[0].mxu0
    %901 = vdwg.mxu0
    %v903 = vrot.slane %v899, 6
    %v905 = vadd.f32 %v364, %v903
    %v907 = vrot.slane %v826, 4
    %v909 = vsel %vm534, %v907, %v905
    %v910 = vmul.f32 %v909, 0.5
    %v911 = vtanh.pop %v910
    %v912 = vmul.f32 %v911, 0.5
    %v913 = vadd.f32 %v912, 0.5
    %v914 = vtanh.pop %v909
    %v915 = vmul.f32 %v913, %v741
    %917 = vrot.lane.b32.xlu0 %v914, 64
    %v918 = vpop.permute.xlu0 %917
    %v920 = vmul.f32 %v913, %v918
    %922 = vrot.lane.b32.xlu0 %v920, 32
    %v923 = vpop.permute.xlu0 %922
    %v925 = vadd.f32 %v915, %v923
    %v926 = vtanh.pop %v925
    %928 = vrot.lane.b32.xlu0 %v926, 64
    %v929 = vpop.permute.xlu0 %928
    %v931 = vmul.f32 %v913, %v929
    %933 = vrot.lane.b32.xlu0 %v931, 32
    %v934 = vpop.permute.xlu0 %933
    %v935 = vsel %vm143, %v934, 0
    %937 = vmatprep.subr.mxu0 0.0
    %938 = vmatpush1.msra.mxu0 %v367
    %939 = vmatprep.subr.mxu0 0.0
    %940 = vmatpush1.msra.mxu0 %v368
    %941 = vmatprep.subr.mxu0 0.0
    %942 = vmatpush1.msra.mxu0 %v369
    %943 = vmatprep.subr.mxu0 0.0
    %944 = vmatpush1.msra.mxu0 %v370
    %945 = vmatprep.subr.mxu0 0.0
    %946 = vmatpush1.msra.mxu0 0.0
    %947 = vmatprep.subr.mxu0 0.0
    %948 = vmatpush1.msra.mxu0 0.0
    %949 = vmatprep.subr.mxu0 0.0
    %950 = vmatpush1.msra.mxu0 0.0
    %951 = vmatprep.subr.mxu0 0.0
    %952 = vmatpush1.msra.mxu0 0.0
    %953 = vmatprep.subr.mxu0 0.0
    %954 = vmatpush1.msra.mxu0 0.0
    %955 = vmatprep.subr.mxu0 0.0
    %956 = vmatpush1.msra.mxu0 0.0
    %957 = vmatprep.subr.mxu0 0.0
    %958 = vmatpush1.msra.mxu0 0.0
    %959 = vmatprep.subr.mxu0 0.0
    %960 = vmatpush1.msra.mxu0 0.0
    %961 = vmatprep.subr.mxu0 0.0
    %962 = vmatpush1.msra.mxu0 0.0
    %963 = vmatprep.subr.mxu0 0.0
    %964 = vmatpush1.msra.mxu0 0.0
    %965 = vmatprep.subr.mxu0 0.0
    %966 = vmatpush1.msra.mxu0 0.0
    %967 = vmatprep.subr.mxu0 0.0
    %968 = vmatpush1.msra.mxu0 0.0
    %969 = vmatprep.subr.mxu0 0.0
    %970 = vmatpush1.msra.mxu0 0.0
    %971 = vmatprep.subr.mxu0 0.0
    %972 = vmatpush1.msra.mxu0 0.0
    %973 = vmatprep.subr.mxu0 0.0
    %974 = vmatpush1.msra.mxu0 0.0
    %975 = vmatprep.subr.mxu0 0.0
    %976 = vmatpush1.msra.mxu0 0.0
    %977 = vmatprep.subr.mxu0 0.0
    %978 = vmatpush1.msra.mxu0 0.0
    %979 = vmatprep.subr.mxu0 0.0
    %980 = vmatpush1.msra.mxu0 0.0
    %981 = vmatprep.subr.mxu0 0.0
    %982 = vmatpush1.msra.mxu0 0.0
    %983 = vmatprep.subr.mxu0 0.0
    %984 = vmatpush1.msra.mxu0 0.0
    %985 = vmatprep.subr.mxu0 0.0
    %986 = vmatpush1.msra.mxu0 0.0
    %987 = vmatprep.subr.mxu0 0.0
    %988 = vmatpush1.msra.mxu0 0.0
    %989 = vmatprep.subr.mxu0 0.0
    %990 = vmatpush1.msra.mxu0 0.0
    %991 = vmatprep.subr.mxu0 0.0
    %992 = vmatpush1.msra.mxu0 0.0
    %993 = vmatprep.subr.mxu0 0.0
    %994 = vmatpush1.msra.mxu0 0.0
    %995 = vmatprep.subr.mxu0 0.0
    %996 = vmatpush1.msra.mxu0 0.0
    %997 = vmatprep.subr.mxu0 0.0
    %998 = vmatpush1.msra.mxu0 0.0
    %999 = vmatprep.subr.mxu0 0.0
    %1000 = vmatpush1.msra.mxu0 0.0
    %1001 = vmatprep.mubr.f32.mxu0 0.0
    %1002 = vmatmul.mubr.f32.gmra.mrb[0].mxu0 %v935
    %v1003 = vpop.f32.mrb[0].mxu0
    %v1004 = vadd.f32 0.0, %v1003
    %v1005 = vpop.f32.mrb[0].mxu0
    %1006 = vdwg.mxu0
    %v1008 = vrot.slane %v1004, 2
    %v1010 = vadd.f32 %v273, %v1008
    %v1011 = vrot.slane %v931, 2
    %1012 = vrot.lane.b32.xlu0 %v1011, 32
    %v1013 = vpop.permute.xlu0 %1012
    %v1014 = vsel %vm143, %v1013, 0
    %1016 = vmatprep.subr.mxu0 0.0
    %1017 = vmatpush1.msra.mxu0 %v371
    %1018 = vmatprep.subr.mxu0 0.0
    %1019 = vmatpush1.msra.mxu0 %v372
    %1020 = vmatprep.subr.mxu0 0.0
    %1021 = vmatpush1.msra.mxu0 %v373
    %1022 = vmatprep.subr.mxu0 0.0
    %1023 = vmatpush1.msra.mxu0 %v374
    %1024 = vmatprep.subr.mxu0 0.0
    %1025 = vmatpush1.msra.mxu0 0.0
    %1026 = vmatprep.subr.mxu0 0.0
    %1027 = vmatpush1.msra.mxu0 0.0
    %1028 = vmatprep.subr.mxu0 0.0
    %1029 = vmatpush1.msra.mxu0 0.0
    %1030 = vmatprep.subr.mxu0 0.0
    %1031 = vmatpush1.msra.mxu0 0.0
    %1032 = vmatprep.subr.mxu0 0.0
    %1033 = vmatpush1.msra.mxu0 0.0
    %1034 = vmatprep.subr.mxu0 0.0
    %1035 = vmatpush1.msra.mxu0 0.0
    %1036 = vmatprep.subr.mxu0 0.0
    %1037 = vmatpush1.msra.mxu0 0.0
    %1038 = vmatprep.subr.mxu0 0.0
    %1039 = vmatpush1.msra.mxu0 0.0
    %1040 = vmatprep.subr.mxu0 0.0
    %1041 = vmatpush1.msra.mxu0 0.0
    %1042 = vmatprep.subr.mxu0 0.0
    %1043 = vmatpush1.msra.mxu0 0.0
    %1044 = vmatprep.subr.mxu0 0.0
    %1045 = vmatpush1.msra.mxu0 0.0
    %1046 = vmatprep.subr.mxu0 0.0
    %1047 = vmatpush1.msra.mxu0 0.0
    %1048 = vmatprep.subr.mxu0 0.0
    %1049 = vmatpush1.msra.mxu0 0.0
    %1050 = vmatprep.subr.mxu0 0.0
    %1051 = vmatpush1.msra.mxu0 0.0
    %1052 = vmatprep.subr.mxu0 0.0
    %1053 = vmatpush1.msra.mxu0 0.0
    %1054 = vmatprep.subr.mxu0 0.0
    %1055 = vmatpush1.msra.mxu0 0.0
    %1056 = vmatprep.subr.mxu0 0.0
    %1057 = vmatpush1.msra.mxu0 0.0
    %1058 = vmatprep.subr.mxu0 0.0
    %1059 = vmatpush1.msra.mxu0 0.0
    %1060 = vmatprep.subr.mxu0 0.0
    %1061 = vmatpush1.msra.mxu0 0.0
    %1062 = vmatprep.subr.mxu0 0.0
    %1063 = vmatpush1.msra.mxu0 0.0
    %1064 = vmatprep.subr.mxu0 0.0
    %1065 = vmatpush1.msra.mxu0 0.0
    %1066 = vmatprep.subr.mxu0 0.0
    %1067 = vmatpush1.msra.mxu0 0.0
    %1068 = vmatprep.subr.mxu0 0.0
    %1069 = vmatpush1.msra.mxu0 0.0
    %1070 = vmatprep.subr.mxu0 0.0
    %1071 = vmatpush1.msra.mxu0 0.0
    %1072 = vmatprep.subr.mxu0 0.0
    %1073 = vmatpush1.msra.mxu0 0.0
    %1074 = vmatprep.subr.mxu0 0.0
    %1075 = vmatpush1.msra.mxu0 0.0
    %1076 = vmatprep.subr.mxu0 0.0
    %1077 = vmatpush1.msra.mxu0 0.0
    %1078 = vmatprep.subr.mxu0 0.0
    %1079 = vmatpush1.msra.mxu0 0.0
    %1080 = vmatprep.mubr.f32.mxu0 0.0
    %1081 = vmatmul.mubr.f32.gmra.mrb[0].mxu0 %v1014
    %v1082 = vpop.f32.mrb[0].mxu0
    %v1083 = vadd.f32 0.0, %v1082
    %v1084 = vpop.f32.mrb[0].mxu0
    %1085 = vdwg.mxu0
    %v1086 = vadd.f32 %v364, %v1083
    %v1088 = vrot.slane %v1010, 6
    %v1091 = vrot.slane %v1086, 6
    %v1093 = vsel %vm534, %v1088, %v1091
    %v1094 = vmul.f32 %v1093, 0.5
    %v1095 = vtanh.pop %v1094
    %v1096 = vmul.f32 %v1095, 0.5
    %v1097 = vadd.f32 %v1096, 0.5
    %v1098 = vtanh.pop %v1093
    %v1099 = vmul.f32 %v1097, %v925
    %1101 = vrot.lane.b32.xlu0 %v1098, 64
    %v1102 = vpop.permute.xlu0 %1101
    %v1104 = vmul.f32 %v1097, %v1102
    %1106 = vrot.lane.b32.xlu0 %v1104, 32
    %v1107 = vpop.permute.xlu0 %1106
    %v1109 = vadd.f32 %v1099, %v1107
    %v1110 = vtanh.pop %v1109
    %1112 = vrot.lane.b32.xlu0 %v1110, 64
    %v1113 = vpop.permute.xlu0 %1112
    %v1115 = vmul.f32 %v1097, %v1113
    %1117 = vrot.lane.b32.xlu0 %v1115, 32
    %v1118 = vpop.permute.xlu0 %1117
    %v1119 = vsel %vm143, %v1118, 0
    %1121 = vmatprep.subr.mxu0 0.0
    %1122 = vmatpush1.msra.mxu0 %v367
    %1123 = vmatprep.subr.mxu0 0.0
    %1124 = vmatpush1.msra.mxu0 %v368
    %1125 = vmatprep.subr.mxu0 0.0
    %1126 = vmatpush1.msra.mxu0 %v369
    %1127 = vmatprep.subr.mxu0 0.0
    %1128 = vmatpush1.msra.mxu0 %v370
    %1129 = vmatprep.subr.mxu0 0.0
    %1130 = vmatpush1.msra.mxu0 0.0
    %1131 = vmatprep.subr.mxu0 0.0
    %1132 = vmatpush1.msra.mxu0 0.0
    %1133 = vmatprep.subr.mxu0 0.0
    %1134 = vmatpush1.msra.mxu0 0.0
    %1135 = vmatprep.subr.mxu0 0.0
    %1136 = vmatpush1.msra.mxu0 0.0
    %1137 = vmatprep.subr.mxu0 0.0
    %1138 = vmatpush1.msra.mxu0 0.0
    %1139 = vmatprep.subr.mxu0 0.0
    %1140 = vmatpush1.msra.mxu0 0.0
    %1141 = vmatprep.subr.mxu0 0.0
    %1142 = vmatpush1.msra.mxu0 0.0
    %1143 = vmatprep.subr.mxu0 0.0
    %1144 = vmatpush1.msra.mxu0 0.0
    %1145 = vmatprep.subr.mxu0 0.0
    %1146 = vmatpush1.msra.mxu0 0.0
    %1147 = vmatprep.subr.mxu0 0.0
    %1148 = vmatpush1.msra.mxu0 0.0
    %1149 = vmatprep.subr.mxu0 0.0
    %1150 = vmatpush1.msra.mxu0 0.0
    %1151 = vmatprep.subr.mxu0 0.0
    %1152 = vmatpush1.msra.mxu0 0.0
    %1153 = vmatprep.subr.mxu0 0.0
    %1154 = vmatpush1.msra.mxu0 0.0
    %1155 = vmatprep.subr.mxu0 0.0
    %1156 = vmatpush1.msra.mxu0 0.0
    %1157 = vmatprep.subr.mxu0 0.0
    %1158 = vmatpush1.msra.mxu0 0.0
    %1159 = vmatprep.subr.mxu0 0.0
    %1160 = vmatpush1.msra.mxu0 0.0
    %1161 = vmatprep.subr.mxu0 0.0
    %1162 = vmatpush1.msra.mxu0 0.0
    %1163 = vmatprep.subr.mxu0 0.0
    %1164 = vmatpush1.msra.mxu0 0.0
    %1165 = vmatprep.subr.mxu0 0.0
    %1166 = vmatpush1.msra.mxu0 0.0
    %1167 = vmatprep.subr.mxu0 0.0
    %1168 = vmatpush1.msra.mxu0 0.0
    %1169 = vmatprep.subr.mxu0 0.0
    %1170 = vmatpush1.msra.mxu0 0.0
    %1171 = vmatprep.subr.mxu0 0.0
    %1172 = vmatpush1.msra.mxu0 0.0
    %1173 = vmatprep.subr.mxu0 0.0
    %1174 = vmatpush1.msra.mxu0 0.0
    %1175 = vmatprep.subr.mxu0 0.0
    %1176 = vmatpush1.msra.mxu0 0.0
    %1177 = vmatprep.subr.mxu0 0.0
    %1178 = vmatpush1.msra.mxu0 0.0
    %1179 = vmatprep.subr.mxu0 0.0
    %1180 = vmatpush1.msra.mxu0 0.0
    %1181 = vmatprep.subr.mxu0 0.0
    %1182 = vmatpush1.msra.mxu0 0.0
    %1183 = vmatprep.subr.mxu0 0.0
    %1184 = vmatpush1.msra.mxu0 0.0
    %1185 = vmatprep.mubr.f32.mxu0 0.0
    %1186 = vmatmul.mubr.f32.gmra.mrb[0].mxu0 %v1119
    %v1187 = vpop.f32.mrb[0].mxu0
    %v1188 = vadd.f32 0.0, %v1187
    %v1189 = vpop.f32.mrb[0].mxu0
    %1190 = vdwg.mxu0
    %v1191 = vadd.f32 %v278, %v1188
    %v1192 = vrot.slane %v1115, 2
    %1193 = vrot.lane.b32.xlu0 %v1192, 32
    %v1194 = vpop.permute.xlu0 %1193
    %v1195 = vsel %vm143, %v1194, 0
    %1197 = vmatprep.subr.mxu0 0.0
    %1198 = vmatpush1.msra.mxu0 %v371
    %1199 = vmatprep.subr.mxu0 0.0
    %1200 = vmatpush1.msra.mxu0 %v372
    %1201 = vmatprep.subr.mxu0 0.0
    %1202 = vmatpush1.msra.mxu0 %v373
    %1203 = vmatprep.subr.mxu0 0.0
    %1204 = vmatpush1.msra.mxu0 %v374
    %1205 = vmatprep.subr.mxu0 0.0
    %1206 = vmatpush1.msra.mxu0 0.0
    %1207 = vmatprep.subr.mxu0 0.0
    %1208 = vmatpush1.msra.mxu0 0.0
    %1209 = vmatprep.subr.mxu0 0.0
    %1210 = vmatpush1.msra.mxu0 0.0
    %1211 = vmatprep.subr.mxu0 0.0
    %1212 = vmatpush1.msra.mxu0 0.0
    %1213 = vmatprep.subr.mxu0 0.0
    %1214 = vmatpush1.msra.mxu0 0.0
    %1215 = vmatprep.subr.mxu0 0.0
    %1216 = vmatpush1.msra.mxu0 0.0
    %1217 = vmatprep.subr.mxu0 0.0
    %1218 = vmatpush1.msra.mxu0 0.0
    %1219 = vmatprep.subr.mxu0 0.0
    %1220 = vmatpush1.msra.mxu0 0.0
    %1221 = vmatprep.subr.mxu0 0.0
    %1222 = vmatpush1.msra.mxu0 0.0
    %1223 = vmatprep.subr.mxu0 0.0
    %1224 = vmatpush1.msra.mxu0 0.0
    %1225 = vmatprep.subr.mxu0 0.0
    %1226 = vmatpush1.msra.mxu0 0.0
    %1227 = vmatprep.subr.mxu0 0.0
    %1228 = vmatpush1.msra.mxu0 0.0
    %1229 = vmatprep.subr.mxu0 0.0
    %1230 = vmatpush1.msra.mxu0 0.0
    %1231 = vmatprep.subr.mxu0 0.0
    %1232 = vmatpush1.msra.mxu0 0.0
    %1233 = vmatprep.subr.mxu0 0.0
    %1234 = vmatpush1.msra.mxu0 0.0
    %1235 = vmatprep.subr.mxu0 0.0
    %1236 = vmatpush1.msra.mxu0 0.0
    %1237 = vmatprep.subr.mxu0 0.0
    %1238 = vmatpush1.msra.mxu0 0.0
    %1239 = vmatprep.subr.mxu0 0.0
    %1240 = vmatpush1.msra.mxu0 0.0
    %1241 = vmatprep.subr.mxu0 0.0
    %1242 = vmatpush1.msra.mxu0 0.0
    %1243 = vmatprep.subr.mxu0 0.0
    %1244 = vmatpush1.msra.mxu0 0.0
    %1245 = vmatprep.subr.mxu0 0.0
    %1246 = vmatpush1.msra.mxu0 0.0
    %1247 = vmatprep.subr.mxu0 0.0
    %1248 = vmatpush1.msra.mxu0 0.0
    %1249 = vmatprep.subr.mxu0 0.0
    %1250 = vmatpush1.msra.mxu0 0.0
    %1251 = vmatprep.subr.mxu0 0.0
    %1252 = vmatpush1.msra.mxu0 0.0
    %1253 = vmatprep.subr.mxu0 0.0
    %1254 = vmatpush1.msra.mxu0 0.0
    %1255 = vmatprep.subr.mxu0 0.0
    %1256 = vmatpush1.msra.mxu0 0.0
    %1257 = vmatprep.subr.mxu0 0.0
    %1258 = vmatpush1.msra.mxu0 0.0
    %1259 = vmatprep.subr.mxu0 0.0
    %1260 = vmatpush1.msra.mxu0 0.0
    %1261 = vmatprep.mubr.f32.mxu0 0.0
    %1262 = vmatmul.mubr.f32.gmra.mrb[0].mxu0 %v1195
    %v1263 = vpop.f32.mrb[0].mxu0
    %v1264 = vadd.f32 0.0, %v1263
    %v1265 = vpop.f32.mrb[0].mxu0
    %1266 = vdwg.mxu0
    %v1268 = vrot.slane %v1264, 2
    %v1270 = vadd.f32 %v359, %v1268
    %v1272 = vrot.slane %v1270, 4
    %v1274 = vsel %vm534, %v1191, %v1272
    %v1275 = vmul.f32 %v1274, 0.5
    %v1276 = vtanh.pop %v1275
    %v1277 = vmul.f32 %v1276, 0.5
    %v1278 = vadd.f32 %v1277, 0.5
    %v1279 = vtanh.pop %v1274
    %v1280 = vmul.f32 %v1278, %v1109
    %1282 = vrot.lane.b32.xlu0 %v1279, 64
    %v1283 = vpop.permute.xlu0 %1282
    %v1285 = vmul.f32 %v1278, %v1283
    %1287 = vrot.lane.b32.xlu0 %v1285, 32
    %v1288 = vpop.permute.xlu0 %1287
    %v1290 = vadd.f32 %v1280, %v1288
    %v1291 = vtanh.pop %v1290
    %1293 = vrot.lane.b32.xlu0 %v1291, 64
    %v1294 = vpop.permute.xlu0 %1293
    %v1296 = vmul.f32 %v1278, %v1294
    %1298 = vrot.lane.b32.xlu0 %v1296, 32
    %v1299 = vpop.permute.xlu0 %1298
    %v1300 = vsel %vm143, %v1299, 0
    %1302 = vmatprep.subr.mxu0 0.0
    %1303 = vmatpush1.msra.mxu0 %v367
    %1304 = vmatprep.subr.mxu0 0.0
    %1305 = vmatpush1.msra.mxu0 %v368
    %1306 = vmatprep.subr.mxu0 0.0
    %1307 = vmatpush1.msra.mxu0 %v369
    %1308 = vmatprep.subr.mxu0 0.0
    %1309 = vmatpush1.msra.mxu0 %v370
    %1310 = vmatprep.subr.mxu0 0.0
    %1311 = vmatpush1.msra.mxu0 0.0
    %1312 = vmatprep.subr.mxu0 0.0
    %1313 = vmatpush1.msra.mxu0 0.0
    %1314 = vmatprep.subr.mxu0 0.0
    %1315 = vmatpush1.msra.mxu0 0.0
    %1316 = vmatprep.subr.mxu0 0.0
    %1317 = vmatpush1.msra.mxu0 0.0
    %1318 = vmatprep.subr.mxu0 0.0
    %1319 = vmatpush1.msra.mxu0 0.0
    %1320 = vmatprep.subr.mxu0 0.0
    %1321 = vmatpush1.msra.mxu0 0.0
    %1322 = vmatprep.subr.mxu0 0.0
    %1323 = vmatpush1.msra.mxu0 0.0
    %1324 = vmatprep.subr.mxu0 0.0
    %1325 = vmatpush1.msra.mxu0 0.0
    %1326 = vmatprep.subr.mxu0 0.0
    %1327 = vmatpush1.msra.mxu0 0.0
    %1328 = vmatprep.subr.mxu0 0.0
    %1329 = vmatpush1.msra.mxu0 0.0
    %1330 = vmatprep.subr.mxu0 0.0
    %1331 = vmatpush1.msra.mxu0 0.0
    %1332 = vmatprep.subr.mxu0 0.0
    %1333 = vmatpush1.msra.mxu0 0.0
    %1334 = vmatprep.subr.mxu0 0.0
    %1335 = vmatpush1.msra.mxu0 0.0
    %1336 = vmatprep.subr.mxu0 0.0
    %1337 = vmatpush1.msra.mxu0 0.0
    %1338 = vmatprep.subr.mxu0 0.0
    %1339 = vmatpush1.msra.mxu0 0.0
    %1340 = vmatprep.subr.mxu0 0.0
    %1341 = vmatpush1.msra.mxu0 0.0
    %1342 = vmatprep.subr.mxu0 0.0
    %1343 = vmatpush1.msra.mxu0 0.0
    %1344 = vmatprep.subr.mxu0 0.0
    %1345 = vmatpush1.msra.mxu0 0.0
    %1346 = vmatprep.subr.mxu0 0.0
    %1347 = vmatpush1.msra.mxu0 0.0
    %1348 = vmatprep.subr.mxu0 0.0
    %1349 = vmatpush1.msra.mxu0 0.0
    %1350 = vmatprep.subr.mxu0 0.0
    %1351 = vmatpush1.msra.mxu0 0.0
    %1352 = vmatprep.subr.mxu0 0.0
    %1353 = vmatpush1.msra.mxu0 0.0
    %1354 = vmatprep.subr.mxu0 0.0
    %1355 = vmatpush1.msra.mxu0 0.0
    %1356 = vmatprep.subr.mxu0 0.0
    %1357 = vmatpush1.msra.mxu0 0.0
    %1358 = vmatprep.subr.mxu0 0.0
    %1359 = vmatpush1.msra.mxu0 0.0
    %1360 = vmatprep.subr.mxu0 0.0
    %1361 = vmatpush1.msra.mxu0 0.0
    %1362 = vmatprep.subr.mxu0 0.0
    %1363 = vmatpush1.msra.mxu0 0.0
    %1364 = vmatprep.subr.mxu0 0.0
    %1365 = vmatpush1.msra.mxu0 0.0
    %1366 = vmatprep.mubr.f32.mxu0 0.0
    %1367 = vmatmul.mubr.f32.gmra.mrb[0].mxu0 %v1300
    %v1368 = vpop.f32.mrb[0].mxu0
    %v1369 = vadd.f32 0.0, %v1368
    %v1370 = vpop.f32.mrb[0].mxu0
    %1371 = vdwg.mxu0
    %v1373 = vrot.slane %v1369, 6
    %v1375 = vadd.f32 %v278, %v1373
    %v1376 = vrot.slane %v1296, 2
    %1377 = vrot.lane.b32.xlu0 %v1376, 32
    %v1378 = vpop.permute.xlu0 %1377
    %v1379 = vsel %vm143, %v1378, 0
    %1381 = vmatprep.subr.mxu0 0.0
    %1382 = vmatpush1.msra.mxu0 %v371
    %1383 = vmatprep.subr.mxu0 0.0
    %1384 = vmatpush1.msra.mxu0 %v372
    %1385 = vmatprep.subr.mxu0 0.0
    %1386 = vmatpush1.msra.mxu0 %v373
    %1387 = vmatprep.subr.mxu0 0.0
    %1388 = vmatpush1.msra.mxu0 %v374
    %1389 = vmatprep.subr.mxu0 0.0
    %1390 = vmatpush1.msra.mxu0 0.0
    %1391 = vmatprep.subr.mxu0 0.0
    %1392 = vmatpush1.msra.mxu0 0.0
    %1393 = vmatprep.subr.mxu0 0.0
    %1394 = vmatpush1.msra.mxu0 0.0
    %1395 = vmatprep.subr.mxu0 0.0
    %1396 = vmatpush1.msra.mxu0 0.0
    %1397 = vmatprep.subr.mxu0 0.0
    %1398 = vmatpush1.msra.mxu0 0.0
    %1399 = vmatprep.subr.mxu0 0.0
    %1400 = vmatpush1.msra.mxu0 0.0
    %1401 = vmatprep.subr.mxu0 0.0
    %1402 = vmatpush1.msra.mxu0 0.0
    %1403 = vmatprep.subr.mxu0 0.0
    %1404 = vmatpush1.msra.mxu0 0.0
    %1405 = vmatprep.subr.mxu0 0.0
    %1406 = vmatpush1.msra.mxu0 0.0
    %1407 = vmatprep.subr.mxu0 0.0
    %1408 = vmatpush1.msra.mxu0 0.0
    %1409 = vmatprep.subr.mxu0 0.0
    %1410 = vmatpush1.msra.mxu0 0.0
    %1411 = vmatprep.subr.mxu0 0.0
    %1412 = vmatpush1.msra.mxu0 0.0
    %1413 = vmatprep.subr.mxu0 0.0
    %1414 = vmatpush1.msra.mxu0 0.0
    %1415 = vmatprep.subr.mxu0 0.0
    %1416 = vmatpush1.msra.mxu0 0.0
    %1417 = vmatprep.subr.mxu0 0.0
    %1418 = vmatpush1.msra.mxu0 0.0
    %1419 = vmatprep.subr.mxu0 0.0
    %1420 = vmatpush1.msra.mxu0 0.0
    %1421 = vmatprep.subr.mxu0 0.0
    %1422 = vmatpush1.msra.mxu0 0.0
    %1423 = vmatprep.subr.mxu0 0.0
    %1424 = vmatpush1.msra.mxu0 0.0
    %1425 = vmatprep.subr.mxu0 0.0
    %1426 = vmatpush1.msra.mxu0 0.0
    %1427 = vmatprep.subr.mxu0 0.0
    %1428 = vmatpush1.msra.mxu0 0.0
    %1429 = vmatprep.subr.mxu0 0.0
    %1430 = vmatpush1.msra.mxu0 0.0
    %1431 = vmatprep.subr.mxu0 0.0
    %1432 = vmatpush1.msra.mxu0 0.0
    %1433 = vmatprep.subr.mxu0 0.0
    %1434 = vmatpush1.msra.mxu0 0.0
    %1435 = vmatprep.subr.mxu0 0.0
    %1436 = vmatpush1.msra.mxu0 0.0
    %1437 = vmatprep.subr.mxu0 0.0
    %1438 = vmatpush1.msra.mxu0 0.0
    %1439 = vmatprep.subr.mxu0 0.0
    %1440 = vmatpush1.msra.mxu0 0.0
    %1441 = vmatprep.subr.mxu0 0.0
    %1442 = vmatpush1.msra.mxu0 0.0
    %1443 = vmatprep.subr.mxu0 0.0
    %1444 = vmatpush1.msra.mxu0 0.0
    %1445 = vmatprep.mubr.f32.mxu0 0.0
    %1446 = vmatmul.mubr.f32.gmra.mrb[0].mxu0 %v1379
    %v1447 = vpop.f32.mrb[0].mxu0
    %v1448 = vadd.f32 0.0, %v1447
    %v1449 = vpop.f32.mrb[0].mxu0
    %1450 = vdwg.mxu0
    %v1452 = vrot.slane %v1448, 4
    %v1454 = vadd.f32 %v359, %v1452
    %v1456 = vrot.slane %v1375, 2
    %v1459 = vrot.slane %v1454, 2
    %v1461 = vsel %vm534, %v1456, %v1459
    %v1462 = vmul.f32 %v1461, 0.5
    %v1463 = vtanh.pop %v1462
    %v1464 = vmul.f32 %v1463, 0.5
    %v1465 = vadd.f32 %v1464, 0.5
    %v1466 = vtanh.pop %v1461
    %v1467 = vmul.f32 %v1465, %v1290
    %1469 = vrot.lane.b32.xlu0 %v1466, 64
    %v1470 = vpop.permute.xlu0 %1469
    %v1472 = vmul.f32 %v1465, %v1470
    %1474 = vrot.lane.b32.xlu0 %v1472, 32
    %v1475 = vpop.permute.xlu0 %1474
    %v1477 = vadd.f32 %v1467, %v1475
    %v1478 = vtanh.pop %v1477
    %1480 = vrot.lane.b32.xlu0 %v1478, 64
    %v1481 = vpop.permute.xlu0 %1480
    %v1483 = vmul.f32 %v1465, %v1481
    %1485 = vrot.lane.b32.xlu0 %v1483, 32
    %v1486 = vpop.permute.xlu0 %1485
    %v1487 = vsel %vm143, %v1486, 0
    %1489 = vmatprep.subr.mxu0 0.0
    %1490 = vmatpush1.msra.mxu0 %v367
    %1491 = vmatprep.subr.mxu0 0.0
    %1492 = vmatpush1.msra.mxu0 %v368
    %1493 = vmatprep.subr.mxu0 0.0
    %1494 = vmatpush1.msra.mxu0 %v369
    %1495 = vmatprep.subr.mxu0 0.0
    %1496 = vmatpush1.msra.mxu0 %v370
    %1497 = vmatprep.subr.mxu0 0.0
    %1498 = vmatpush1.msra.mxu0 0.0
    %1499 = vmatprep.subr.mxu0 0.0
    %1500 = vmatpush1.msra.mxu0 0.0
    %1501 = vmatprep.subr.mxu0 0.0
    %1502 = vmatpush1.msra.mxu0 0.0
    %1503 = vmatprep.subr.mxu0 0.0
    %1504 = vmatpush1.msra.mxu0 0.0
    %1505 = vmatprep.subr.mxu0 0.0
    %1506 = vmatpush1.msra.mxu0 0.0
    %1507 = vmatprep.subr.mxu0 0.0
    %1508 = vmatpush1.msra.mxu0 0.0
    %1509 = vmatprep.subr.mxu0 0.0
    %1510 = vmatpush1.msra.mxu0 0.0
    %1511 = vmatprep.subr.mxu0 0.0
    %1512 = vmatpush1.msra.mxu0 0.0
    %1513 = vmatprep.subr.mxu0 0.0
    %1514 = vmatpush1.msra.mxu0 0.0
    %1515 = vmatprep.subr.mxu0 0.0
    %1516 = vmatpush1.msra.mxu0 0.0
    %1517 = vmatprep.subr.mxu0 0.0
    %1518 = vmatpush1.msra.mxu0 0.0
    %1519 = vmatprep.subr.mxu0 0.0
    %1520 = vmatpush1.msra.mxu0 0.0
    %1521 = vmatprep.subr.mxu0 0.0
    %1522 = vmatpush1.msra.mxu0 0.0
    %1523 = vmatprep.subr.mxu0 0.0
    %1524 = vmatpush1.msra.mxu0 0.0
    %1525 = vmatprep.subr.mxu0 0.0
    %1526 = vmatpush1.msra.mxu0 0.0
    %1527 = vmatprep.subr.mxu0 0.0
    %1528 = vmatpush1.msra.mxu0 0.0
    %1529 = vmatprep.subr.mxu0 0.0
    %1530 = vmatpush1.msra.mxu0 0.0
    %1531 = vmatprep.subr.mxu0 0.0
    %1532 = vmatpush1.msra.mxu0 0.0
    %1533 = vmatprep.subr.mxu0 0.0
    %1534 = vmatpush1.msra.mxu0 0.0
    %1535 = vmatprep.subr.mxu0 0.0
    %1536 = vmatpush1.msra.mxu0 0.0
    %1537 = vmatprep.subr.mxu0 0.0
    %1538 = vmatpush1.msra.mxu0 0.0
    %1539 = vmatprep.subr.mxu0 0.0
    %1540 = vmatpush1.msra.mxu0 0.0
    %1541 = vmatprep.subr.mxu0 0.0
    %1542 = vmatpush1.msra.mxu0 0.0
    %1543 = vmatprep.subr.mxu0 0.0
    %1544 = vmatpush1.msra.mxu0 0.0
    %1545 = vmatprep.subr.mxu0 0.0
    %1546 = vmatpush1.msra.mxu0 0.0
    %1547 = vmatprep.subr.mxu0 0.0
    %1548 = vmatpush1.msra.mxu0 0.0
    %1549 = vmatprep.subr.mxu0 0.0
    %1550 = vmatpush1.msra.mxu0 0.0
    %1551 = vmatprep.subr.mxu0 0.0
    %1552 = vmatpush1.msra.mxu0 0.0
    %1553 = vmatprep.mubr.f32.mxu0 0.0
    %1554 = vmatmul.mubr.f32.gmra.mrb[0].mxu0 %v1487
    %v1555 = vpop.f32.mrb[0].mxu0
    %v1556 = vadd.f32 0.0, %v1555
    %v1557 = vpop.f32.mrb[0].mxu0
    %1558 = vdwg.mxu0
    %v1560 = vrot.slane %v1556, 4
    %v1562 = vadd.f32 %v278, %v1560
    %v1563 = vrot.slane %v1483, 2
    %1564 = vrot.lane.b32.xlu0 %v1563, 32
    %v1565 = vpop.permute.xlu0 %1564
    %v1566 = vsel %vm143, %v1565, 0
    %1568 = vmatprep.subr.mxu0 0.0
    %1569 = vmatpush1.msra.mxu0 %v371
    %1570 = vmatprep.subr.mxu0 0.0
    %1571 = vmatpush1.msra.mxu0 %v372
    %1572 = vmatprep.subr.mxu0 0.0
    %1573 = vmatpush1.msra.mxu0 %v373
    %1574 = vmatprep.subr.mxu0 0.0
    %1575 = vmatpush1.msra.mxu0 %v374
    %1576 = vmatprep.subr.mxu0 0.0
    %1577 = vmatpush1.msra.mxu0 0.0
    %1578 = vmatprep.subr.mxu0 0.0
    %1579 = vmatpush1.msra.mxu0 0.0
    %1580 = vmatprep.subr.mxu0 0.0
    %1581 = vmatpush1.msra.mxu0 0.0
    %1582 = vmatprep.subr.mxu0 0.0
    %1583 = vmatpush1.msra.mxu0 0.0
    %1584 = vmatprep.subr.mxu0 0.0
    %1585 = vmatpush1.msra.mxu0 0.0
    %1586 = vmatprep.subr.mxu0 0.0
    %1587 = vmatpush1.msra.mxu0 0.0
    %1588 = vmatprep.subr.mxu0 0.0
    %1589 = vmatpush1.msra.mxu0 0.0
    %1590 = vmatprep.subr.mxu0 0.0
    %1591 = vmatpush1.msra.mxu0 0.0
    %1592 = vmatprep.subr.mxu0 0.0
    %1593 = vmatpush1.msra.mxu0 0.0
    %1594 = vmatprep.subr.mxu0 0.0
    %1595 = vmatpush1.msra.mxu0 0.0
    %1596 = vmatprep.subr.mxu0 0.0
    %1597 = vmatpush1.msra.mxu0 0.0
    %1598 = vmatprep.subr.mxu0 0.0
    %1599 = vmatpush1.msra.mxu0 0.0
    %1600 = vmatprep.subr.mxu0 0.0
    %1601 = vmatpush1.msra.mxu0 0.0
    %1602 = vmatprep.subr.mxu0 0.0
    %1603 = vmatpush1.msra.mxu0 0.0
    %1604 = vmatprep.subr.mxu0 0.0
    %1605 = vmatpush1.msra.mxu0 0.0
    %1606 = vmatprep.subr.mxu0 0.0
    %1607 = vmatpush1.msra.mxu0 0.0
    %1608 = vmatprep.subr.mxu0 0.0
    %1609 = vmatpush1.msra.mxu0 0.0
    %1610 = vmatprep.subr.mxu0 0.0
    %1611 = vmatpush1.msra.mxu0 0.0
    %1612 = vmatprep.subr.mxu0 0.0
    %1613 = vmatpush1.msra.mxu0 0.0
    %1614 = vmatprep.subr.mxu0 0.0
    %1615 = vmatpush1.msra.mxu0 0.0
    %1616 = vmatprep.subr.mxu0 0.0
    %1617 = vmatpush1.msra.mxu0 0.0
    %1618 = vmatprep.subr.mxu0 0.0
    %1619 = vmatpush1.msra.mxu0 0.0
    %1620 = vmatprep.subr.mxu0 0.0
    %1621 = vmatpush1.msra.mxu0 0.0
    %1622 = vmatprep.subr.mxu0 0.0
    %1623 = vmatpush1.msra.mxu0 0.0
    %1624 = vmatprep.subr.mxu0 0.0
    %1625 = vmatpush1.msra.mxu0 0.0
    %1626 = vmatprep.subr.mxu0 0.0
    %1627 = vmatpush1.msra.mxu0 0.0
    %1628 = vmatprep.subr.mxu0 0.0
    %1629 = vmatpush1.msra.mxu0 0.0
    %1630 = vmatprep.subr.mxu0 0.0
    %1631 = vmatpush1.msra.mxu0 0.0
    %1632 = vmatprep.mubr.f32.mxu0 0.0
    %1633 = vmatmul.mubr.f32.gmra.mrb[0].mxu0 %v1566
    %v1634 = vpop.f32.mrb[0].mxu0
    %v1635 = vadd.f32 0.0, %v1634
    %v1636 = vpop.f32.mrb[0].mxu0
    %1637 = vdwg.mxu0
    %v1639 = vrot.slane %v1635, 6
    %v1641 = vadd.f32 %v359, %v1639
    %v1643 = vrot.slane %v1562, 4
    %v1645 = vsel %vm534, %v1643, %v1641
    %v1646 = vmul.f32 %v1645, 0.5
    %v1647 = vtanh.pop %v1646
    %v1648 = vmul.f32 %v1647, 0.5
    %v1649 = vadd.f32 %v1648, 0.5
    %v1650 = vtanh.pop %v1645
    %v1651 = vmul.f32 %v1649, %v1477
    %1653 = vrot.lane.b32.xlu0 %v1650, 64
    %v1654 = vpop.permute.xlu0 %1653
    %v1656 = vmul.f32 %v1649, %v1654
    %1658 = vrot.lane.b32.xlu0 %v1656, 32
    %v1659 = vpop.permute.xlu0 %1658
    %v1661 = vadd.f32 %v1651, %v1659
    %v1662 = vtanh.pop %v1661
    %1664 = vrot.lane.b32.xlu0 %v1662, 64
    %v1665 = vpop.permute.xlu0 %1664
    %v1667 = vmul.f32 %v1649, %v1665
    %1669 = vrot.lane.b32.xlu0 %v1667, 32
    %v1670 = vpop.permute.xlu0 %1669
    %v1671 = vsel %vm143, %v1670, 0
    %1673 = vmatprep.subr.mxu0 0.0
    %1674 = vmatpush1.msra.mxu0 %v367
    %1675 = vmatprep.subr.mxu0 0.0
    %1676 = vmatpush1.msra.mxu0 %v368
    %1677 = vmatprep.subr.mxu0 0.0
    %1678 = vmatpush1.msra.mxu0 %v369
    %1679 = vmatprep.subr.mxu0 0.0
    %1680 = vmatpush1.msra.mxu0 %v370
    %1681 = vmatprep.subr.mxu0 0.0
    %1682 = vmatpush1.msra.mxu0 0.0
    %1683 = vmatprep.subr.mxu0 0.0
    %1684 = vmatpush1.msra.mxu0 0.0
    %1685 = vmatprep.subr.mxu0 0.0
    %1686 = vmatpush1.msra.mxu0 0.0
    %1687 = vmatprep.subr.mxu0 0.0
    %1688 = vmatpush1.msra.mxu0 0.0
    %1689 = vmatprep.subr.mxu0 0.0
    %1690 = vmatpush1.msra.mxu0 0.0
    %1691 = vmatprep.subr.mxu0 0.0
    %1692 = vmatpush1.msra.mxu0 0.0
    %1693 = vmatprep.subr.mxu0 0.0
    %1694 = vmatpush1.msra.mxu0 0.0
    %1695 = vmatprep.subr.mxu0 0.0
    %1696 = vmatpush1.msra.mxu0 0.0
    %1697 = vmatprep.subr.mxu0 0.0
    %1698 = vmatpush1.msra.mxu0 0.0
    %1699 = vmatprep.subr.mxu0 0.0
    %1700 = vmatpush1.msra.mxu0 0.0
    %1701 = vmatprep.subr.mxu0 0.0
    %1702 = vmatpush1.msra.mxu0 0.0
    %1703 = vmatprep.subr.mxu0 0.0
    %1704 = vmatpush1.msra.mxu0 0.0
    %1705 = vmatprep.subr.mxu0 0.0
    %1706 = vmatpush1.msra.mxu0 0.0
    %1707 = vmatprep.subr.mxu0 0.0
    %1708 = vmatpush1.msra.mxu0 0.0
    %1709 = vmatprep.subr.mxu0 0.0
    %1710 = vmatpush1.msra.mxu0 0.0
    %1711 = vmatprep.subr.mxu0 0.0
    %1712 = vmatpush1.msra.mxu0 0.0
    %1713 = vmatprep.subr.mxu0 0.0
    %1714 = vmatpush1.msra.mxu0 0.0
    %1715 = vmatprep.subr.mxu0 0.0
    %1716 = vmatpush1.msra.mxu0 0.0
    %1717 = vmatprep.subr.mxu0 0.0
    %1718 = vmatpush1.msra.mxu0 0.0
    %1719 = vmatprep.subr.mxu0 0.0
    %1720 = vmatpush1.msra.mxu0 0.0
    %1721 = vmatprep.subr.mxu0 0.0
    %1722 = vmatpush1.msra.mxu0 0.0
    %1723 = vmatprep.subr.mxu0 0.0
    %1724 = vmatpush1.msra.mxu0 0.0
    %1725 = vmatprep.subr.mxu0 0.0
    %1726 = vmatpush1.msra.mxu0 0.0
    %1727 = vmatprep.subr.mxu0 0.0
    %1728 = vmatpush1.msra.mxu0 0.0
    %1729 = vmatprep.subr.mxu0 0.0
    %1730 = vmatpush1.msra.mxu0 0.0
    %1731 = vmatprep.subr.mxu0 0.0
    %1732 = vmatpush1.msra.mxu0 0.0
    %1733 = vmatprep.subr.mxu0 0.0
    %1734 = vmatpush1.msra.mxu0 0.0
    %1735 = vmatprep.subr.mxu0 0.0
    %1736 = vmatpush1.msra.mxu0 0.0
    %1737 = vmatprep.mubr.f32.mxu0 0.0
    %1738 = vmatmul.mubr.f32.gmra.mrb[0].mxu0 %v1671
    %v1739 = vpop.f32.mrb[0].mxu0
    %v1740 = vadd.f32 0.0, %v1739
    %v1741 = vpop.f32.mrb[0].mxu0
    %1742 = vdwg.mxu0
    %v1744 = vrot.slane %v1740, 2
    %v1746 = vadd.f32 %v278, %v1744
    %v1747 = vrot.slane %v1667, 2
    %1748 = vrot.lane.b32.xlu0 %v1747, 32
    %v1749 = vpop.permute.xlu0 %1748
    %v1750 = vsel %vm143, %v1749, 0
    %1752 = vmatprep.subr.mxu0 0.0
    %1753 = vmatpush1.msra.mxu0 %v371
    %1754 = vmatprep.subr.mxu0 0.0
    %1755 = vmatpush1.msra.mxu0 %v372
    %1756 = vmatprep.subr.mxu0 0.0
    %1757 = vmatpush1.msra.mxu0 %v373
    %1758 = vmatprep.subr.mxu0 0.0
    %1759 = vmatpush1.msra.mxu0 %v374
    %1760 = vmatprep.subr.mxu0 0.0
    %1761 = vmatpush1.msra.mxu0 0.0
    %1762 = vmatprep.subr.mxu0 0.0
    %1763 = vmatpush1.msra.mxu0 0.0
    %1764 = vmatprep.subr.mxu0 0.0
    %1765 = vmatpush1.msra.mxu0 0.0
    %1766 = vmatprep.subr.mxu0 0.0
    %1767 = vmatpush1.msra.mxu0 0.0
    %1768 = vmatprep.subr.mxu0 0.0
    %1769 = vmatpush1.msra.mxu0 0.0
    %1770 = vmatprep.subr.mxu0 0.0
    %1771 = vmatpush1.msra.mxu0 0.0
    %1772 = vmatprep.subr.mxu0 0.0
    %1773 = vmatpush1.msra.mxu0 0.0
    %1774 = vmatprep.subr.mxu0 0.0
    %1775 = vmatpush1.msra.mxu0 0.0
    %1776 = vmatprep.subr.mxu0 0.0
    %1777 = vmatpush1.msra.mxu0 0.0
    %1778 = vmatprep.subr.mxu0 0.0
    %1779 = vmatpush1.msra.mxu0 0.0
    %1780 = vmatprep.subr.mxu0 0.0
    %1781 = vmatpush1.msra.mxu0 0.0
    %1782 = vmatprep.subr.mxu0 0.0
    %1783 = vmatpush1.msra.mxu0 0.0
    %1784 = vmatprep.subr.mxu0 0.0
    %1785 = vmatpush1.msra.mxu0 0.0
    %1786 = vmatprep.subr.mxu0 0.0
    %1787 = vmatpush1.msra.mxu0 0.0
    %1788 = vmatprep.subr.mxu0 0.0
    %1789 = vmatpush1.msra.mxu0 0.0
    %1790 = vmatprep.subr.mxu0 0.0
    %1791 = vmatpush1.msra.mxu0 0.0
    %1792 = vmatprep.subr.mxu0 0.0
    %1793 = vmatpush1.msra.mxu0 0.0
    %1794 = vmatprep.subr.mxu0 0.0
    %1795 = vmatpush1.msra.mxu0 0.0
    %1796 = vmatprep.subr.mxu0 0.0
    %1797 = vmatpush1.msra.mxu0 0.0
    %1798 = vmatprep.subr.mxu0 0.0
    %1799 = vmatpush1.msra.mxu0 0.0
    %1800 = vmatprep.subr.mxu0 0.0
    %1801 = vmatpush1.msra.mxu0 0.0
    %1802 = vmatprep.subr.mxu0 0.0
    %1803 = vmatpush1.msra.mxu0 0.0
    %1804 = vmatprep.subr.mxu0 0.0
    %1805 = vmatpush1.msra.mxu0 0.0
    %1806 = vmatprep.subr.mxu0 0.0
    %1807 = vmatpush1.msra.mxu0 0.0
    %1808 = vmatprep.subr.mxu0 0.0
    %1809 = vmatpush1.msra.mxu0 0.0
    %1810 = vmatprep.subr.mxu0 0.0
    %1811 = vmatpush1.msra.mxu0 0.0
    %1812 = vmatprep.subr.mxu0 0.0
    %1813 = vmatpush1.msra.mxu0 0.0
    %1814 = vmatprep.subr.mxu0 0.0
    %1815 = vmatpush1.msra.mxu0 0.0
    %1816 = vmatprep.mubr.f32.mxu0 0.0
    %1817 = vmatmul.mubr.f32.gmra.mrb[0].mxu0 %v1750
    %v1818 = vpop.f32.mrb[0].mxu0
    %v1819 = vadd.f32 0.0, %v1818
    %v1820 = vpop.f32.mrb[0].mxu0
    %1821 = vdwg.mxu0
    %v1822 = vadd.f32 %v359, %v1819
    %v1824 = vrot.slane %v1746, 6
    %v1827 = vrot.slane %v1822, 6
    %v1829 = vsel %vm534, %v1824, %v1827
    %v1830 = vmul.f32 %v1829, 0.5
    %v1831 = vtanh.pop %v1830
    %v1832 = vmul.f32 %v1831, 0.5
    %v1833 = vadd.f32 %v1832, 0.5
    %v1834 = vtanh.pop %v1829
    %v1835 = vmul.f32 %v1833, %v1661
    %1837 = vrot.lane.b32.xlu0 %v1834, 64
    %v1838 = vpop.permute.xlu0 %1837
    %v1840 = vmul.f32 %v1833, %v1838
    %1842 = vrot.lane.b32.xlu0 %v1840, 32
    %v1843 = vpop.permute.xlu0 %1842
    %v1845 = vadd.f32 %v1835, %v1843
    %v1846 = vtanh.pop %v1845
    %1848 = vrot.lane.b32.xlu0 %v1846, 64
    %v1849 = vpop.permute.xlu0 %1848
    %v1851 = vmul.f32 %v1833, %v1849
    %v1852 = vrot.slane %v747, 6
    %v1854 = vrot.slane %v931, 4
    %v1857 = vrot.slane %v1483, 6
    %v1859 = vrot.slane %v1667, 4
    %v1862 = vrot.slane %v1851, 2
    %v1864 = vsel %vm534, %v560, %v1852
    %vm1865 = vcmask 1043456
    %v1866 = vsel %vm1865, %v1864, %v1854
    %vm1867 = vcmask 1045504
    %v1868 = vsel %vm1867, %v1866, %v1192
    %v1869 = vsel %vm534, %v1296, %v1857
    %v1870 = vsel %vm1865, %v1869, %v1859
    %v1871 = vsel %vm1867, %v1870, %v1862
    %v1872 = vrot.slane %v1296, 4
    %v1874 = vrot.slane %v560, 4
    %v1876 = vsel %vm534, %v1862, %v1667
    %v1877 = vsel %vm1865, %v1876, %v1857
    %v1878 = vsel %vm1867, %v1877, %v1872
    %v1879 = vsel %vm534, %v1192, %v931
    %v1880 = vsel %vm1865, %v1879, %v1852
    %v1881 = vsel %vm1867, %v1880, %v1874
    %1884 = vrot.lane.b32.xlu0 %v1868, 32
    %v1885 = vpop.permute.xlu0 %1884
    %1886 = vrot.lane.b32.xlu0 %v1871, 32
    %v1887 = vpop.permute.xlu0 %1886
    %1892 = vrot.lane.b32.xlu0 %v1878, 64
    %v1893 = vpop.permute.xlu0 %1892
    %1894 = vrot.lane.b32.xlu0 %v1881, 64
    %v1895 = vpop.permute.xlu0 %1894
    %v1898 = vsel %vm143, %v1885, %v1893
    %v1899 = vsel %vm143, %v1887, %v1895
    %v1900 = vld [vmem:[%s9] sm:$0xff]
    %v1901 = vld [vmem:[%s9 + $0x8] sm:$0xff]
    %v1902 = vld [vmem:[%s9 + $0x10] sm:$0xff]
    %v1903 = vld [vmem:[%s9 + $0x18] sm:$0xff]
    %v1904 = vld [vmem:[%s9 + $0x20] sm:$0xff]
    %v1905 = vld [vmem:[%s9 + $0x28] sm:$0xff]
    %v1906 = vld [vmem:[%s9 + $0x30] sm:$0xff]
    %v1907 = vld [vmem:[%s9 + $0x38] sm:$0xff]
    %v1908 = vld [vmem:[%s11] sm:$0x1]
    %v1910 = vlaneseq
    %v1911 = vshrl.u32 %v1910, 7
    %v1912 = vsub.s32 0, %v1911
    %v1913 = vrot.slane %v1908, %v1912
    %vm1915 = vcmask 523264
    %v1917 = vsel %vm1915, %v1898, 0
    %v1920 = vsel %vm1915, %v1899, 0
    %1922 = vmatprep.subr.mxu0 0.0
    %1923 = vmatpush1.msra.mxu0 %v1900
    %1924 = vmatprep.subr.mxu0 0.0
    %1925 = vmatpush1.msra.mxu0 %v1901
    %1926 = vmatprep.subr.mxu0 0.0
    %1927 = vmatpush1.msra.mxu0 %v1902
    %1928 = vmatprep.subr.mxu0 0.0
    %1929 = vmatpush1.msra.mxu0 %v1903
    %1930 = vmatprep.subr.mxu0 0.0
    %1931 = vmatpush1.msra.mxu0 %v1904
    %1932 = vmatprep.subr.mxu0 0.0
    %1933 = vmatpush1.msra.mxu0 %v1905
    %1934 = vmatprep.subr.mxu0 0.0
    %1935 = vmatpush1.msra.mxu0 %v1906
    %1936 = vmatprep.subr.mxu0 0.0
    %1937 = vmatpush1.msra.mxu0 %v1907
    %1938 = vmatprep.subr.mxu0 0.0
    %1939 = vmatpush1.msra.mxu0 0.0
    %1940 = vmatprep.subr.mxu0 0.0
    %1941 = vmatpush1.msra.mxu0 0.0
    %1942 = vmatprep.subr.mxu0 0.0
    %1943 = vmatpush1.msra.mxu0 0.0
    %1944 = vmatprep.subr.mxu0 0.0
    %1945 = vmatpush1.msra.mxu0 0.0
    %1946 = vmatprep.subr.mxu0 0.0
    %1947 = vmatpush1.msra.mxu0 0.0
    %1948 = vmatprep.subr.mxu0 0.0
    %1949 = vmatpush1.msra.mxu0 0.0
    %1950 = vmatprep.subr.mxu0 0.0
    %1951 = vmatpush1.msra.mxu0 0.0
    %1952 = vmatprep.subr.mxu0 0.0
    %1953 = vmatpush1.msra.mxu0 0.0
    %1954 = vmatprep.subr.mxu0 0.0
    %1955 = vmatpush1.msra.mxu0 0.0
    %1956 = vmatprep.subr.mxu0 0.0
    %1957 = vmatpush1.msra.mxu0 0.0
    %1958 = vmatprep.subr.mxu0 0.0
    %1959 = vmatpush1.msra.mxu0 0.0
    %1960 = vmatprep.subr.mxu0 0.0
    %1961 = vmatpush1.msra.mxu0 0.0
    %1962 = vmatprep.subr.mxu0 0.0
    %1963 = vmatpush1.msra.mxu0 0.0
    %1964 = vmatprep.subr.mxu0 0.0
    %1965 = vmatpush1.msra.mxu0 0.0
    %1966 = vmatprep.subr.mxu0 0.0
    %1967 = vmatpush1.msra.mxu0 0.0
    %1968 = vmatprep.subr.mxu0 0.0
    %1969 = vmatpush1.msra.mxu0 0.0
    %1970 = vmatprep.subr.mxu0 0.0
    %1971 = vmatpush1.msra.mxu0 0.0
    %1972 = vmatprep.subr.mxu0 0.0
    %1973 = vmatpush1.msra.mxu0 0.0
    %1974 = vmatprep.subr.mxu0 0.0
    %1975 = vmatpush1.msra.mxu0 0.0
    %1976 = vmatprep.subr.mxu0 0.0
    %1977 = vmatpush1.msra.mxu0 0.0
    %1978 = vmatprep.subr.mxu0 0.0
    %1979 = vmatpush1.msra.mxu0 0.0
    %1980 = vmatprep.subr.mxu0 0.0
    %1981 = vmatpush1.msra.mxu0 0.0
    %1982 = vmatprep.subr.mxu0 0.0
    %1983 = vmatpush1.msra.mxu0 0.0
    %1984 = vmatprep.subr.mxu0 0.0
    %1985 = vmatpush1.msra.mxu0 0.0
    %1986 = vmatprep.mubr.f32.mxu0 0.0
    %1987 = vmatmul.mubr.f32.gmra.mrb[0].mxu0 %v1917
    %v1988 = vpop.f32.mrb[0].mxu0
    %v1989 = vadd.f32 %v1913, %v1988
    %v1990 = vpop.f32.mrb[0].mxu0
    %1991 = vmatprep.mubr.f32.mxu0 0.0
    %1992 = vmatmul.mubr.f32.gmra.mrb[0].mxu0 %v1920
    %v1993 = vpop.f32.mrb[0].mxu0
    %v1994 = vadd.f32 %v1913, %v1993
    %v1995 = vpop.f32.mrb[0].mxu0
    %1996 = vdwg.mxu0
    %v1997 = vld [vmem:[#allocation11] sm:$0xff]
    %v1998 = vld [vmem:[#allocation11 + $0x8] sm:$0xff]
    %v1999 = vld [vmem:[#allocation11 + $0x10] sm:$0xff]
    %v2000 = vld [vmem:[#allocation11 + $0x18] sm:$0xff]
    %v2001 = vld [vmem:[#allocation11 + $0x20] sm:$0xff]
    %v2002 = vld [vmem:[#allocation11 + $0x28] sm:$0xff]
    %v2003 = vld [vmem:[#allocation11 + $0x30] sm:$0xff]
    %v2004 = vld [vmem:[#allocation11 + $0x38] sm:$0xff]
    %v2005 = vld [vmem:[%s14] sm:$0x1]
    %v2007 = vlaneseq
    %v2008 = vshrl.u32 %v2007, 7
    %v2009 = vsub.s32 0, %v2008
    %v2010 = vrot.slane %v2005, %v2009
    %2012 = vmatprep.subr.mxu0 0.0
    %2013 = vmatpush1.msra.mxu0 %v1997
    %2014 = vmatprep.subr.mxu0 0.0
    %2015 = vmatpush1.msra.mxu0 %v1998
    %2016 = vmatprep.subr.mxu0 0.0
    %2017 = vmatpush1.msra.mxu0 %v1999
    %2018 = vmatprep.subr.mxu0 0.0
    %2019 = vmatpush1.msra.mxu0 %v2000
    %2020 = vmatprep.subr.mxu0 0.0
    %2021 = vmatpush1.msra.mxu0 %v2001
    %2022 = vmatprep.subr.mxu0 0.0
    %2023 = vmatpush1.msra.mxu0 %v2002
    %2024 = vmatprep.subr.mxu0 0.0
    %2025 = vmatpush1.msra.mxu0 %v2003
    %2026 = vmatprep.subr.mxu0 0.0
    %2027 = vmatpush1.msra.mxu0 %v2004
    %2028 = vmatprep.subr.mxu0 0.0
    %2029 = vmatpush1.msra.mxu0 0.0
    %2030 = vmatprep.subr.mxu0 0.0
    %2031 = vmatpush1.msra.mxu0 0.0
    %2032 = vmatprep.subr.mxu0 0.0
    %2033 = vmatpush1.msra.mxu0 0.0
    %2034 = vmatprep.subr.mxu0 0.0
    %2035 = vmatpush1.msra.mxu0 0.0
    %2036 = vmatprep.subr.mxu0 0.0
    %2037 = vmatpush1.msra.mxu0 0.0
    %2038 = vmatprep.subr.mxu0 0.0
    %2039 = vmatpush1.msra.mxu0 0.0
    %2040 = vmatprep.subr.mxu0 0.0
    %2041 = vmatpush1.msra.mxu0 0.0
    %2042 = vmatprep.subr.mxu0 0.0
    %2043 = vmatpush1.msra.mxu0 0.0
    %2044 = vmatprep.subr.mxu0 0.0
    %2045 = vmatpush1.msra.mxu0 0.0
    %2046 = vmatprep.subr.mxu0 0.0
    %2047 = vmatpush1.msra.mxu0 0.0
    %2048 = vmatprep.subr.mxu0 0.0
    %2049 = vmatpush1.msra.mxu0 0.0
    %2050 = vmatprep.subr.mxu0 0.0
    %2051 = vmatpush1.msra.mxu0 0.0
    %2052 = vmatprep.subr.mxu0 0.0
    %2053 = vmatpush1.msra.mxu0 0.0
    %2054 = vmatprep.subr.mxu0 0.0
    %2055 = vmatpush1.msra.mxu0 0.0
    %2056 = vmatprep.subr.mxu0 0.0
    %2057 = vmatpush1.msra.mxu0 0.0
    %2058 = vmatprep.subr.mxu0 0.0
    %2059 = vmatpush1.msra.mxu0 0.0
    %2060 = vmatprep.subr.mxu0 0.0
    %2061 = vmatpush1.msra.mxu0 0.0
    %2062 = vmatprep.subr.mxu0 0.0
    %2063 = vmatpush1.msra.mxu0 0.0
    %2064 = vmatprep.subr.mxu0 0.0
    %2065 = vmatpush1.msra.mxu0 0.0
    %2066 = vmatprep.subr.mxu0 0.0
    %2067 = vmatpush1.msra.mxu0 0.0
    %2068 = vmatprep.subr.mxu0 0.0
    %2069 = vmatpush1.msra.mxu0 0.0
    %2070 = vmatprep.subr.mxu0 0.0
    %2071 = vmatpush1.msra.mxu0 0.0
    %2072 = vmatprep.subr.mxu0 0.0
    %2073 = vmatpush1.msra.mxu0 0.0
    %2074 = vmatprep.subr.mxu0 0.0
    %2075 = vmatpush1.msra.mxu0 0.0
    %2076 = vmatprep.mubr.f32.mxu0 0.0
    %2077 = vmatmul.mubr.f32.gmra.mrb[0].mxu0 %v1917
    %v2078 = vpop.f32.mrb[0].mxu0
    %v2079 = vadd.f32 %v2010, %v2078
    %v2080 = vpop.f32.mrb[0].mxu0
    %2081 = vmatprep.mubr.f32.mxu0 0.0
    %2082 = vmatmul.mubr.f32.gmra.mrb[0].mxu0 %v1920
    %v2083 = vpop.f32.mrb[0].mxu0
    %v2084 = vadd.f32 %v2010, %v2083
    %v2085 = vpop.f32.mrb[0].mxu0
    %2086 = vdwg.mxu0
    %2087 = vmatprep.subr.mxu0 0.0
    %2088 = vmatpush1.msra.mxu0 %v375
    %2089 = vmatprep.subr.mxu0 0.0
    %2090 = vmatpush1.msra.mxu0 %v376
    %2091 = vmatprep.subr.mxu0 0.0
    %2092 = vmatpush1.msra.mxu0 %v377
    %2093 = vmatprep.subr.mxu0 0.0
    %2094 = vmatpush1.msra.mxu0 %v378
    %2095 = vmatprep.subr.mxu0 0.0
    %2096 = vmatpush1.msra.mxu0 0.0
    %2097 = vmatprep.subr.mxu0 0.0
    %2098 = vmatpush1.msra.mxu0 0.0
    %2099 = vmatprep.subr.mxu0 0.0
    %2100 = vmatpush1.msra.mxu0 0.0
    %2101 = vmatprep.subr.mxu0 0.0
    %2102 = vmatpush1.msra.mxu0 0.0
    %2103 = vmatprep.subr.mxu0 0.0
    %2104 = vmatpush1.msra.mxu0 0.0
    %2105 = vmatprep.subr.mxu0 0.0
    %2106 = vmatpush1.msra.mxu0 0.0
    %2107 = vmatprep.subr.mxu0 0.0
    %2108 = vmatpush1.msra.mxu0 0.0
    %2109 = vmatprep.subr.mxu0 0.0
    %2110 = vmatpush1.msra.mxu0 0.0
    %2111 = vmatprep.subr.mxu0 0.0
    %2112 = vmatpush1.msra.mxu0 0.0
    %2113 = vmatprep.subr.mxu0 0.0
    %2114 = vmatpush1.msra.mxu0 0.0
    %2115 = vmatprep.subr.mxu0 0.0
    %2116 = vmatpush1.msra.mxu0 0.0
    %2117 = vmatprep.subr.mxu0 0.0
    %2118 = vmatpush1.msra.mxu0 0.0
    %2119 = vmatprep.subr.mxu0 0.0
    %2120 = vmatpush1.msra.mxu0 0.0
    %2121 = vmatprep.subr.mxu0 0.0
    %2122 = vmatpush1.msra.mxu0 0.0
    %2123 = vmatprep.subr.mxu0 0.0
    %2124 = vmatpush1.msra.mxu0 0.0
    %2125 = vmatprep.subr.mxu0 0.0
    %2126 = vmatpush1.msra.mxu0 0.0
    %2127 = vmatprep.subr.mxu0 0.0
    %2128 = vmatpush1.msra.mxu0 0.0
    %2129 = vmatprep.subr.mxu0 0.0
    %2130 = vmatpush1.msra.mxu0 0.0
    %2131 = vmatprep.subr.mxu0 0.0
    %2132 = vmatpush1.msra.mxu0 0.0
    %2133 = vmatprep.subr.mxu0 0.0
    %2134 = vmatpush1.msra.mxu0 0.0
    %2135 = vmatprep.subr.mxu0 0.0
    %2136 = vmatpush1.msra.mxu0 0.0
    %2137 = vmatprep.subr.mxu0 0.0
    %2138 = vmatpush1.msra.mxu0 0.0
    %2139 = vmatprep.subr.mxu0 0.0
    %2140 = vmatpush1.msra.mxu0 0.0
    %2141 = vmatprep.subr.mxu0 0.0
    %2142 = vmatpush1.msra.mxu0 0.0
    %2143 = vmatprep.subr.mxu0 0.0
    %2144 = vmatpush1.msra.mxu0 0.0
    %2145 = vmatprep.subr.mxu0 0.0
    %2146 = vmatpush1.msra.mxu0 0.0
    %2147 = vmatprep.subr.mxu0 0.0
    %2148 = vmatpush1.msra.mxu0 0.0
    %2149 = vmatprep.subr.mxu0 0.0
    %2150 = vmatpush1.msra.mxu0 0.0
    %2151 = vmatprep.mubr.f32.mxu0 0.0
    %2152 = vmatmul.mubr.f32.gmra.mrb[0].mxu0 %v384
    %v2153 = vpop.f32.mrb[0].mxu0
    %v2154 = vadd.f32 0.0, %v2153
    %v2155 = vpop.f32.mrb[0].mxu0
    %2156 = vdwg.mxu0
    %v2157 = vadd.f32 %v1989, %v2154
    %2158 = vmatprep.subr.mxu0 0.0
    %2159 = vmatpush1.msra.mxu0 %v379
    %2160 = vmatprep.subr.mxu0 0.0
    %2161 = vmatpush1.msra.mxu0 %v380
    %2162 = vmatprep.subr.mxu0 0.0
    %2163 = vmatpush1.msra.mxu0 %v381
    %2164 = vmatprep.subr.mxu0 0.0
    %2165 = vmatpush1.msra.mxu0 %v382
    %2166 = vmatprep.subr.mxu0 0.0
    %2167 = vmatpush1.msra.mxu0 0.0
    %2168 = vmatprep.subr.mxu0 0.0
    %2169 = vmatpush1.msra.mxu0 0.0
    %2170 = vmatprep.subr.mxu0 0.0
    %2171 = vmatpush1.msra.mxu0 0.0
    %2172 = vmatprep.subr.mxu0 0.0
    %2173 = vmatpush1.msra.mxu0 0.0
    %2174 = vmatprep.subr.mxu0 0.0
    %2175 = vmatpush1.msra.mxu0 0.0
    %2176 = vmatprep.subr.mxu0 0.0
    %2177 = vmatpush1.msra.mxu0 0.0
    %2178 = vmatprep.subr.mxu0 0.0
    %2179 = vmatpush1.msra.mxu0 0.0
    %2180 = vmatprep.subr.mxu0 0.0
    %2181 = vmatpush1.msra.mxu0 0.0
    %2182 = vmatprep.subr.mxu0 0.0
    %2183 = vmatpush1.msra.mxu0 0.0
    %2184 = vmatprep.subr.mxu0 0.0
    %2185 = vmatpush1.msra.mxu0 0.0
    %2186 = vmatprep.subr.mxu0 0.0
    %2187 = vmatpush1.msra.mxu0 0.0
    %2188 = vmatprep.subr.mxu0 0.0
    %2189 = vmatpush1.msra.mxu0 0.0
    %2190 = vmatprep.subr.mxu0 0.0
    %2191 = vmatpush1.msra.mxu0 0.0
    %2192 = vmatprep.subr.mxu0 0.0
    %2193 = vmatpush1.msra.mxu0 0.0
    %2194 = vmatprep.subr.mxu0 0.0
    %2195 = vmatpush1.msra.mxu0 0.0
    %2196 = vmatprep.subr.mxu0 0.0
    %2197 = vmatpush1.msra.mxu0 0.0
    %2198 = vmatprep.subr.mxu0 0.0
    %2199 = vmatpush1.msra.mxu0 0.0
    %2200 = vmatprep.subr.mxu0 0.0
    %2201 = vmatpush1.msra.mxu0 0.0
    %2202 = vmatprep.subr.mxu0 0.0
    %2203 = vmatpush1.msra.mxu0 0.0
    %2204 = vmatprep.subr.mxu0 0.0
    %2205 = vmatpush1.msra.mxu0 0.0
    %2206 = vmatprep.subr.mxu0 0.0
    %2207 = vmatpush1.msra.mxu0 0.0
    %2208 = vmatprep.subr.mxu0 0.0
    %2209 = vmatpush1.msra.mxu0 0.0
    %2210 = vmatprep.subr.mxu0 0.0
    %2211 = vmatpush1.msra.mxu0 0.0
    %2212 = vmatprep.subr.mxu0 0.0
    %2213 = vmatpush1.msra.mxu0 0.0
    %2214 = vmatprep.subr.mxu0 0.0
    %2215 = vmatpush1.msra.mxu0 0.0
    %2216 = vmatprep.subr.mxu0 0.0
    %2217 = vmatpush1.msra.mxu0 0.0
    %2218 = vmatprep.subr.mxu0 0.0
    %2219 = vmatpush1.msra.mxu0 0.0
    %2220 = vmatprep.subr.mxu0 0.0
    %2221 = vmatpush1.msra.mxu0 0.0
    %2222 = vmatprep.mubr.f32.mxu0 0.0
    %2223 = vmatmul.mubr.f32.gmra.mrb[0].mxu0 %v384
    %v2224 = vpop.f32.mrb[0].mxu0
    %v2225 = vadd.f32 0.0, %v2224
    %v2226 = vpop.f32.mrb[0].mxu0
    %2227 = vdwg.mxu0
    %v2229 = vrot.slane %v2225, 2
    %v2231 = vadd.f32 %v2084, %v2229
    %v2233 = vrot.slane %v2231, 4
    %v2235 = vsel %vm534, %v2157, %v2233
    %v2236 = vmul.f32 %v2235, 0.5
    %v2237 = vtanh.pop %v2236
    %v2238 = vmul.f32 %v2237, 0.5
    %v2239 = vadd.f32 %v2238, 0.5
    %v2240 = vtanh.pop %v2235
    %v2241 = vmul.f32 %v2239, %v542
    %2243 = vrot.lane.b32.xlu0 %v2240, 64
    %v2244 = vpop.permute.xlu0 %2243
    %v2246 = vmul.f32 %v2239, %v2244
    %2248 = vrot.lane.b32.xlu0 %v2246, 32
    %v2249 = vpop.permute.xlu0 %2248
    %v2251 = vadd.f32 %v2241, %v2249
    %v2252 = vtanh.pop %v2251
    %2254 = vrot.lane.b32.xlu0 %v2252, 64
    %v2255 = vpop.permute.xlu0 %2254
    %v2257 = vmul.f32 %v2239, %v2255
    %2259 = vrot.lane.b32.xlu0 %v2257, 32
    %v2260 = vpop.permute.xlu0 %2259
    %v2261 = vsel %vm143, %v2260, 0
    %2263 = vmatprep.subr.mxu0 0.0
    %2264 = vmatpush1.msra.mxu0 %v375
    %2265 = vmatprep.subr.mxu0 0.0
    %2266 = vmatpush1.msra.mxu0 %v376
    %2267 = vmatprep.subr.mxu0 0.0
    %2268 = vmatpush1.msra.mxu0 %v377
    %2269 = vmatprep.subr.mxu0 0.0
    %2270 = vmatpush1.msra.mxu0 %v378
    %2271 = vmatprep.subr.mxu0 0.0
    %2272 = vmatpush1.msra.mxu0 0.0
    %2273 = vmatprep.subr.mxu0 0.0
    %2274 = vmatpush1.msra.mxu0 0.0
    %2275 = vmatprep.subr.mxu0 0.0
    %2276 = vmatpush1.msra.mxu0 0.0
    %2277 = vmatprep.subr.mxu0 0.0
    %2278 = vmatpush1.msra.mxu0 0.0
    %2279 = vmatprep.subr.mxu0 0.0
    %2280 = vmatpush1.msra.mxu0 0.0
    %2281 = vmatprep.subr.mxu0 0.0
    %2282 = vmatpush1.msra.mxu0 0.0
    %2283 = vmatprep.subr.mxu0 0.0
    %2284 = vmatpush1.msra.mxu0 0.0
    %2285 = vmatprep.subr.mxu0 0.0
    %2286 = vmatpush1.msra.mxu0 0.0
    %2287 = vmatprep.subr.mxu0 0.0
    %2288 = vmatpush1.msra.mxu0 0.0
    %2289 = vmatprep.subr.mxu0 0.0
    %2290 = vmatpush1.msra.mxu0 0.0
    %2291 = vmatprep.subr.mxu0 0.0
    %2292 = vmatpush1.msra.mxu0 0.0
    %2293 = vmatprep.subr.mxu0 0.0
    %2294 = vmatpush1.msra.mxu0 0.0
    %2295 = vmatprep.subr.mxu0 0.0
    %2296 = vmatpush1.msra.mxu0 0.0
    %2297 = vmatprep.subr.mxu0 0.0
    %2298 = vmatpush1.msra.mxu0 0.0
    %2299 = vmatprep.subr.mxu0 0.0
    %2300 = vmatpush1.msra.mxu0 0.0
    %2301 = vmatprep.subr.mxu0 0.0
    %2302 = vmatpush1.msra.mxu0 0.0
    %2303 = vmatprep.subr.mxu0 0.0
    %2304 = vmatpush1.msra.mxu0 0.0
    %2305 = vmatprep.subr.mxu0 0.0
    %2306 = vmatpush1.msra.mxu0 0.0
    %2307 = vmatprep.subr.mxu0 0.0
    %2308 = vmatpush1.msra.mxu0 0.0
    %2309 = vmatprep.subr.mxu0 0.0
    %2310 = vmatpush1.msra.mxu0 0.0
    %2311 = vmatprep.subr.mxu0 0.0
    %2312 = vmatpush1.msra.mxu0 0.0
    %2313 = vmatprep.subr.mxu0 0.0
    %2314 = vmatpush1.msra.mxu0 0.0
    %2315 = vmatprep.subr.mxu0 0.0
    %2316 = vmatpush1.msra.mxu0 0.0
    %2317 = vmatprep.subr.mxu0 0.0
    %2318 = vmatpush1.msra.mxu0 0.0
    %2319 = vmatprep.subr.mxu0 0.0
    %2320 = vmatpush1.msra.mxu0 0.0
    %2321 = vmatprep.subr.mxu0 0.0
    %2322 = vmatpush1.msra.mxu0 0.0
    %2323 = vmatprep.subr.mxu0 0.0
    %2324 = vmatpush1.msra.mxu0 0.0
    %2325 = vmatprep.subr.mxu0 0.0
    %2326 = vmatpush1.msra.mxu0 0.0
    %2327 = vmatprep.mubr.f32.mxu0 0.0
    %2328 = vmatmul.mubr.f32.gmra.mrb[0].mxu0 %v2261
    %v2329 = vpop.f32.mrb[0].mxu0
    %v2330 = vadd.f32 0.0, %v2329
    %v2331 = vpop.f32.mrb[0].mxu0
    %2332 = vdwg.mxu0
    %v2334 = vrot.slane %v2330, 6
    %v2336 = vadd.f32 %v1989, %v2334
    %v2337 = vrot.slane %v2257, 2
    %2338 = vrot.lane.b32.xlu0 %v2337, 32
    %v2339 = vpop.permute.xlu0 %2338
    %v2340 = vsel %vm143, %v2339, 0
    %2342 = vmatprep.subr.mxu0 0.0
    %2343 = vmatpush1.msra.mxu0 %v379
    %2344 = vmatprep.subr.mxu0 0.0
    %2345 = vmatpush1.msra.mxu0 %v380
    %2346 = vmatprep.subr.mxu0 0.0
    %2347 = vmatpush1.msra.mxu0 %v381
    %2348 = vmatprep.subr.mxu0 0.0
    %2349 = vmatpush1.msra.mxu0 %v382
    %2350 = vmatprep.subr.mxu0 0.0
    %2351 = vmatpush1.msra.mxu0 0.0
    %2352 = vmatprep.subr.mxu0 0.0
    %2353 = vmatpush1.msra.mxu0 0.0
    %2354 = vmatprep.subr.mxu0 0.0
    %2355 = vmatpush1.msra.mxu0 0.0
    %2356 = vmatprep.subr.mxu0 0.0
    %2357 = vmatpush1.msra.mxu0 0.0
    %2358 = vmatprep.subr.mxu0 0.0
    %2359 = vmatpush1.msra.mxu0 0.0
    %2360 = vmatprep.subr.mxu0 0.0
    %2361 = vmatpush1.msra.mxu0 0.0
    %2362 = vmatprep.subr.mxu0 0.0
    %2363 = vmatpush1.msra.mxu0 0.0
    %2364 = vmatprep.subr.mxu0 0.0
    %2365 = vmatpush1.msra.mxu0 0.0
    %2366 = vmatprep.subr.mxu0 0.0
    %2367 = vmatpush1.msra.mxu0 0.0
    %2368 = vmatprep.subr.mxu0 0.0
    %2369 = vmatpush1.msra.mxu0 0.0
    %2370 = vmatprep.subr.mxu0 0.0
    %2371 = vmatpush1.msra.mxu0 0.0
    %2372 = vmatprep.subr.mxu0 0.0
    %2373 = vmatpush1.msra.mxu0 0.0
    %2374 = vmatprep.subr.mxu0 0.0
    %2375 = vmatpush1.msra.mxu0 0.0
    %2376 = vmatprep.subr.mxu0 0.0
    %2377 = vmatpush1.msra.mxu0 0.0
    %2378 = vmatprep.subr.mxu0 0.0
    %2379 = vmatpush1.msra.mxu0 0.0
    %2380 = vmatprep.subr.mxu0 0.0
    %2381 = vmatpush1.msra.mxu0 0.0
    %2382 = vmatprep.subr.mxu0 0.0
    %2383 = vmatpush1.msra.mxu0 0.0
    %2384 = vmatprep.subr.mxu0 0.0
    %2385 = vmatpush1.msra.mxu0 0.0
    %2386 = vmatprep.subr.mxu0 0.0
    %2387 = vmatpush1.msra.mxu0 0.0
    %2388 = vmatprep.subr.mxu0 0.0
    %2389 = vmatpush1.msra.mxu0 0.0
    %2390 = vmatprep.subr.mxu0 0.0
    %2391 = vmatpush1.msra.mxu0 0.0
    %2392 = vmatprep.subr.mxu0 0.0
    %2393 = vmatpush1.msra.mxu0 0.0
    %2394 = vmatprep.subr.mxu0 0.0
    %2395 = vmatpush1.msra.mxu0 0.0
    %2396 = vmatprep.subr.mxu0 0.0
    %2397 = vmatpush1.msra.mxu0 0.0
    %2398 = vmatprep.subr.mxu0 0.0
    %2399 = vmatpush1.msra.mxu0 0.0
    %2400 = vmatprep.subr.mxu0 0.0
    %2401 = vmatpush1.msra.mxu0 0.0
    %2402 = vmatprep.subr.mxu0 0.0
    %2403 = vmatpush1.msra.mxu0 0.0
    %2404 = vmatprep.subr.mxu0 0.0
    %2405 = vmatpush1.msra.mxu0 0.0
    %2406 = vmatprep.mubr.f32.mxu0 0.0
    %2407 = vmatmul.mubr.f32.gmra.mrb[0].mxu0 %v2340
    %v2408 = vpop.f32.mrb[0].mxu0
    %v2409 = vadd.f32 0.0, %v2408
    %v2410 = vpop.f32.mrb[0].mxu0
    %2411 = vdwg.mxu0
    %v2413 = vrot.slane %v2409, 4
    %v2415 = vadd.f32 %v2084, %v2413
    %v2417 = vrot.slane %v2336, 2
    %v2420 = vrot.slane %v2415, 2
    %v2422 = vsel %vm534, %v2417, %v2420
    %v2423 = vmul.f32 %v2422, 0.5
    %v2424 = vtanh.pop %v2423
    %v2425 = vmul.f32 %v2424, 0.5
    %v2426 = vadd.f32 %v2425, 0.5
    %v2427 = vtanh.pop %v2422
    %v2428 = vmul.f32 %v2426, %v2251
    %2430 = vrot.lane.b32.xlu0 %v2427, 64
    %v2431 = vpop.permute.xlu0 %2430
    %v2433 = vmul.f32 %v2426, %v2431
    %2435 = vrot.lane.b32.xlu0 %v2433, 32
    %v2436 = vpop.permute.xlu0 %2435
    %v2438 = vadd.f32 %v2428, %v2436
    %v2439 = vtanh.pop %v2438
    %2441 = vrot.lane.b32.xlu0 %v2439, 64
    %v2442 = vpop.permute.xlu0 %2441
    %v2444 = vmul.f32 %v2426, %v2442
    %2446 = vrot.lane.b32.xlu0 %v2444, 32
    %v2447 = vpop.permute.xlu0 %2446
    %v2448 = vsel %vm143, %v2447, 0
    %2450 = vmatprep.subr.mxu0 0.0
    %2451 = vmatpush1.msra.mxu0 %v375
    %2452 = vmatprep.subr.mxu0 0.0
    %2453 = vmatpush1.msra.mxu0 %v376
    %2454 = vmatprep.subr.mxu0 0.0
    %2455 = vmatpush1.msra.mxu0 %v377
    %2456 = vmatprep.subr.mxu0 0.0
    %2457 = vmatpush1.msra.mxu0 %v378
    %2458 = vmatprep.subr.mxu0 0.0
    %2459 = vmatpush1.msra.mxu0 0.0
    %2460 = vmatprep.subr.mxu0 0.0
    %2461 = vmatpush1.msra.mxu0 0.0
    %2462 = vmatprep.subr.mxu0 0.0
    %2463 = vmatpush1.msra.mxu0 0.0
    %2464 = vmatprep.subr.mxu0 0.0
    %2465 = vmatpush1.msra.mxu0 0.0
    %2466 = vmatprep.subr.mxu0 0.0
    %2467 = vmatpush1.msra.mxu0 0.0
    %2468 = vmatprep.subr.mxu0 0.0
    %2469 = vmatpush1.msra.mxu0 0.0
    %2470 = vmatprep.subr.mxu0 0.0
    %2471 = vmatpush1.msra.mxu0 0.0
    %2472 = vmatprep.subr.mxu0 0.0
    %2473 = vmatpush1.msra.mxu0 0.0
    %2474 = vmatprep.subr.mxu0 0.0
    %2475 = vmatpush1.msra.mxu0 0.0
    %2476 = vmatprep.subr.mxu0 0.0
    %2477 = vmatpush1.msra.mxu0 0.0
    %2478 = vmatprep.subr.mxu0 0.0
    %2479 = vmatpush1.msra.mxu0 0.0
    %2480 = vmatprep.subr.mxu0 0.0
    %2481 = vmatpush1.msra.mxu0 0.0
    %2482 = vmatprep.subr.mxu0 0.0
    %2483 = vmatpush1.msra.mxu0 0.0
    %2484 = vmatprep.subr.mxu0 0.0
    %2485 = vmatpush1.msra.mxu0 0.0
    %2486 = vmatprep.subr.mxu0 0.0
    %2487 = vmatpush1.msra.mxu0 0.0
    %2488 = vmatprep.subr.mxu0 0.0
    %2489 = vmatpush1.msra.mxu0 0.0
    %2490 = vmatprep.subr.mxu0 0.0
    %2491 = vmatpush1.msra.mxu0 0.0
    %2492 = vmatprep.subr.mxu0 0.0
    %2493 = vmatpush1.msra.mxu0 0.0
    %2494 = vmatprep.subr.mxu0 0.0
    %2495 = vmatpush1.msra.mxu0 0.0
    %2496 = vmatprep.subr.mxu0 0.0
    %2497 = vmatpush1.msra.mxu0 0.0
    %2498 = vmatprep.subr.mxu0 0.0
    %2499 = vmatpush1.msra.mxu0 0.0
    %2500 = vmatprep.subr.mxu0 0.0
    %2501 = vmatpush1.msra.mxu0 0.0
    %2502 = vmatprep.subr.mxu0 0.0
    %2503 = vmatpush1.msra.mxu0 0.0
    %2504 = vmatprep.subr.mxu0 0.0
    %2505 = vmatpush1.msra.mxu0 0.0
    %2506 = vmatprep.subr.mxu0 0.0
    %2507 = vmatpush1.msra.mxu0 0.0
    %2508 = vmatprep.subr.mxu0 0.0
    %2509 = vmatpush1.msra.mxu0 0.0
    %2510 = vmatprep.subr.mxu0 0.0
    %2511 = vmatpush1.msra.mxu0 0.0
    %2512 = vmatprep.subr.mxu0 0.0
    %2513 = vmatpush1.msra.mxu0 0.0
    %2514 = vmatprep.mubr.f32.mxu0 0.0
    %2515 = vmatmul.mubr.f32.gmra.mrb[0].mxu0 %v2448
    %v2516 = vpop.f32.mrb[0].mxu0
    %v2517 = vadd.f32 0.0, %v2516
    %v2518 = vpop.f32.mrb[0].mxu0
    %2519 = vdwg.mxu0
    %v2521 = vrot.slane %v2517, 4
    %v2523 = vadd.f32 %v1989, %v2521
    %v2524 = vrot.slane %v2444, 2
    %2525 = vrot.lane.b32.xlu0 %v2524, 32
    %v2526 = vpop.permute.xlu0 %2525
    %v2527 = vsel %vm143, %v2526, 0
    %2529 = vmatprep.subr.mxu0 0.0
    %2530 = vmatpush1.msra.mxu0 %v379
    %2531 = vmatprep.subr.mxu0 0.0
    %2532 = vmatpush1.msra.mxu0 %v380
    %2533 = vmatprep.subr.mxu0 0.0
    %2534 = vmatpush1.msra.mxu0 %v381
    %2535 = vmatprep.subr.mxu0 0.0
    %2536 = vmatpush1.msra.mxu0 %v382
    %2537 = vmatprep.subr.mxu0 0.0
    %2538 = vmatpush1.msra.mxu0 0.0
    %2539 = vmatprep.subr.mxu0 0.0
    %2540 = vmatpush1.msra.mxu0 0.0
    %2541 = vmatprep.subr.mxu0 0.0
    %2542 = vmatpush1.msra.mxu0 0.0
    %2543 = vmatprep.subr.mxu0 0.0
    %2544 = vmatpush1.msra.mxu0 0.0
    %2545 = vmatprep.subr.mxu0 0.0
    %2546 = vmatpush1.msra.mxu0 0.0
    %2547 = vmatprep.subr.mxu0 0.0
    %2548 = vmatpush1.msra.mxu0 0.0
    %2549 = vmatprep.subr.mxu0 0.0
    %2550 = vmatpush1.msra.mxu0 0.0
    %2551 = vmatprep.subr.mxu0 0.0
    %2552 = vmatpush1.msra.mxu0 0.0
    %2553 = vmatprep.subr.mxu0 0.0
    %2554 = vmatpush1.msra.mxu0 0.0
    %2555 = vmatprep.subr.mxu0 0.0
    %2556 = vmatpush1.msra.mxu0 0.0
    %2557 = vmatprep.subr.mxu0 0.0
    %2558 = vmatpush1.msra.mxu0 0.0
    %2559 = vmatprep.subr.mxu0 0.0
    %2560 = vmatpush1.msra.mxu0 0.0
    %2561 = vmatprep.subr.mxu0 0.0
    %2562 = vmatpush1.msra.mxu0 0.0
    %2563 = vmatprep.subr.mxu0 0.0
    %2564 = vmatpush1.msra.mxu0 0.0
    %2565 = vmatprep.subr.mxu0 0.0
    %2566 = vmatpush1.msra.mxu0 0.0
    %2567 = vmatprep.subr.mxu0 0.0
    %2568 = vmatpush1.msra.mxu0 0.0
    %2569 = vmatprep.subr.mxu0 0.0
    %2570 = vmatpush1.msra.mxu0 0.0
    %2571 = vmatprep.subr.mxu0 0.0
    %2572 = vmatpush1.msra.mxu0 0.0
    %2573 = vmatprep.subr.mxu0 0.0
    %2574 = vmatpush1.msra.mxu0 0.0
    %2575 = vmatprep.subr.mxu0 0.0
    %2576 = vmatpush1.msra.mxu0 0.0
    %2577 = vmatprep.subr.mxu0 0.0
    %2578 = vmatpush1.msra.mxu0 0.0
    %2579 = vmatprep.subr.mxu0 0.0
    %2580 = vmatpush1.msra.mxu0 0.0
    %2581 = vmatprep.subr.mxu0 0.0
    %2582 = vmatpush1.msra.mxu0 0.0
    %2583 = vmatprep.subr.mxu0 0.0
    %2584 = vmatpush1.msra.mxu0 0.0
    %2585 = vmatprep.subr.mxu0 0.0
    %2586 = vmatpush1.msra.mxu0 0.0
    %2587 = vmatprep.subr.mxu0 0.0
    %2588 = vmatpush1.msra.mxu0 0.0
    %2589 = vmatprep.subr.mxu0 0.0
    %2590 = vmatpush1.msra.mxu0 0.0
    %2591 = vmatprep.subr.mxu0 0.0
    %2592 = vmatpush1.msra.mxu0 0.0
    %2593 = vmatprep.mubr.f32.mxu0 0.0
    %2594 = vmatmul.mubr.f32.gmra.mrb[0].mxu0 %v2527
    %v2595 = vpop.f32.mrb[0].mxu0
    %v2596 = vadd.f32 0.0, %v2595
    %v2597 = vpop.f32.mrb[0].mxu0
    %2598 = vdwg.mxu0
    %v2600 = vrot.slane %v2596, 6
    %v2602 = vadd.f32 %v2084, %v2600
    %v2604 = vrot.slane %v2523, 4
    %v2606 = vsel %vm534, %v2604, %v2602
    %v2607 = vmul.f32 %v2606, 0.5
    %v2608 = vtanh.pop %v2607
    %v2609 = vmul.f32 %v2608, 0.5
    %v2610 = vadd.f32 %v2609, 0.5
    %v2611 = vtanh.pop %v2606
    %v2612 = vmul.f32 %v2610, %v2438
    %2614 = vrot.lane.b32.xlu0 %v2611, 64
    %v2615 = vpop.permute.xlu0 %2614
    %v2617 = vmul.f32 %v2610, %v2615
    %2619 = vrot.lane.b32.xlu0 %v2617, 32
    %v2620 = vpop.permute.xlu0 %2619
    %v2622 = vadd.f32 %v2612, %v2620
    %v2623 = vtanh.pop %v2622
    %2625 = vrot.lane.b32.xlu0 %v2623, 64
    %v2626 = vpop.permute.xlu0 %2625
    %v2628 = vmul.f32 %v2610, %v2626
    %2630 = vrot.lane.b32.xlu0 %v2628, 32
    %v2631 = vpop.permute.xlu0 %2630
    %v2632 = vsel %vm143, %v2631, 0
    %2634 = vmatprep.subr.mxu0 0.0
    %2635 = vmatpush1.msra.mxu0 %v375
    %2636 = vmatprep.subr.mxu0 0.0
    %2637 = vmatpush1.msra.mxu0 %v376
    %2638 = vmatprep.subr.mxu0 0.0
    %2639 = vmatpush1.msra.mxu0 %v377
    %2640 = vmatprep.subr.mxu0 0.0
    %2641 = vmatpush1.msra.mxu0 %v378
    %2642 = vmatprep.subr.mxu0 0.0
    %2643 = vmatpush1.msra.mxu0 0.0
    %2644 = vmatprep.subr.mxu0 0.0
    %2645 = vmatpush1.msra.mxu0 0.0
    %2646 = vmatprep.subr.mxu0 0.0
    %2647 = vmatpush1.msra.mxu0 0.0
    %2648 = vmatprep.subr.mxu0 0.0
    %2649 = vmatpush1.msra.mxu0 0.0
    %2650 = vmatprep.subr.mxu0 0.0
    %2651 = vmatpush1.msra.mxu0 0.0
    %2652 = vmatprep.subr.mxu0 0.0
    %2653 = vmatpush1.msra.mxu0 0.0
    %2654 = vmatprep.subr.mxu0 0.0
    %2655 = vmatpush1.msra.mxu0 0.0
    %2656 = vmatprep.subr.mxu0 0.0
    %2657 = vmatpush1.msra.mxu0 0.0
    %2658 = vmatprep.subr.mxu0 0.0
    %2659 = vmatpush1.msra.mxu0 0.0
    %2660 = vmatprep.subr.mxu0 0.0
    %2661 = vmatpush1.msra.mxu0 0.0
    %2662 = vmatprep.subr.mxu0 0.0
    %2663 = vmatpush1.msra.mxu0 0.0
    %2664 = vmatprep.subr.mxu0 0.0
    %2665 = vmatpush1.msra.mxu0 0.0
    %2666 = vmatprep.subr.mxu0 0.0
    %2667 = vmatpush1.msra.mxu0 0.0
    %2668 = vmatprep.subr.mxu0 0.0
    %2669 = vmatpush1.msra.mxu0 0.0
    %2670 = vmatprep.subr.mxu0 0.0
    %2671 = vmatpush1.msra.mxu0 0.0
    %2672 = vmatprep.subr.mxu0 0.0
    %2673 = vmatpush1.msra.mxu0 0.0
    %2674 = vmatprep.subr.mxu0 0.0
    %2675 = vmatpush1.msra.mxu0 0.0
    %2676 = vmatprep.subr.mxu0 0.0
    %2677 = vmatpush1.msra.mxu0 0.0
    %2678 = vmatprep.subr.mxu0 0.0
    %2679 = vmatpush1.msra.mxu0 0.0
    %2680 = vmatprep.subr.mxu0 0.0
    %2681 = vmatpush1.msra.mxu0 0.0
    %2682 = vmatprep.subr.mxu0 0.0
    %2683 = vmatpush1.msra.mxu0 0.0
    %2684 = vmatprep.subr.mxu0 0.0
    %2685 = vmatpush1.msra.mxu0 0.0
    %2686 = vmatprep.subr.mxu0 0.0
    %2687 = vmatpush1.msra.mxu0 0.0
    %2688 = vmatprep.subr.mxu0 0.0
    %2689 = vmatpush1.msra.mxu0 0.0
    %2690 = vmatprep.subr.mxu0 0.0
    %2691 = vmatpush1.msra.mxu0 0.0
    %2692 = vmatprep.subr.mxu0 0.0
    %2693 = vmatpush1.msra.mxu0 0.0
    %2694 = vmatprep.subr.mxu0 0.0
    %2695 = vmatpush1.msra.mxu0 0.0
    %2696 = vmatprep.subr.mxu0 0.0
    %2697 = vmatpush1.msra.mxu0 0.0
    %2698 = vmatprep.mubr.f32.mxu0 0.0
    %2699 = vmatmul.mubr.f32.gmra.mrb[0].mxu0 %v2632
    %v2700 = vpop.f32.mrb[0].mxu0
    %v2701 = vadd.f32 0.0, %v2700
    %v2702 = vpop.f32.mrb[0].mxu0
    %2703 = vdwg.mxu0
    %v2705 = vrot.slane %v2701, 2
    %v2707 = vadd.f32 %v1989, %v2705
    %v2708 = vrot.slane %v2628, 2
    %2709 = vrot.lane.b32.xlu0 %v2708, 32
    %v2710 = vpop.permute.xlu0 %2709
    %v2711 = vsel %vm143, %v2710, 0
    %2713 = vmatprep.subr.mxu0 0.0
    %2714 = vmatpush1.msra.mxu0 %v379
    %2715 = vmatprep.subr.mxu0 0.0
    %2716 = vmatpush1.msra.mxu0 %v380
    %2717 = vmatprep.subr.mxu0 0.0
    %2718 = vmatpush1.msra.mxu0 %v381
    %2719 = vmatprep.subr.mxu0 0.0
    %2720 = vmatpush1.msra.mxu0 %v382
    %2721 = vmatprep.subr.mxu0 0.0
    %2722 = vmatpush1.msra.mxu0 0.0
    %2723 = vmatprep.subr.mxu0 0.0
    %2724 = vmatpush1.msra.mxu0 0.0
    %2725 = vmatprep.subr.mxu0 0.0
    %2726 = vmatpush1.msra.mxu0 0.0
    %2727 = vmatprep.subr.mxu0 0.0
    %2728 = vmatpush1.msra.mxu0 0.0
    %2729 = vmatprep.subr.mxu0 0.0
    %2730 = vmatpush1.msra.mxu0 0.0
    %2731 = vmatprep.subr.mxu0 0.0
    %2732 = vmatpush1.msra.mxu0 0.0
    %2733 = vmatprep.subr.mxu0 0.0
    %2734 = vmatpush1.msra.mxu0 0.0
    %2735 = vmatprep.subr.mxu0 0.0
    %2736 = vmatpush1.msra.mxu0 0.0
    %2737 = vmatprep.subr.mxu0 0.0
    %2738 = vmatpush1.msra.mxu0 0.0
    %2739 = vmatprep.subr.mxu0 0.0
    %2740 = vmatpush1.msra.mxu0 0.0
    %2741 = vmatprep.subr.mxu0 0.0
    %2742 = vmatpush1.msra.mxu0 0.0
    %2743 = vmatprep.subr.mxu0 0.0
    %2744 = vmatpush1.msra.mxu0 0.0
    %2745 = vmatprep.subr.mxu0 0.0
    %2746 = vmatpush1.msra.mxu0 0.0
    %2747 = vmatprep.subr.mxu0 0.0
    %2748 = vmatpush1.msra.mxu0 0.0
    %2749 = vmatprep.subr.mxu0 0.0
    %2750 = vmatpush1.msra.mxu0 0.0
    %2751 = vmatprep.subr.mxu0 0.0
    %2752 = vmatpush1.msra.mxu0 0.0
    %2753 = vmatprep.subr.mxu0 0.0
    %2754 = vmatpush1.msra.mxu0 0.0
    %2755 = vmatprep.subr.mxu0 0.0
    %2756 = vmatpush1.msra.mxu0 0.0
    %2757 = vmatprep.subr.mxu0 0.0
    %2758 = vmatpush1.msra.mxu0 0.0
    %2759 = vmatprep.subr.mxu0 0.0
    %2760 = vmatpush1.msra.mxu0 0.0
    %2761 = vmatprep.subr.mxu0 0.0
    %2762 = vmatpush1.msra.mxu0 0.0
    %2763 = vmatprep.subr.mxu0 0.0
    %2764 = vmatpush1.msra.mxu0 0.0
    %2765 = vmatprep.subr.mxu0 0.0
    %2766 = vmatpush1.msra.mxu0 0.0
    %2767 = vmatprep.subr.mxu0 0.0
    %2768 = vmatpush1.msra.mxu0 0.0
    %2769 = vmatprep.subr.mxu0 0.0
    %2770 = vmatpush1.msra.mxu0 0.0
    %2771 = vmatprep.subr.mxu0 0.0
    %2772 = vmatpush1.msra.mxu0 0.0
    %2773 = vmatprep.subr.mxu0 0.0
    %2774 = vmatpush1.msra.mxu0 0.0
    %2775 = vmatprep.subr.mxu0 0.0
    %2776 = vmatpush1.msra.mxu0 0.0
    %2777 = vmatprep.mubr.f32.mxu0 0.0
    %2778 = vmatmul.mubr.f32.gmra.mrb[0].mxu0 %v2711
    %v2779 = vpop.f32.mrb[0].mxu0
    %v2780 = vadd.f32 0.0, %v2779
    %v2781 = vpop.f32.mrb[0].mxu0
    %2782 = vdwg.mxu0
    %v2783 = vadd.f32 %v2084, %v2780
    %v2785 = vrot.slane %v2707, 6
    %v2788 = vrot.slane %v2783, 6
    %v2790 = vsel %vm534, %v2785, %v2788
    %v2791 = vmul.f32 %v2790, 0.5
    %v2792 = vtanh.pop %v2791
    %v2793 = vmul.f32 %v2792, 0.5
    %v2794 = vadd.f32 %v2793, 0.5
    %v2795 = vtanh.pop %v2790
    %v2796 = vmul.f32 %v2794, %v2622
    %2798 = vrot.lane.b32.xlu0 %v2795, 64
    %v2799 = vpop.permute.xlu0 %2798
    %v2801 = vmul.f32 %v2794, %v2799
    %2803 = vrot.lane.b32.xlu0 %v2801, 32
    %v2804 = vpop.permute.xlu0 %2803
    %v2806 = vadd.f32 %v2796, %v2804
    %v2807 = vtanh.pop %v2806
    %2809 = vrot.lane.b32.xlu0 %v2807, 64
    %v2810 = vpop.permute.xlu0 %2809
    %v2812 = vmul.f32 %v2794, %v2810
    %2814 = vrot.lane.b32.xlu0 %v2812, 32
    %v2815 = vpop.permute.xlu0 %2814
    %v2816 = vsel %vm143, %v2815, 0
    %2818 = vmatprep.subr.mxu0 0.0
    %2819 = vmatpush1.msra.mxu0 %v375
    %2820 = vmatprep.subr.mxu0 0.0
    %2821 = vmatpush1.msra.mxu0 %v376
    %2822 = vmatprep.subr.mxu0 0.0
    %2823 = vmatpush1.msra.mxu0 %v377
    %2824 = vmatprep.subr.mxu0 0.0
    %2825 = vmatpush1.msra.mxu0 %v378
    %2826 = vmatprep.subr.mxu0 0.0
    %2827 = vmatpush1.msra.mxu0 0.0
    %2828 = vmatprep.subr.mxu0 0.0
    %2829 = vmatpush1.msra.mxu0 0.0
    %2830 = vmatprep.subr.mxu0 0.0
    %2831 = vmatpush1.msra.mxu0 0.0
    %2832 = vmatprep.subr.mxu0 0.0
    %2833 = vmatpush1.msra.mxu0 0.0
    %2834 = vmatprep.subr.mxu0 0.0
    %2835 = vmatpush1.msra.mxu0 0.0
    %2836 = vmatprep.subr.mxu0 0.0
    %2837 = vmatpush1.msra.mxu0 0.0
    %2838 = vmatprep.subr.mxu0 0.0
    %2839 = vmatpush1.msra.mxu0 0.0
    %2840 = vmatprep.subr.mxu0 0.0
    %2841 = vmatpush1.msra.mxu0 0.0
    %2842 = vmatprep.subr.mxu0 0.0
    %2843 = vmatpush1.msra.mxu0 0.0
    %2844 = vmatprep.subr.mxu0 0.0
    %2845 = vmatpush1.msra.mxu0 0.0
    %2846 = vmatprep.subr.mxu0 0.0
    %2847 = vmatpush1.msra.mxu0 0.0
    %2848 = vmatprep.subr.mxu0 0.0
    %2849 = vmatpush1.msra.mxu0 0.0
    %2850 = vmatprep.subr.mxu0 0.0
    %2851 = vmatpush1.msra.mxu0 0.0
    %2852 = vmatprep.subr.mxu0 0.0
    %2853 = vmatpush1.msra.mxu0 0.0
    %2854 = vmatprep.subr.mxu0 0.0
    %2855 = vmatpush1.msra.mxu0 0.0
    %2856 = vmatprep.subr.mxu0 0.0
    %2857 = vmatpush1.msra.mxu0 0.0
    %2858 = vmatprep.subr.mxu0 0.0
    %2859 = vmatpush1.msra.mxu0 0.0
    %2860 = vmatprep.subr.mxu0 0.0
    %2861 = vmatpush1.msra.mxu0 0.0
    %2862 = vmatprep.subr.mxu0 0.0
    %2863 = vmatpush1.msra.mxu0 0.0
    %2864 = vmatprep.subr.mxu0 0.0
    %2865 = vmatpush1.msra.mxu0 0.0
    %2866 = vmatprep.subr.mxu0 0.0
    %2867 = vmatpush1.msra.mxu0 0.0
    %2868 = vmatprep.subr.mxu0 0.0
    %2869 = vmatpush1.msra.mxu0 0.0
    %2870 = vmatprep.subr.mxu0 0.0
    %2871 = vmatpush1.msra.mxu0 0.0
    %2872 = vmatprep.subr.mxu0 0.0
    %2873 = vmatpush1.msra.mxu0 0.0
    %2874 = vmatprep.subr.mxu0 0.0
    %2875 = vmatpush1.msra.mxu0 0.0
    %2876 = vmatprep.subr.mxu0 0.0
    %2877 = vmatpush1.msra.mxu0 0.0
    %2878 = vmatprep.subr.mxu0 0.0
    %2879 = vmatpush1.msra.mxu0 0.0
    %2880 = vmatprep.subr.mxu0 0.0
    %2881 = vmatpush1.msra.mxu0 0.0
    %2882 = vmatprep.mubr.f32.mxu0 0.0
    %2883 = vmatmul.mubr.f32.gmra.mrb[0].mxu0 %v2816
    %v2884 = vpop.f32.mrb[0].mxu0
    %v2885 = vadd.f32 0.0, %v2884
    %v2886 = vpop.f32.mrb[0].mxu0
    %2887 = vdwg.mxu0
    %v2888 = vadd.f32 %v1994, %v2885
    %v2889 = vrot.slane %v2812, 2
    %2890 = vrot.lane.b32.xlu0 %v2889, 32
    %v2891 = vpop.permute.xlu0 %2890
    %v2892 = vsel %vm143, %v2891, 0
    %2894 = vmatprep.subr.mxu0 0.0
    %2895 = vmatpush1.msra.mxu0 %v379
    %2896 = vmatprep.subr.mxu0 0.0
    %2897 = vmatpush1.msra.mxu0 %v380
    %2898 = vmatprep.subr.mxu0 0.0
    %2899 = vmatpush1.msra.mxu0 %v381
    %2900 = vmatprep.subr.mxu0 0.0
    %2901 = vmatpush1.msra.mxu0 %v382
    %2902 = vmatprep.subr.mxu0 0.0
    %2903 = vmatpush1.msra.mxu0 0.0
    %2904 = vmatprep.subr.mxu0 0.0
    %2905 = vmatpush1.msra.mxu0 0.0
    %2906 = vmatprep.subr.mxu0 0.0
    %2907 = vmatpush1.msra.mxu0 0.0
    %2908 = vmatprep.subr.mxu0 0.0
    %2909 = vmatpush1.msra.mxu0 0.0
    %2910 = vmatprep.subr.mxu0 0.0
    %2911 = vmatpush1.msra.mxu0 0.0
    %2912 = vmatprep.subr.mxu0 0.0
    %2913 = vmatpush1.msra.mxu0 0.0
    %2914 = vmatprep.subr.mxu0 0.0
    %2915 = vmatpush1.msra.mxu0 0.0
    %2916 = vmatprep.subr.mxu0 0.0
    %2917 = vmatpush1.msra.mxu0 0.0
    %2918 = vmatprep.subr.mxu0 0.0
    %2919 = vmatpush1.msra.mxu0 0.0
    %2920 = vmatprep.subr.mxu0 0.0
    %2921 = vmatpush1.msra.mxu0 0.0
    %2922 = vmatprep.subr.mxu0 0.0
    %2923 = vmatpush1.msra.mxu0 0.0
    %2924 = vmatprep.subr.mxu0 0.0
    %2925 = vmatpush1.msra.mxu0 0.0
    %2926 = vmatprep.subr.mxu0 0.0
    %2927 = vmatpush1.msra.mxu0 0.0
    %2928 = vmatprep.subr.mxu0 0.0
    %2929 = vmatpush1.msra.mxu0 0.0
    %2930 = vmatprep.subr.mxu0 0.0
    %2931 = vmatpush1.msra.mxu0 0.0
    %2932 = vmatprep.subr.mxu0 0.0
    %2933 = vmatpush1.msra.mxu0 0.0
    %2934 = vmatprep.subr.mxu0 0.0
    %2935 = vmatpush1.msra.mxu0 0.0
    %2936 = vmatprep.subr.mxu0 0.0
    %2937 = vmatpush1.msra.mxu0 0.0
    %2938 = vmatprep.subr.mxu0 0.0
    %2939 = vmatpush1.msra.mxu0 0.0
    %2940 = vmatprep.subr.mxu0 0.0
    %2941 = vmatpush1.msra.mxu0 0.0
    %2942 = vmatprep.subr.mxu0 0.0
    %2943 = vmatpush1.msra.mxu0 0.0
    %2944 = vmatprep.subr.mxu0 0.0
    %2945 = vmatpush1.msra.mxu0 0.0
    %2946 = vmatprep.subr.mxu0 0.0
    %2947 = vmatpush1.msra.mxu0 0.0
    %2948 = vmatprep.subr.mxu0 0.0
    %2949 = vmatpush1.msra.mxu0 0.0
    %2950 = vmatprep.subr.mxu0 0.0
    %2951 = vmatpush1.msra.mxu0 0.0
    %2952 = vmatprep.subr.mxu0 0.0
    %2953 = vmatpush1.msra.mxu0 0.0
    %2954 = vmatprep.subr.mxu0 0.0
    %2955 = vmatpush1.msra.mxu0 0.0
    %2956 = vmatprep.subr.mxu0 0.0
    %2957 = vmatpush1.msra.mxu0 0.0
    %2958 = vmatprep.mubr.f32.mxu0 0.0
    %2959 = vmatmul.mubr.f32.gmra.mrb[0].mxu0 %v2892
    %v2960 = vpop.f32.mrb[0].mxu0
    %v2961 = vadd.f32 0.0, %v2960
    %v2962 = vpop.f32.mrb[0].mxu0
    %2963 = vdwg.mxu0
    %v2965 = vrot.slane %v2961, 2
    %v2967 = vadd.f32 %v2079, %v2965
    %v2969 = vrot.slane %v2967, 4
    %v2971 = vsel %vm534, %v2888, %v2969
    %v2972 = vmul.f32 %v2971, 0.5
    %v2973 = vtanh.pop %v2972
    %v2974 = vmul.f32 %v2973, 0.5
    %v2975 = vadd.f32 %v2974, 0.5
    %v2976 = vtanh.pop %v2971
    %v2977 = vmul.f32 %v2975, %v2806
    %2979 = vrot.lane.b32.xlu0 %v2976, 64
    %v2980 = vpop.permute.xlu0 %2979
    %v2982 = vmul.f32 %v2975, %v2980
    %2984 = vrot.lane.b32.xlu0 %v2982, 32
    %v2985 = vpop.permute.xlu0 %2984
    %v2987 = vadd.f32 %v2977, %v2985
    %v2988 = vtanh.pop %v2987
    %2990 = vrot.lane.b32.xlu0 %v2988, 64
    %v2991 = vpop.permute.xlu0 %2990
    %v2993 = vmul.f32 %v2975, %v2991
    %2995 = vrot.lane.b32.xlu0 %v2993, 32
    %v2996 = vpop.permute.xlu0 %2995
    %v2997 = vsel %vm143, %v2996, 0
    %2999 = vmatprep.subr.mxu0 0.0
    %3000 = vmatpush1.msra.mxu0 %v375
    %3001 = vmatprep.subr.mxu0 0.0
    %3002 = vmatpush1.msra.mxu0 %v376
    %3003 = vmatprep.subr.mxu0 0.0
    %3004 = vmatpush1.msra.mxu0 %v377
    %3005 = vmatprep.subr.mxu0 0.0
    %3006 = vmatpush1.msra.mxu0 %v378
    %3007 = vmatprep.subr.mxu0 0.0
    %3008 = vmatpush1.msra.mxu0 0.0
    %3009 = vmatprep.subr.mxu0 0.0
    %3010 = vmatpush1.msra.mxu0 0.0
    %3011 = vmatprep.subr.mxu0 0.0
    %3012 = vmatpush1.msra.mxu0 0.0
    %3013 = vmatprep.subr.mxu0 0.0
    %3014 = vmatpush1.msra.mxu0 0.0
    %3015 = vmatprep.subr.mxu0 0.0
    %3016 = vmatpush1.msra.mxu0 0.0
    %3017 = vmatprep.subr.mxu0 0.0
    %3018 = vmatpush1.msra.mxu0 0.0
    %3019 = vmatprep.subr.mxu0 0.0
    %3020 = vmatpush1.msra.mxu0 0.0
    %3021 = vmatprep.subr.mxu0 0.0
    %3022 = vmatpush1.msra.mxu0 0.0
    %3023 = vmatprep.subr.mxu0 0.0
    %3024 = vmatpush1.msra.mxu0 0.0
    %3025 = vmatprep.subr.mxu0 0.0
    %3026 = vmatpush1.msra.mxu0 0.0
    %3027 = vmatprep.subr.mxu0 0.0
    %3028 = vmatpush1.msra.mxu0 0.0
    %3029 = vmatprep.subr.mxu0 0.0
    %3030 = vmatpush1.msra.mxu0 0.0
    %3031 = vmatprep.subr.mxu0 0.0
    %3032 = vmatpush1.msra.mxu0 0.0
    %3033 = vmatprep.subr.mxu0 0.0
    %3034 = vmatpush1.msra.mxu0 0.0
    %3035 = vmatprep.subr.mxu0 0.0
    %3036 = vmatpush1.msra.mxu0 0.0
    %3037 = vmatprep.subr.mxu0 0.0
    %3038 = vmatpush1.msra.mxu0 0.0
    %3039 = vmatprep.subr.mxu0 0.0
    %3040 = vmatpush1.msra.mxu0 0.0
    %3041 = vmatprep.subr.mxu0 0.0
    %3042 = vmatpush1.msra.mxu0 0.0
    %3043 = vmatprep.subr.mxu0 0.0
    %3044 = vmatpush1.msra.mxu0 0.0
    %3045 = vmatprep.subr.mxu0 0.0
    %3046 = vmatpush1.msra.mxu0 0.0
    %3047 = vmatprep.subr.mxu0 0.0
    %3048 = vmatpush1.msra.mxu0 0.0
    %3049 = vmatprep.subr.mxu0 0.0
    %3050 = vmatpush1.msra.mxu0 0.0
    %3051 = vmatprep.subr.mxu0 0.0
    %3052 = vmatpush1.msra.mxu0 0.0
    %3053 = vmatprep.subr.mxu0 0.0
    %3054 = vmatpush1.msra.mxu0 0.0
    %3055 = vmatprep.subr.mxu0 0.0
    %3056 = vmatpush1.msra.mxu0 0.0
    %3057 = vmatprep.subr.mxu0 0.0
    %3058 = vmatpush1.msra.mxu0 0.0
    %3059 = vmatprep.subr.mxu0 0.0
    %3060 = vmatpush1.msra.mxu0 0.0
    %3061 = vmatprep.subr.mxu0 0.0
    %3062 = vmatpush1.msra.mxu0 0.0
    %3063 = vmatprep.mubr.f32.mxu0 0.0
    %3064 = vmatmul.mubr.f32.gmra.mrb[0].mxu0 %v2997
    %v3065 = vpop.f32.mrb[0].mxu0
    %v3066 = vadd.f32 0.0, %v3065
    %v3067 = vpop.f32.mrb[0].mxu0
    %3068 = vdwg.mxu0
    %v3070 = vrot.slane %v3066, 6
    %v3072 = vadd.f32 %v1994, %v3070
    %v3073 = vrot.slane %v2993, 2
    %3074 = vrot.lane.b32.xlu0 %v3073, 32
    %v3075 = vpop.permute.xlu0 %3074
    %v3076 = vsel %vm143, %v3075, 0
    %3078 = vmatprep.subr.mxu0 0.0
    %3079 = vmatpush1.msra.mxu0 %v379
    %3080 = vmatprep.subr.mxu0 0.0
    %3081 = vmatpush1.msra.mxu0 %v380
    %3082 = vmatprep.subr.mxu0 0.0
    %3083 = vmatpush1.msra.mxu0 %v381
    %3084 = vmatprep.subr.mxu0 0.0
    %3085 = vmatpush1.msra.mxu0 %v382
    %3086 = vmatprep.subr.mxu0 0.0
    %3087 = vmatpush1.msra.mxu0 0.0
    %3088 = vmatprep.subr.mxu0 0.0
    %3089 = vmatpush1.msra.mxu0 0.0
    %3090 = vmatprep.subr.mxu0 0.0
    %3091 = vmatpush1.msra.mxu0 0.0
    %3092 = vmatprep.subr.mxu0 0.0
    %3093 = vmatpush1.msra.mxu0 0.0
    %3094 = vmatprep.subr.mxu0 0.0
    %3095 = vmatpush1.msra.mxu0 0.0
    %3096 = vmatprep.subr.mxu0 0.0
    %3097 = vmatpush1.msra.mxu0 0.0
    %3098 = vmatprep.subr.mxu0 0.0
    %3099 = vmatpush1.msra.mxu0 0.0
    %3100 = vmatprep.subr.mxu0 0.0
    %3101 = vmatpush1.msra.mxu0 0.0
    %3102 = vmatprep.subr.mxu0 0.0
    %3103 = vmatpush1.msra.mxu0 0.0
    %3104 = vmatprep.subr.mxu0 0.0
    %3105 = vmatpush1.msra.mxu0 0.0
    %3106 = vmatprep.subr.mxu0 0.0
    %3107 = vmatpush1.msra.mxu0 0.0
    %3108 = vmatprep.subr.mxu0 0.0
    %3109 = vmatpush1.msra.mxu0 0.0
    %3110 = vmatprep.subr.mxu0 0.0
    %3111 = vmatpush1.msra.mxu0 0.0
    %3112 = vmatprep.subr.mxu0 0.0
    %3113 = vmatpush1.msra.mxu0 0.0
    %3114 = vmatprep.subr.mxu0 0.0
    %3115 = vmatpush1.msra.mxu0 0.0
    %3116 = vmatprep.subr.mxu0 0.0
    %3117 = vmatpush1.msra.mxu0 0.0
    %3118 = vmatprep.subr.mxu0 0.0
    %3119 = vmatpush1.msra.mxu0 0.0
    %3120 = vmatprep.subr.mxu0 0.0
    %3121 = vmatpush1.msra.mxu0 0.0
    %3122 = vmatprep.subr.mxu0 0.0
    %3123 = vmatpush1.msra.mxu0 0.0
    %3124 = vmatprep.subr.mxu0 0.0
    %3125 = vmatpush1.msra.mxu0 0.0
    %3126 = vmatprep.subr.mxu0 0.0
    %3127 = vmatpush1.msra.mxu0 0.0
    %3128 = vmatprep.subr.mxu0 0.0
    %3129 = vmatpush1.msra.mxu0 0.0
    %3130 = vmatprep.subr.mxu0 0.0
    %3131 = vmatpush1.msra.mxu0 0.0
    %3132 = vmatprep.subr.mxu0 0.0
    %3133 = vmatpush1.msra.mxu0 0.0
    %3134 = vmatprep.subr.mxu0 0.0
    %3135 = vmatpush1.msra.mxu0 0.0
    %3136 = vmatprep.subr.mxu0 0.0
    %3137 = vmatpush1.msra.mxu0 0.0
    %3138 = vmatprep.subr.mxu0 0.0
    %3139 = vmatpush1.msra.mxu0 0.0
    %3140 = vmatprep.subr.mxu0 0.0
    %3141 = vmatpush1.msra.mxu0 0.0
    %3142 = vmatprep.mubr.f32.mxu0 0.0
    %3143 = vmatmul.mubr.f32.gmra.mrb[0].mxu0 %v3076
    %v3144 = vpop.f32.mrb[0].mxu0
    %v3145 = vadd.f32 0.0, %v3144
    %v3146 = vpop.f32.mrb[0].mxu0
    %3147 = vdwg.mxu0
    %v3149 = vrot.slane %v3145, 4
    %v3151 = vadd.f32 %v2079, %v3149
    %v3153 = vrot.slane %v3072, 2
    %v3156 = vrot.slane %v3151, 2
    %v3158 = vsel %vm534, %v3153, %v3156
    %v3159 = vmul.f32 %v3158, 0.5
    %v3160 = vtanh.pop %v3159
    %v3161 = vmul.f32 %v3160, 0.5
    %v3162 = vadd.f32 %v3161, 0.5
    %v3163 = vtanh.pop %v3158
    %v3164 = vmul.f32 %v3162, %v2987
    %3166 = vrot.lane.b32.xlu0 %v3163, 64
    %v3167 = vpop.permute.xlu0 %3166
    %v3169 = vmul.f32 %v3162, %v3167
    %3171 = vrot.lane.b32.xlu0 %v3169, 32
    %v3172 = vpop.permute.xlu0 %3171
    %v3174 = vadd.f32 %v3164, %v3172
    %v3175 = vtanh.pop %v3174
    %3177 = vrot.lane.b32.xlu0 %v3175, 64
    %v3178 = vpop.permute.xlu0 %3177
    %v3180 = vmul.f32 %v3162, %v3178
    %3182 = vrot.lane.b32.xlu0 %v3180, 32
    %v3183 = vpop.permute.xlu0 %3182
    %v3184 = vsel %vm143, %v3183, 0
    %3186 = vmatprep.subr.mxu0 0.0
    %3187 = vmatpush1.msra.mxu0 %v375
    %3188 = vmatprep.subr.mxu0 0.0
    %3189 = vmatpush1.msra.mxu0 %v376
    %3190 = vmatprep.subr.mxu0 0.0
    %3191 = vmatpush1.msra.mxu0 %v377
    %3192 = vmatprep.subr.mxu0 0.0
    %3193 = vmatpush1.msra.mxu0 %v378
    %3194 = vmatprep.subr.mxu0 0.0
    %3195 = vmatpush1.msra.mxu0 0.0
    %3196 = vmatprep.subr.mxu0 0.0
    %3197 = vmatpush1.msra.mxu0 0.0
    %3198 = vmatprep.subr.mxu0 0.0
    %3199 = vmatpush1.msra.mxu0 0.0
    %3200 = vmatprep.subr.mxu0 0.0
    %3201 = vmatpush1.msra.mxu0 0.0
    %3202 = vmatprep.subr.mxu0 0.0
    %3203 = vmatpush1.msra.mxu0 0.0
    %3204 = vmatprep.subr.mxu0 0.0
    %3205 = vmatpush1.msra.mxu0 0.0
    %3206 = vmatprep.subr.mxu0 0.0
    %3207 = vmatpush1.msra.mxu0 0.0
    %3208 = vmatprep.subr.mxu0 0.0
    %3209 = vmatpush1.msra.mxu0 0.0
    %3210 = vmatprep.subr.mxu0 0.0
    %3211 = vmatpush1.msra.mxu0 0.0
    %3212 = vmatprep.subr.mxu0 0.0
    %3213 = vmatpush1.msra.mxu0 0.0
    %3214 = vmatprep.subr.mxu0 0.0
    %3215 = vmatpush1.msra.mxu0 0.0
    %3216 = vmatprep.subr.mxu0 0.0
    %3217 = vmatpush1.msra.mxu0 0.0
    %3218 = vmatprep.subr.mxu0 0.0
    %3219 = vmatpush1.msra.mxu0 0.0
    %3220 = vmatprep.subr.mxu0 0.0
    %3221 = vmatpush1.msra.mxu0 0.0
    %3222 = vmatprep.subr.mxu0 0.0
    %3223 = vmatpush1.msra.mxu0 0.0
    %3224 = vmatprep.subr.mxu0 0.0
    %3225 = vmatpush1.msra.mxu0 0.0
    %3226 = vmatprep.subr.mxu0 0.0
    %3227 = vmatpush1.msra.mxu0 0.0
    %3228 = vmatprep.subr.mxu0 0.0
    %3229 = vmatpush1.msra.mxu0 0.0
    %3230 = vmatprep.subr.mxu0 0.0
    %3231 = vmatpush1.msra.mxu0 0.0
    %3232 = vmatprep.subr.mxu0 0.0
    %3233 = vmatpush1.msra.mxu0 0.0
    %3234 = vmatprep.subr.mxu0 0.0
    %3235 = vmatpush1.msra.mxu0 0.0
    %3236 = vmatprep.subr.mxu0 0.0
    %3237 = vmatpush1.msra.mxu0 0.0
    %3238 = vmatprep.subr.mxu0 0.0
    %3239 = vmatpush1.msra.mxu0 0.0
    %3240 = vmatprep.subr.mxu0 0.0
    %3241 = vmatpush1.msra.mxu0 0.0
    %3242 = vmatprep.subr.mxu0 0.0
    %3243 = vmatpush1.msra.mxu0 0.0
    %3244 = vmatprep.subr.mxu0 0.0
    %3245 = vmatpush1.msra.mxu0 0.0
    %3246 = vmatprep.subr.mxu0 0.0
    %3247 = vmatpush1.msra.mxu0 0.0
    %3248 = vmatprep.subr.mxu0 0.0
    %3249 = vmatpush1.msra.mxu0 0.0
    %3250 = vmatprep.mubr.f32.mxu0 0.0
    %3251 = vmatmul.mubr.f32.gmra.mrb[0].mxu0 %v3184
    %v3252 = vpop.f32.mrb[0].mxu0
    %v3253 = vadd.f32 0.0, %v3252
    %v3254 = vpop.f32.mrb[0].mxu0
    %3255 = vdwg.mxu0
    %v3257 = vrot.slane %v3253, 4
    %v3259 = vadd.f32 %v1994, %v3257
    %v3260 = vrot.slane %v3180, 2
    %3261 = vrot.lane.b32.xlu0 %v3260, 32
    %v3262 = vpop.permute.xlu0 %3261
    %v3263 = vsel %vm143, %v3262, 0
    %3265 = vmatprep.subr.mxu0 0.0
    %3266 = vmatpush1.msra.mxu0 %v379
    %3267 = vmatprep.subr.mxu0 0.0
    %3268 = vmatpush1.msra.mxu0 %v380
    %3269 = vmatprep.subr.mxu0 0.0
    %3270 = vmatpush1.msra.mxu0 %v381
    %3271 = vmatprep.subr.mxu0 0.0
    %3272 = vmatpush1.msra.mxu0 %v382
    %3273 = vmatprep.subr.mxu0 0.0
    %3274 = vmatpush1.msra.mxu0 0.0
    %3275 = vmatprep.subr.mxu0 0.0
    %3276 = vmatpush1.msra.mxu0 0.0
    %3277 = vmatprep.subr.mxu0 0.0
    %3278 = vmatpush1.msra.mxu0 0.0
    %3279 = vmatprep.subr.mxu0 0.0
    %3280 = vmatpush1.msra.mxu0 0.0
    %3281 = vmatprep.subr.mxu0 0.0
    %3282 = vmatpush1.msra.mxu0 0.0
    %3283 = vmatprep.subr.mxu0 0.0
    %3284 = vmatpush1.msra.mxu0 0.0
    %3285 = vmatprep.subr.mxu0 0.0
    %3286 = vmatpush1.msra.mxu0 0.0
    %3287 = vmatprep.subr.mxu0 0.0
    %3288 = vmatpush1.msra.mxu0 0.0
    %3289 = vmatprep.subr.mxu0 0.0
    %3290 = vmatpush1.msra.mxu0 0.0
    %3291 = vmatprep.subr.mxu0 0.0
    %3292 = vmatpush1.msra.mxu0 0.0
    %3293 = vmatprep.subr.mxu0 0.0
    %3294 = vmatpush1.msra.mxu0 0.0
    %3295 = vmatprep.subr.mxu0 0.0
    %3296 = vmatpush1.msra.mxu0 0.0
    %3297 = vmatprep.subr.mxu0 0.0
    %3298 = vmatpush1.msra.mxu0 0.0
    %3299 = vmatprep.subr.mxu0 0.0
    %3300 = vmatpush1.msra.mxu0 0.0
    %3301 = vmatprep.subr.mxu0 0.0
    %3302 = vmatpush1.msra.mxu0 0.0
    %3303 = vmatprep.subr.mxu0 0.0
    %3304 = vmatpush1.msra.mxu0 0.0
    %3305 = vmatprep.subr.mxu0 0.0
    %3306 = vmatpush1.msra.mxu0 0.0
    %3307 = vmatprep.subr.mxu0 0.0
    %3308 = vmatpush1.msra.mxu0 0.0
    %3309 = vmatprep.subr.mxu0 0.0
    %3310 = vmatpush1.msra.mxu0 0.0
    %3311 = vmatprep.subr.mxu0 0.0
    %3312 = vmatpush1.msra.mxu0 0.0
    %3313 = vmatprep.subr.mxu0 0.0
    %3314 = vmatpush1.msra.mxu0 0.0
    %3315 = vmatprep.subr.mxu0 0.0
    %3316 = vmatpush1.msra.mxu0 0.0
    %3317 = vmatprep.subr.mxu0 0.0
    %3318 = vmatpush1.msra.mxu0 0.0
    %3319 = vmatprep.subr.mxu0 0.0
    %3320 = vmatpush1.msra.mxu0 0.0
    %3321 = vmatprep.subr.mxu0 0.0
    %3322 = vmatpush1.msra.mxu0 0.0
    %3323 = vmatprep.subr.mxu0 0.0
    %3324 = vmatpush1.msra.mxu0 0.0
    %3325 = vmatprep.subr.mxu0 0.0
    %3326 = vmatpush1.msra.mxu0 0.0
    %3327 = vmatprep.subr.mxu0 0.0
    %3328 = vmatpush1.msra.mxu0 0.0
    %3329 = vmatprep.mubr.f32.mxu0 0.0
    %3330 = vmatmul.mubr.f32.gmra.mrb[0].mxu0 %v3263
    %v3331 = vpop.f32.mrb[0].mxu0
    %v3332 = vadd.f32 0.0, %v3331
    %v3333 = vpop.f32.mrb[0].mxu0
    %3334 = vdwg.mxu0
    %v3336 = vrot.slane %v3332, 6
    %v3338 = vadd.f32 %v2079, %v3336
    %v3340 = vrot.slane %v3259, 4
    %v3342 = vsel %vm534, %v3340, %v3338
    %v3343 = vmul.f32 %v3342, 0.5
    %v3344 = vtanh.pop %v3343
    %v3345 = vmul.f32 %v3344, 0.5
    %v3346 = vadd.f32 %v3345, 0.5
    %v3347 = vtanh.pop %v3342
    %v3348 = vmul.f32 %v3346, %v3174
    %3350 = vrot.lane.b32.xlu0 %v3347, 64
    %v3351 = vpop.permute.xlu0 %3350
    %v3353 = vmul.f32 %v3346, %v3351
    %3355 = vrot.lane.b32.xlu0 %v3353, 32
    %v3356 = vpop.permute.xlu0 %3355
    %v3358 = vadd.f32 %v3348, %v3356
    %v3359 = vtanh.pop %v3358
    %3361 = vrot.lane.b32.xlu0 %v3359, 64
    %v3362 = vpop.permute.xlu0 %3361
    %v3364 = vmul.f32 %v3346, %v3362
    %3366 = vrot.lane.b32.xlu0 %v3364, 32
    %v3367 = vpop.permute.xlu0 %3366
    %v3368 = vsel %vm143, %v3367, 0
    %3370 = vmatprep.subr.mxu0 0.0
    %3371 = vmatpush1.msra.mxu0 %v375
    %3372 = vmatprep.subr.mxu0 0.0
    %3373 = vmatpush1.msra.mxu0 %v376
    %3374 = vmatprep.subr.mxu0 0.0
    %3375 = vmatpush1.msra.mxu0 %v377
    %3376 = vmatprep.subr.mxu0 0.0
    %3377 = vmatpush1.msra.mxu0 %v378
    %3378 = vmatprep.subr.mxu0 0.0
    %3379 = vmatpush1.msra.mxu0 0.0
    %3380 = vmatprep.subr.mxu0 0.0
    %3381 = vmatpush1.msra.mxu0 0.0
    %3382 = vmatprep.subr.mxu0 0.0
    %3383 = vmatpush1.msra.mxu0 0.0
    %3384 = vmatprep.subr.mxu0 0.0
    %3385 = vmatpush1.msra.mxu0 0.0
    %3386 = vmatprep.subr.mxu0 0.0
    %3387 = vmatpush1.msra.mxu0 0.0
    %3388 = vmatprep.subr.mxu0 0.0
    %3389 = vmatpush1.msra.mxu0 0.0
    %3390 = vmatprep.subr.mxu0 0.0
    %3391 = vmatpush1.msra.mxu0 0.0
    %3392 = vmatprep.subr.mxu0 0.0
    %3393 = vmatpush1.msra.mxu0 0.0
    %3394 = vmatprep.subr.mxu0 0.0
    %3395 = vmatpush1.msra.mxu0 0.0
    %3396 = vmatprep.subr.mxu0 0.0
    %3397 = vmatpush1.msra.mxu0 0.0
    %3398 = vmatprep.subr.mxu0 0.0
    %3399 = vmatpush1.msra.mxu0 0.0
    %3400 = vmatprep.subr.mxu0 0.0
    %3401 = vmatpush1.msra.mxu0 0.0
    %3402 = vmatprep.subr.mxu0 0.0
    %3403 = vmatpush1.msra.mxu0 0.0
    %3404 = vmatprep.subr.mxu0 0.0
    %3405 = vmatpush1.msra.mxu0 0.0
    %3406 = vmatprep.subr.mxu0 0.0
    %3407 = vmatpush1.msra.mxu0 0.0
    %3408 = vmatprep.subr.mxu0 0.0
    %3409 = vmatpush1.msra.mxu0 0.0
    %3410 = vmatprep.subr.mxu0 0.0
    %3411 = vmatpush1.msra.mxu0 0.0
    %3412 = vmatprep.subr.mxu0 0.0
    %3413 = vmatpush1.msra.mxu0 0.0
    %3414 = vmatprep.subr.mxu0 0.0
    %3415 = vmatpush1.msra.mxu0 0.0
    %3416 = vmatprep.subr.mxu0 0.0
    %3417 = vmatpush1.msra.mxu0 0.0
    %3418 = vmatprep.subr.mxu0 0.0
    %3419 = vmatpush1.msra.mxu0 0.0
    %3420 = vmatprep.subr.mxu0 0.0
    %3421 = vmatpush1.msra.mxu0 0.0
    %3422 = vmatprep.subr.mxu0 0.0
    %3423 = vmatpush1.msra.mxu0 0.0
    %3424 = vmatprep.subr.mxu0 0.0
    %3425 = vmatpush1.msra.mxu0 0.0
    %3426 = vmatprep.subr.mxu0 0.0
    %3427 = vmatpush1.msra.mxu0 0.0
    %3428 = vmatprep.subr.mxu0 0.0
    %3429 = vmatpush1.msra.mxu0 0.0
    %3430 = vmatprep.subr.mxu0 0.0
    %3431 = vmatpush1.msra.mxu0 0.0
    %3432 = vmatprep.subr.mxu0 0.0
    %3433 = vmatpush1.msra.mxu0 0.0
    %3434 = vmatprep.mubr.f32.mxu0 0.0
    %3435 = vmatmul.mubr.f32.gmra.mrb[0].mxu0 %v3368
    %v3436 = vpop.f32.mrb[0].mxu0
    %v3437 = vadd.f32 0.0, %v3436
    %v3438 = vpop.f32.mrb[0].mxu0
    %3439 = vdwg.mxu0
    %v3441 = vrot.slane %v3437, 2
    %v3443 = vadd.f32 %v1994, %v3441
    %v3444 = vrot.slane %v3364, 2
    %3445 = vrot.lane.b32.xlu0 %v3444, 32
    %v3446 = vpop.permute.xlu0 %3445
    %v3447 = vsel %vm143, %v3446, 0
    %3449 = vmatprep.subr.mxu0 0.0
    %3450 = vmatpush1.msra.mxu0 %v379
    %3451 = vmatprep.subr.mxu0 0.0
    %3452 = vmatpush1.msra.mxu0 %v380
    %3453 = vmatprep.subr.mxu0 0.0
    %3454 = vmatpush1.msra.mxu0 %v381
    %3455 = vmatprep.subr.mxu0 0.0
    %3456 = vmatpush1.msra.mxu0 %v382
    %3457 = vmatprep.subr.mxu0 0.0
    %3458 = vmatpush1.msra.mxu0 0.0
    %3459 = vmatprep.subr.mxu0 0.0
    %3460 = vmatpush1.msra.mxu0 0.0
    %3461 = vmatprep.subr.mxu0 0.0
    %3462 = vmatpush1.msra.mxu0 0.0
    %3463 = vmatprep.subr.mxu0 0.0
    %3464 = vmatpush1.msra.mxu0 0.0
    %3465 = vmatprep.subr.mxu0 0.0
    %3466 = vmatpush1.msra.mxu0 0.0
    %3467 = vmatprep.subr.mxu0 0.0
    %3468 = vmatpush1.msra.mxu0 0.0
    %3469 = vmatprep.subr.mxu0 0.0
    %3470 = vmatpush1.msra.mxu0 0.0
    %3471 = vmatprep.subr.mxu0 0.0
    %3472 = vmatpush1.msra.mxu0 0.0
    %3473 = vmatprep.subr.mxu0 0.0
    %3474 = vmatpush1.msra.mxu0 0.0
    %3475 = vmatprep.subr.mxu0 0.0
    %3476 = vmatpush1.msra.mxu0 0.0
    %3477 = vmatprep.subr.mxu0 0.0
    %3478 = vmatpush1.msra.mxu0 0.0
    %3479 = vmatprep.subr.mxu0 0.0
    %3480 = vmatpush1.msra.mxu0 0.0
    %3481 = vmatprep.subr.mxu0 0.0
    %3482 = vmatpush1.msra.mxu0 0.0
    %3483 = vmatprep.subr.mxu0 0.0
    %3484 = vmatpush1.msra.mxu0 0.0
    %3485 = vmatprep.subr.mxu0 0.0
    %3486 = vmatpush1.msra.mxu0 0.0
    %3487 = vmatprep.subr.mxu0 0.0
    %3488 = vmatpush1.msra.mxu0 0.0
    %3489 = vmatprep.subr.mxu0 0.0
    %3490 = vmatpush1.msra.mxu0 0.0
    %3491 = vmatprep.subr.mxu0 0.0
    %3492 = vmatpush1.msra.mxu0 0.0
    %3493 = vmatprep.subr.mxu0 0.0
    %3494 = vmatpush1.msra.mxu0 0.0
    %3495 = vmatprep.subr.mxu0 0.0
    %3496 = vmatpush1.msra.mxu0 0.0
    %3497 = vmatprep.subr.mxu0 0.0
    %3498 = vmatpush1.msra.mxu0 0.0
    %3499 = vmatprep.subr.mxu0 0.0
    %3500 = vmatpush1.msra.mxu0 0.0
    %3501 = vmatprep.subr.mxu0 0.0
    %3502 = vmatpush1.msra.mxu0 0.0
    %3503 = vmatprep.subr.mxu0 0.0
    %3504 = vmatpush1.msra.mxu0 0.0
    %3505 = vmatprep.subr.mxu0 0.0
    %3506 = vmatpush1.msra.mxu0 0.0
    %3507 = vmatprep.subr.mxu0 0.0
    %3508 = vmatpush1.msra.mxu0 0.0
    %3509 = vmatprep.subr.mxu0 0.0
    %3510 = vmatpush1.msra.mxu0 0.0
    %3511 = vmatprep.subr.mxu0 0.0
    %3512 = vmatpush1.msra.mxu0 0.0
    %3513 = vmatprep.mubr.f32.mxu0 0.0
    %3514 = vmatmul.mubr.f32.gmra.mrb[0].mxu0 %v3447
    %v3515 = vpop.f32.mrb[0].mxu0
    %v3516 = vadd.f32 0.0, %v3515
    %v3517 = vpop.f32.mrb[0].mxu0
    %3518 = vdwg.mxu0
    %v3519 = vadd.f32 %v2079, %v3516
    %v3521 = vrot.slane %v3443, 6
    %v3524 = vrot.slane %v3519, 6
    %v3526 = vsel %vm534, %v3521, %v3524
    %v3527 = vmul.f32 %v3526, 0.5
    %v3528 = vtanh.pop %v3527
    %v3529 = vmul.f32 %v3528, 0.5
    %v3530 = vadd.f32 %v3529, 0.5
    %v3531 = vtanh.pop %v3526
    %v3532 = vmul.f32 %v3530, %v3358
    %3534 = vrot.lane.b32.xlu0 %v3531, 64
    %v3535 = vpop.permute.xlu0 %3534
    %v3537 = vmul.f32 %v3530, %v3535
    %3539 = vrot.lane.b32.xlu0 %v3537, 32
    %v3540 = vpop.permute.xlu0 %3539
    %v3542 = vadd.f32 %v3532, %v3540
    %v3543 = vtanh.pop %v3542
    %3545 = vrot.lane.b32.xlu0 %v3543, 64
    %v3546 = vpop.permute.xlu0 %3545
    %v3548 = vmul.f32 %v3530, %v3546
    %v3549 = vrot.slane %v1851, 1
    %v3551 = vsub.f32 %v1851, %v3549
    %v3553 = vrot.slane %v3548, 1
    %v3555 = vsub.f32 %v3548, %v3553
    %v3557 = vrot.slane %v3551, 1
    %v3560 = vrot.slane %v3555, 6
    %v3562 = vrot.slane %v3555, 7
    %vm3564 = vcmask 1040384
    %v3565 = vsel %vm3564, %v3551, %v3557
    %v3566 = vsel %vm534, %v3565, %v3560
    %vm3567 = vcmask 1042432
    %v3568 = vsel %vm3567, %v3566, %v3562
    %v3569 = vmul.f32 %v3568, %v3568
    %3571 = vrot.lane.b32.xlu0 %v3569, 32
    %v3572 = vpop.permute.xlu0 %3571
    %vm3574 = vcmask 257024
    %v3575 = vsel %vm3574, %v3572, 0.0
    %3576 = vadd.xlane.f32.xlu0 %v3575
    %v3577 = vpop.xlane.xlu0 %3576
    %v3578 = vrsqrt.pop %v3577
    %v3579 = vmul.f32 %v3577, %v3578
    %vm3580 = vcmp.eq.f32.partialorder %v3577, inf
    %v3581 = vsel %vm3580, %v3577, %v3579
    %vm3582 = vcmp.eq.f32.partialorder %v3577, 0.0
    %v3583 = vand.u32 %v3577, 2147483648
    %v3584 = vsel %vm3582, %v3583, %v3581
    %v3585 = vsub.f32 0.0, %v3584
    %v3586 = vmul.f32 %v3585, 1.442695
    %v3587 = vpow.pop %v3586
    %v3588 = vld [vmem:[%s15] sm:$0xf]
    %v3589 = vmul.f32 %v3587, %v3588
    %vm3590 = vcmask 3072
    %v3591 = vsel %vm3590, %v3589, 0.0
    %v3592 = vrot.slane %v3591, 4
    %v3593 = vadd.f32 %v3591, %v3592
    %v3594 = vrot.slane %v3593, 2
    %v3595 = vadd.f32 %v3593, %v3594
    %v3596 = vrot.slane %v3595, 1
    %v3597 = vadd.f32 %v3595, %v3596
    %v3598 = vld [vmem:[#allocation2] sm:$0x1]
    %v3599 = vadd.f32 %v3597, %v3598
    %vm3600 = vcmask 0
    %3601 = vst.msk [vmem:[#allocation14] sm:$0x1] %vm3600, %v3599
    // Predicated region
    $region94: #{siagru_forward.1} parent=1 // pred_check
      _
    $region95: #{siagru_forward.1} parent=1 // pred_check_branch
      %3603 = sbr.rel (0) target = $region97
    $region96: #{siagru_forward.1} parent=1 // pred_region
      %s3605 = ssub.s32 16, 16
      %3606 = vsyncadd [#allocation5], %s3605
      %s3608 = sshll.u32 [#allocation14], 4
      %s3609 = int_to_ptr.vmem [resolvable:$true] %s3608
      %3611 = dma.vmem_to_hbm [thread:$0]  %s3609, 16, %s17, [#allocation5]
    $region97: #{siagru_forward.1} parent=1 // pred_fallthru
      _
    // Predicated region
    $region98: #{siagru_forward.1} parent=1 // pred_check
      _
    $region99: #{siagru_forward.1} parent=1 // pred_check_branch
      %3613 = sbr.rel (0) target = $region101
    $region100: #{siagru_forward.1} parent=1 // pred_region
      %3614 = dma.done [#allocation5], 16
    $region101: #{siagru_forward.1} parent=1 // pred_fallthru
      _
    %3615 = vsyncpa [#allocation4], 1
    %3616 = vsyncpa [#allocation7], 1
    %3617 = vsyncpa [#allocation10], 1
    %3618 = vsyncpa [#allocation13], 1
    %3619 = vsyncpa [#allocation5], 1

</llo_original>
